<compile_context>
chip_gen: v5e
topology: v5e:2x2
jax: 0.10.0
libtpu: 0.0.40
codegen_flags: <defaults>
</compile_context>

<pallas_src>
import functools
import math

import jax
import jax.numpy as jnp
from jax import lax
from jax.experimental import pallas as pl
from jax.experimental.pallas import tpu as pltpu

_BF16 = jnp.bfloat16


# ----------------------------------------------------------------------------
# In-kernel helpers (traced inside the Pallas kernels)
# ----------------------------------------------------------------------------
def _layer_norm(x, g, b, eps=1e-5):
    mu = jnp.mean(x, axis=-1, keepdims=True)
    var = jnp.mean((x - mu) ** 2, axis=-1, keepdims=True)
    return (x - mu) * lax.rsqrt(var + eps) * g + b


def _mha(q, k, v, wo_bf, bo, Bb, Lq, Lk, num_heads, scale, causal):
    """Multi-head attention with a single full-K output projection.

    q: [Bb*Lq, D] f32, k/v: [Bb*Lk, D] f32, wo_bf: [D, D] bf16, bo: [1, D] f32.
    Returns [Bb*Lq, D] f32.
    """
    D = q.shape[-1]
    dh = D // num_heads

    # Fold the softmax scale into Q; cast Q/K/V to bf16 exactly once each.
    q3 = (q * scale).reshape(Bb, Lq, D).astype(_BF16)
    k3 = k.reshape(Bb, Lk, D).astype(_BF16)
    v3 = v.reshape(Bb, Lk, D).astype(_BF16)

    if causal:
        # Look-ahead mask generated in-kernel (no O(L^2) HBM traffic), hoisted out of
        # the head loop.
        row = lax.broadcasted_iota(jnp.int32, (Lq, Lk), 0)
        col = lax.broadcasted_iota(jnp.int32, (Lq, Lk), 1)
        neg = jnp.where(col > row, jnp.float32(-1e9), jnp.float32(0.0))[None, :, :]

    # TODO(synk): replace the small unrolled head loop with a single [B*H, L, dh] batched
    # dot_general once multi-batch-dim dot_general / 4-D transposes are verified in Mosaic;
    # the score contraction is inherently over dh, so the loop now only costs per-head
    # lane slices of the already-bf16 Q/K/V.
    outs = []
    for h in range(num_heads):
        sl = slice(h * dh, (h + 1) * dh)
        s = jnp.einsum("bqd,bkd->bqk", q3[..., sl], k3[..., sl],
                       preferred_element_type=jnp.float32)
        if causal:
            s = s + neg
        s = s - jnp.max(s, axis=-1, keepdims=True)
        p = jnp.exp(s)
        p = p * pl.reciprocal(jnp.sum(p, axis=-1, keepdims=True), approx=True)
        outs.append(jnp.einsum("bqk,bkd->bqd", p.astype(_BF16), v3[..., sl],
                               preferred_element_type=jnp.float32))

    # Assemble all heads into one lane-dense [M, D] tile and run ONE full-K projection.
    o = jnp.concatenate(outs, axis=-1).reshape(Bb * Lq, D)
    return jnp.dot(o.astype(_BF16), wo_bf, preferred_element_type=jnp.float32) + bo


# ----------------------------------------------------------------------------
# Fused stack kernels: grid = (batch_blocks ["parallel"], num_layers ["arbitrary"])
# The output block keeps the same block index across the layer axis, so it stays resident
# in VMEM and doubles as the running activation between layers.
# ----------------------------------------------------------------------------
def _encoder_stack_kernel(x_ref,
                          wq_ref, bq_ref, wk_ref, bk_ref, wv_ref, bv_ref,
                          wo_ref, bo_ref, ln1g_ref, ln1b_ref,
                          w1_ref, b1_ref, w2_ref, b2_ref, ln2g_ref, ln2b_ref,
                          o_ref, *, num_heads):
    l = pl.program_id(1)
    Bb, L, D = x_ref.shape
    M = Bb * L
    scale = 1.0 / math.sqrt(D // num_heads)

    @pl.when(l == 0)
    def _():                      # seed the VMEM-resident running activation
        o_ref[...] = x_ref[...]

    x = o_ref[...].reshape(M, D)  # f32 residual stream
    x_bf = x.astype(_BF16)        # single cast reused by Q/K/V projections

    # self-attention (no mask) + residual + LN1
    q = jnp.dot(x_bf, wq_ref[0], preferred_element_type=jnp.float32) + bq_ref[0]
    k = jnp.dot(x_bf, wk_ref[0], preferred_element_type=jnp.float32) + bk_ref[0]
    v = jnp.dot(x_bf, wv_ref[0], preferred_element_type=jnp.float32) + bv_ref[0]
    attn = _mha(q, k, v, wo_ref[0], bo_ref[0], Bb, L, L, num_heads, scale, causal=False)
    h1 = _layer_norm(x + attn, ln1g_ref[0], ln1b_ref[0])

    # FFN + residual + LN2
    h1_bf = h1.astype(_BF16)
    f = jnp.maximum(
        jnp.dot(h1_bf, w1_ref[0], preferred_element_type=jnp.float32) + b1_ref[0], 0.0)
    f = jnp.dot(f.astype(_BF16), w2_ref[0], preferred_element_type=jnp.float32) + b2_ref[0]
    y = _layer_norm(h1 + f, ln2g_ref[0], ln2b_ref[0])

    o_ref[...] = y.reshape(Bb, L, D)


def _decoder_stack_kernel(x_ref, mem_ref,
                          wq_s_ref, bq_s_ref, wk_s_ref, bk_s_ref, wv_s_ref, bv_s_ref,
                          wo_s_ref, bo_s_ref, ln1g_ref, ln1b_ref,
                          wq_c_ref, bq_c_ref, wk_c_ref, bk_c_ref, wv_c_ref, bv_c_ref,
                          wo_c_ref, bo_c_ref, ln2g_ref, ln2b_ref,
                          w1_ref, b1_ref, w2_ref, b2_ref, ln3g_ref, ln3b_ref,
                          o_ref, *, num_heads, causal):
    l = pl.program_id(1)
    Bb, Lt, D = x_ref.shape
    Ls = mem_ref.shape[1]
    M = Bb * Lt
    scale = 1.0 / math.sqrt(D // num_heads)

    @pl.when(l == 0)
    def _():
        o_ref[...] = x_ref[...]

    x = o_ref[...].reshape(M, D)
    x_bf = x.astype(_BF16)

    # masked self-attention + residual + LN1
    q = jnp.dot(x_bf, wq_s_ref[0], preferred_element_type=jnp.float32) + bq_s_ref[0]
    k = jnp.dot(x_bf, wk_s_ref[0], preferred_element_type=jnp.float32) + bk_s_ref[0]
    v = jnp.dot(x_bf, wv_s_ref[0], preferred_element_type=jnp.float32) + bv_s_ref[0]
    sa = _mha(q, k, v, wo_s_ref[0], bo_s_ref[0], Bb, Lt, Lt, num_heads, scale, causal)
    h1 = _layer_norm(x + sa, ln1g_ref[0], ln1b_ref[0])
    h1_bf = h1.astype(_BF16)

    # cross-attention over encoder memory + residual + LN2
    mem_bf = mem_ref[...].reshape(Bb * Ls, D).astype(_BF16)   # cast once per layer
    qc = jnp.dot(h1_bf, wq_c_ref[0], preferred_element_type=jnp.float32) + bq_c_ref[0]
    kc = jnp.dot(mem_bf, wk_c_ref[0], preferred_element_type=jnp.float32) + bk_c_ref[0]
    vc = jnp.dot(mem_bf, wv_c_ref[0], preferred_element_type=jnp.float32) + bv_c_ref[0]
    ca = _mha(qc, kc, vc, wo_c_ref[0], bo_c_ref[0], Bb, Lt, Ls, num_heads, scale, False)
    h2 = _layer_norm(h1 + ca, ln2g_ref[0], ln2b_ref[0])
    h2_bf = h2.astype(_BF16)

    # FFN + residual + LN3
    f = jnp.maximum(
        jnp.dot(h2_bf, w1_ref[0], preferred_element_type=jnp.float32) + b1_ref[0], 0.0)
    f = jnp.dot(f.astype(_BF16), w2_ref[0], preferred_element_type=jnp.float32) + b2_ref[0]
    y = _layer_norm(h2 + f, ln3g_ref[0], ln3b_ref[0])

    o_ref[...] = y.reshape(Bb, Lt, D)


# ----------------------------------------------------------------------------
# pallas_call wrappers
# ----------------------------------------------------------------------------
_ENC_W_NAMES = ("wq", "bq", "wk", "bk", "wv", "bv", "wo", "bo", "ln1_g", "ln1_b",
                "w1", "b1", "w2", "b2", "ln2_g", "ln2_b")
_DEC_W_NAMES = ("wq_s", "bq_s", "wk_s", "bk_s", "wv_s", "bv_s", "wo_s", "bo_s",
                "ln1_g", "ln1_b",
                "wq_c", "bq_c", "wk_c", "bk_c", "wv_c", "bv_c", "wo_c", "bo_c",
                "ln2_g", "ln2_b",
                "w1", "b1", "w2", "b2", "ln3_g", "ln3_b")


def _prep_weights(p, names):
    """Weight matrices -> bf16 (halves weight DMA); biases / LN params stay f32."""
    out = []
    for n in names:
        w = p[n]
        out.append(w.astype(_BF16) if n.startswith("w") else w.astype(jnp.float32))
    return out


def _weight_spec(w):
    # One layer's slab per grid step along the layer axis -> auto double-buffered prefetch.
    return pl.BlockSpec((1,) + tuple(w.shape[1:]), lambda b, l: (l, 0, 0))


def _compiler_params():
    return pltpu.CompilerParams(
        dimension_semantics=("parallel", "arbitrary"),
        vmem_limit_bytes=32 * 1024 * 1024)


def _encoder_cost(B, L, D, F, NL, H):
    M = B * L
    flops = NL * (8 * M * D * D + 4 * B * L * L * D + 4 * M * D * F)
    trans = NL * (B * H * L * L + 4 * M)
    byt = NL * 2 * (4 * D * D + 2 * D * F) + NL * 4 * (10 * D + F) + 8 * M * D
    return pl.CostEstimate(flops=int(flops), transcendentals=int(trans),
                           bytes_accessed=int(byt))


def _decoder_cost(B, Lt, Ls, D, F, NL, H):
    M = B * Lt
    Mk = B * Ls
    flops = NL * (8 * M * D * D + 4 * B * Lt * Lt * D
                  + 4 * M * D * D + 4 * Mk * D * D + 4 * B * Lt * Ls * D
                  + 4 * M * D * F)
    trans = NL * (B * H * (Lt * Lt + Lt * Ls) + 6 * M)
    byt = NL * 2 * (8 * D * D + 2 * D * F) + NL * 4 * (16 * D + F) \
        + 4 * (2 * B * Lt * D + B * Ls * D)
    return pl.CostEstimate(flops=int(flops), transcendentals=int(trans),
                           bytes_accessed=int(byt))


def encoder_stack(x_bld, p, num_heads, *, num_batch_blocks=1):
    B, L, D = x_bld.shape
    NL = p["wq"].shape[0]
    F = p["w1"].shape[-1]
    assert B % num_batch_blocks == 0
    Bb = B // num_batch_blocks
    weights = _prep_weights(p, _ENC_W_NAMES)
    act_spec = pl.BlockSpec((Bb, L, D), lambda b, l: (b, 0, 0))
    return pl.pallas_call(
        functools.partial(_encoder_stack_kernel, num_heads=num_heads),
        grid=(num_batch_blocks, NL),
        in_specs=[act_spec] + [_weight_spec(w) for w in weights],
        out_specs=act_spec,
        out_shape=jax.ShapeDtypeStruct((B, L, D), jnp.float32),
        compiler_params=_compiler_params(),
        cost_estimate=_encoder_cost(B, L, D, F, NL, num_heads),
    )(x_bld.astype(jnp.float32), *weights)


def decoder_stack(y_bld, mem_bld, p, num_heads, *, causal, num_batch_blocks=1):
    B, Lt, D = y_bld.shape
    Ls = mem_bld.shape[1]
    NL = p["wq_s"].shape[0]
    F = p["w1"].shape[-1]
    assert B % num_batch_blocks == 0
    Bb = B // num_batch_blocks
    weights = _prep_weights(p, _DEC_W_NAMES)
    act_spec = pl.BlockSpec((Bb, Lt, D), lambda b, l: (b, 0, 0))
    mem_spec = pl.BlockSpec((Bb, Ls, D), lambda b, l: (b, 0, 0))
    return pl.pallas_call(
        functools.partial(_decoder_stack_kernel, num_heads=num_heads, causal=causal),
        grid=(num_batch_blocks, NL),
        in_specs=[act_spec, mem_spec] + [_weight_spec(w) for w in weights],
        out_specs=act_spec,
        out_shape=jax.ShapeDtypeStruct((B, Lt, D), jnp.float32),
        compiler_params=_compiler_params(),
        cost_estimate=_decoder_cost(B, Lt, Ls, D, F, NL, num_heads),
    )(y_bld.astype(jnp.float32), mem_bld.astype(jnp.float32), *weights)


# ----------------------------------------------------------------------------
# Transformer forward (mirrors Transformer.forward, default flags)
# ----------------------------------------------------------------------------
def transformer_forward(params, source_seq, target_seq,
                        encoder_position_encodings=None,
                        decoder_position_encodings=None,
                        mask_look_ahead=None,
                        num_heads=4,
                        num_batch_blocks=1):
    """Returns (out_attn, memory, out_weights_, enc_weights_, (tgt_plain, prob_matrix_))."""
    # TODO(synk): the reference potr Encoder/Decoder add positional encodings to q/k inside
    # every layer; here they are added once to the stack inputs.
    src = source_seq if encoder_position_encodings is None else source_seq + encoder_position_encodings
    tgt = target_seq if decoder_position_encodings is None else target_seq + decoder_position_encodings

    # Internal layout [batch, length, model_dim].
    x = jnp.transpose(src, (1, 0, 2)).astype(jnp.float32)
    memory_bld = encoder_stack(x, params["enc"], num_heads,
                               num_batch_blocks=num_batch_blocks)

    # TODO(synk): only look-ahead (causal) masking is supported -- it is regenerated
    # in-kernel with broadcasted_iota; arbitrary additive / target-padding masks are not.
    causal = mask_look_ahead is not None

    y = jnp.transpose(tgt, (1, 0, 2)).astype(jnp.float32)
    out_bld = decoder_stack(y, memory_bld, params["dec"], num_heads,
                            causal=causal, num_batch_blocks=num_batch_blocks)

    memory = jnp.transpose(memory_bld, (1, 0, 2))
    out_attn = jnp.transpose(out_bld, (1, 0, 2))
    # TODO(synk): attention weights / per-layer decoder outputs / query-selection path are
    # not returned (get_attn_weights=False, query_selection=False module defaults).
    return out_attn, memory, None, None, (None, None)


# ----------------------------------------------------------------------------
# Deterministic parameter initialization (normal_init_, std=0.02), stacked per layer
# ----------------------------------------------------------------------------
def init_params(key, num_enc, num_dec, d, d_ffn):
    std = 0.02

    def nrm(k, shape):
        return std * jax.random.normal(k, shape, jnp.float32)

    def zeros(*shape):
        return jnp.zeros(shape, jnp.float32)

    def ones(*shape):
        return jnp.ones(shape, jnp.float32)

    k_enc, k_dec = jax.random.split(key)
    ek = jax.random.split(k_enc, 6)
    enc = {
        "wq": nrm(ek[0], (num_enc, d, d)), "bq": zeros(num_enc, 1, d),
        "wk": nrm(ek[1], (num_enc, d, d)), "bk": zeros(num_enc, 1, d),
        "wv": nrm(ek[2], (num_enc, d, d)), "bv": zeros(num_enc, 1, d),
        "wo": nrm(ek[3], (num_enc, d, d)), "bo": zeros(num_enc, 1, d),
        "ln1_g": ones(num_enc, 1, d), "ln1_b": zeros(num_enc, 1, d),
        "w1": nrm(ek[4], (num_enc, d, d_ffn)), "b1": zeros(num_enc, 1, d_ffn),
        "w2": nrm(ek[5], (num_enc, d_ffn, d)), "b2": zeros(num_enc, 1, d),
        "ln2_g": ones(num_enc, 1, d), "ln2_b": zeros(num_enc, 1, d),
    }
    dk = jax.random.split(k_dec, 10)
    dec = {
        "wq_s": nrm(dk[0], (num_dec, d, d)), "bq_s": zeros(num_dec, 1, d),
        "wk_s": nrm(dk[1], (num_dec, d, d)), "bk_s": zeros(num_dec, 1, d),
        "wv_s": nrm(dk[2], (num_dec, d, d)), "bv_s": zeros(num_dec, 1, d),
        "wo_s": nrm(dk[3], (num_dec, d, d)), "bo_s": zeros(num_dec, 1, d),
        "ln1_g": ones(num_dec, 1, d), "ln1_b": zeros(num_dec, 1, d),
        "wq_c": nrm(dk[4], (num_dec, d, d)), "bq_c": zeros(num_dec, 1, d),
        "wk_c": nrm(dk[5], (num_dec, d, d)), "bk_c": zeros(num_dec, 1, d),
        "wv_c": nrm(dk[6], (num_dec, d, d)), "bv_c": zeros(num_dec, 1, d),
        "wo_c": nrm(dk[7], (num_dec, d, d)), "bo_c": zeros(num_dec, 1, d),
        "ln2_g": ones(num_dec, 1, d), "ln2_b": zeros(num_dec, 1, d),
        "w1": nrm(dk[8], (num_dec, d, d_ffn)), "b1": zeros(num_dec, 1, d_ffn),
        "w2": nrm(dk[9], (num_dec, d_ffn, d)), "b2": zeros(num_dec, 1, d),
        "ln3_g": ones(num_dec, 1, d), "ln3_b": zeros(num_dec, 1, d),
    }
    return {"enc": enc, "dec": dec}


def sinusoidal_pos(L, B, D):
    pos = jnp.arange(L, dtype=jnp.float32)[:, None]
    i = jnp.arange(D, dtype=jnp.float32)[None, :]
    angle = pos / jnp.power(10000.0, (2.0 * jnp.floor(i / 2.0)) / D)
    pe = jnp.where((jnp.arange(D) % 2) == 0, jnp.sin(angle), jnp.cos(angle))
    return jnp.broadcast_to(pe[:, None, :], (L, B, D)).astype(jnp.float32)


# ----------------------------------------------------------------------------
# Pure-JAX (f32) reference for numerical sanity checking
# ----------------------------------------------------------------------------
def _ref_ln(x, g, b, eps=1e-5):
    mu = x.mean(-1, keepdims=True)
    var = ((x - mu) ** 2).mean(-1, keepdims=True)
    return (x - mu) / jnp.sqrt(var + eps) * g + b


def _ref_mha(q, k, v, B, Lq, Lk, H, causal):
    D = q.shape[-1]
    dh = D // H
    qh = q.reshape(B, Lq, H, dh).transpose(0, 2, 1, 3)
    kh = k.reshape(B, Lk, H, dh).transpose(0, 2, 1, 3)
    vh = v.reshape(B, Lk, H, dh).transpose(0, 2, 1, 3)
    s = jnp.einsum("bhqd,bhkd->bhqk", qh, kh) / math.sqrt(dh)
    if causal:
        s = s + (jnp.triu(jnp.ones((Lq, Lk), jnp.float32), k=1) * (-1e9))[None, None]
    p = jax.nn.softmax(s, axis=-1)
    o = jnp.einsum("bhqk,bhkd->bhqd", p, vh)
    return o.transpose(0, 2, 1, 3).reshape(B * Lq, D)


def _ref_enc_layer(x, p, l, H):
    B, L, D = x.shape
    x2 = x.reshape(B * L, D)
    q = x2 @ p["wq"][l] + p["bq"][l]
    k = x2 @ p["wk"][l] + p["bk"][l]
    v = x2 @ p["wv"][l] + p["bv"][l]
    a = _ref_mha(q, k, v, B, L, L, H, False) @ p["wo"][l] + p["bo"][l]
    h1 = _ref_ln(x2 + a, p["ln1_g"][l], p["ln1_b"][l])
    f = jnp.maximum(h1 @ p["w1"][l] + p["b1"][l], 0.0) @ p["w2"][l] + p["b2"][l]
    return _ref_ln(h1 + f, p["ln2_g"][l], p["ln2_b"][l]).reshape(B, L, D)


def _ref_dec_layer(x, mem, p, l, H, causal):
    B, Lt, D = x.shape
    Ls = mem.shape[1]
    x2 = x.reshape(B * Lt, D)
    m2 = mem.reshape(B * Ls, D)
    q = x2 @ p["wq_s"][l] + p["bq_s"][l]
    k = x2 @ p["wk_s"][l] + p["bk_s"][l]
    v = x2 @ p["wv_s"][l] + p["bv_s"][l]
    sa = _ref_mha(q, k, v, B, Lt, Lt, H, causal) @ p["wo_s"][l] + p["bo_s"][l]
    h1 = _ref_ln(x2 + sa, p["ln1_g"][l], p["ln1_b"][l])
    qc = h1 @ p["wq_c"][l] + p["bq_c"][l]
    kc = m2 @ p["wk_c"][l] + p["bk_c"][l]
    vc = m2 @ p["wv_c"][l] + p["bv_c"][l]
    ca = _ref_mha(qc, kc, vc, B, Lt, Ls, H, False) @ p["wo_c"][l] + p["bo_c"][l]
    h2 = _ref_ln(h1 + ca, p["ln2_g"][l], p["ln2_b"][l])
    f = jnp.maximum(h2 @ p["w1"][l] + p["b1"][l], 0.0) @ p["w2"][l] + p["b2"][l]
    return _ref_ln(h2 + f, p["ln3_g"][l], p["ln3_b"][l]).reshape(B, Lt, D)


def _reference_forward(params, src, tgt, enc_pos, dec_pos, causal, H):
    s = src if enc_pos is None else src + enc_pos
    t = tgt if dec_pos is None else tgt + dec_pos
    x = jnp.transpose(s, (1, 0, 2))
    pe = params["enc"]
    for l in range(pe["wq"].shape[0]):
        x = _ref_enc_layer(x, pe, l, H)
    y = jnp.transpose(t, (1, 0, 2))
    pd = params["dec"]
    for l in range(pd["wq_s"].shape[0]):
        y = _ref_dec_layer(y, x, pd, l, H, causal)
    return jnp.transpose(y, (1, 0, 2)), jnp.transpose(x, (1, 0, 2))


# ----------------------------------------------------------------------------
if __name__ == "__main__":
    # small, TPU-friendly shapes
    NUM_ENC, NUM_DEC = 2, 2
    MODEL_DIM, NUM_HEADS, DIM_FFN = 32, 4, 64
    SRC_LEN, TGT_LEN, BATCH = 8, 8, 2

    key = jax.random.PRNGKey(0)
    key, kp, ks, kt = jax.random.split(key, 4)

    params = init_params(kp, NUM_ENC, NUM_DEC, MODEL_DIM, DIM_FFN)

    source_seq = jax.random.normal(ks, (SRC_LEN, BATCH, MODEL_DIM), jnp.float32)
    target_seq = jax.random.normal(kt, (TGT_LEN, BATCH, MODEL_DIM), jnp.float32)
    enc_pos = sinusoidal_pos(SRC_LEN, BATCH, MODEL_DIM)
    dec_pos = sinusoidal_pos(TGT_LEN, BATCH, MODEL_DIM)

    # look-ahead (causal) additive mask; the kernel regenerates it in-kernel via iota.
    causal_mask = jnp.triu(jnp.ones((TGT_LEN, TGT_LEN), jnp.float32), k=1) * (-1e9)

    fwd = jax.jit(functools.partial(transformer_forward, num_heads=NUM_HEADS))
    out_attn, memory, out_w, enc_w, extra = fwd(
        params, source_seq, target_seq, enc_pos, dec_pos, causal_mask)

    jax.block_until_ready(out_attn)
    jax.block_until_ready(memory)

    assert out_attn.shape == (TGT_LEN, BATCH, MODEL_DIM)
    assert memory.shape == (SRC_LEN, BATCH, MODEL_DIM)
    assert bool(jnp.all(jnp.isfinite(out_attn))) and bool(jnp.all(jnp.isfinite(memory)))

    # numerical sanity vs a pure-f32 JAX reference (kernel uses bf16 MXU operands)
    ref_out, ref_mem = _reference_forward(
        params, source_seq, target_seq, enc_pos, dec_pos, True, NUM_HEADS)
    err_out = float(jnp.max(jnp.abs(out_attn - ref_out)))
    err_mem = float(jnp.max(jnp.abs(memory - ref_mem)))
    assert err_out < 0.1 and err_mem < 0.1, (err_out, err_mem)

    print("KERNEL_OK")
</pallas_src>

<mosaic_0001>
module attributes {stable_mosaic.version = 11 : i64} {
  func.func @_encoder_stack_kernel(%arg0: i32, %arg1: i32, %arg2: memref<2x8x32xf32, #tpu.memory_space<vmem>>, %arg3: memref<1x32x32xbf16, #tpu.memory_space<vmem>>, %arg4: memref<1x1x32xf32, #tpu.memory_space<vmem>>, %arg5: memref<1x32x32xbf16, #tpu.memory_space<vmem>>, %arg6: memref<1x1x32xf32, #tpu.memory_space<vmem>>, %arg7: memref<1x32x32xbf16, #tpu.memory_space<vmem>>, %arg8: memref<1x1x32xf32, #tpu.memory_space<vmem>>, %arg9: memref<1x32x32xbf16, #tpu.memory_space<vmem>>, %arg10: memref<1x1x32xf32, #tpu.memory_space<vmem>>, %arg11: memref<1x1x32xf32, #tpu.memory_space<vmem>>, %arg12: memref<1x1x32xf32, #tpu.memory_space<vmem>>, %arg13: memref<1x32x64xbf16, #tpu.memory_space<vmem>>, %arg14: memref<1x1x64xf32, #tpu.memory_space<vmem>>, %arg15: memref<1x64x32xbf16, #tpu.memory_space<vmem>>, %arg16: memref<1x1x32xf32, #tpu.memory_space<vmem>>, %arg17: memref<1x1x32xf32, #tpu.memory_space<vmem>>, %arg18: memref<1x1x32xf32, #tpu.memory_space<vmem>>, %arg19: memref<2x8x32xf32, #tpu.memory_space<vmem>>) attributes {dimension_semantics = [#tpu.dimension_semantics<parallel>, #tpu.dimension_semantics<arbitrary>], iteration_bounds = array<i64: 1, 2>, scalar_prefetch = 0 : i64, scratch_operands = 0 : i64, tpu.core_type = #tpu.core_type<tc>, window_params = [{transform_indices = @transform_0, window_bounds = array<i64: 2, 8, 32>}, {transform_indices = @transform_1, window_bounds = array<i64: 1, 32, 32>}, {transform_indices = @transform_2, window_bounds = array<i64: 1, 1, 32>}, {transform_indices = @transform_3, window_bounds = array<i64: 1, 32, 32>}, {transform_indices = @transform_4, window_bounds = array<i64: 1, 1, 32>}, {transform_indices = @transform_5, window_bounds = array<i64: 1, 32, 32>}, {transform_indices = @transform_6, window_bounds = array<i64: 1, 1, 32>}, {transform_indices = @transform_7, window_bounds = array<i64: 1, 32, 32>}, {transform_indices = @transform_8, window_bounds = array<i64: 1, 1, 32>}, {transform_indices = @transform_9, window_bounds = array<i64: 1, 1, 32>}, {transform_indices = @transform_10, window_bounds = array<i64: 1, 1, 32>}, {transform_indices = @transform_11, window_bounds = array<i64: 1, 32, 64>}, {transform_indices = @transform_12, window_bounds = array<i64: 1, 1, 64>}, {transform_indices = @transform_13, window_bounds = array<i64: 1, 64, 32>}, {transform_indices = @transform_14, window_bounds = array<i64: 1, 1, 32>}, {transform_indices = @transform_15, window_bounds = array<i64: 1, 1, 32>}, {transform_indices = @transform_16, window_bounds = array<i64: 1, 1, 32>}, {transform_indices = @transform_17, window_bounds = array<i64: 2, 8, 32>}]} {
    %c0_i32 = arith.constant 0 : i32
    %0 = arith.cmpi eq, %arg1, %c0_i32 : i32
    %1 = arith.extui %0 : i1 to i32
    %c0_i32_0 = arith.constant 0 : i32
    %2 = arith.cmpi ne, %1, %c0_i32_0 : i32
    scf.if %2 {
      %c0_87 = arith.constant 0 : index
      %c0_88 = arith.constant 0 : index
      %c0_89 = arith.constant 0 : index
      %183 = vector.load %arg2[%c0_87, %c0_88, %c0_89] : memref<2x8x32xf32, #tpu.memory_space<vmem>>, vector<2x8x32xf32>
      %c0_90 = arith.constant 0 : index
      %c0_91 = arith.constant 0 : index
      %c0_92 = arith.constant 0 : index
      %184 = vector.load %arg19[%c0_90, %c0_91, %c0_92] : memref<2x8x32xf32, #tpu.memory_space<vmem>>, vector<2x8x32xf32>
      tpu.vector_store %arg19[%c0_90, %c0_91, %c0_92], %183 {strides = array<i32>} : memref<2x8x32xf32, #tpu.memory_space<vmem>>, vector<2x8x32xf32>,
    } else {
    }
    %c0 = arith.constant 0 : index
    %c0_1 = arith.constant 0 : index
    %c0_2 = arith.constant 0 : index
    %3 = vector.load %arg19[%c0, %c0_1, %c0_2] : memref<2x8x32xf32, #tpu.memory_space<vmem>>, vector<2x8x32xf32>
    %4 = vector.shape_cast %3 : vector<2x8x32xf32> to vector<16x32xf32>
    %5 = arith.truncf %4 : vector<16x32xf32> to vector<16x32xbf16>
    %c0_3 = arith.constant 0 : index
    %c0_4 = arith.constant 0 : index
    %c0_5 = arith.constant 0 : index
    %6 = vector.load %arg3[%c0_3, %c0_4, %c0_5] : memref<1x32x32xbf16, #tpu.memory_space<vmem>>, vector<1x32x32xbf16>
    %7 = vector.shape_cast %6 : vector<1x32x32xbf16> to vector<32x32xbf16>
    %cst = arith.constant dense<0.000000e+00> : vector<16x32xf32>
    %8 = tpu.matmul %5, %7, %cst {dimension_numbers = #tpu.dot_dimension_numbers<[1], [0], [0], [1], [0, 0, 1, 1], [], []>} : vector<16x32xbf16>, vector<32x32xbf16>, vector<16x32xf32> -> vector<16x32xf32>
    %c0_6 = arith.constant 0 : index
    %c0_7 = arith.constant 0 : index
    %c0_8 = arith.constant 0 : index
    %9 = vector.load %arg4[%c0_6, %c0_7, %c0_8] : memref<1x1x32xf32, #tpu.memory_space<vmem>>, vector<1x1x32xf32>
    %10 = vector.shape_cast %9 : vector<1x1x32xf32> to vector<1x32xf32>
    %11 = vector.broadcast %10 : vector<1x32xf32> to vector<16x32xf32>
    %12 = arith.addf %8, %11 : vector<16x32xf32>
    %c0_9 = arith.constant 0 : index
    %c0_10 = arith.constant 0 : index
    %c0_11 = arith.constant 0 : index
    %13 = vector.load %arg5[%c0_9, %c0_10, %c0_11] : memref<1x32x32xbf16, #tpu.memory_space<vmem>>, vector<1x32x32xbf16>
    %14 = vector.shape_cast %13 : vector<1x32x32xbf16> to vector<32x32xbf16>
    %cst_12 = arith.constant dense<0.000000e+00> : vector<16x32xf32>
    %15 = tpu.matmul %5, %14, %cst_12 {dimension_numbers = #tpu.dot_dimension_numbers<[1], [0], [0], [1], [0, 0, 1, 1], [], []>} : vector<16x32xbf16>, vector<32x32xbf16>, vector<16x32xf32> -> vector<16x32xf32>
    %c0_13 = arith.constant 0 : index
    %c0_14 = arith.constant 0 : index
    %c0_15 = arith.constant 0 : index
    %16 = vector.load %arg6[%c0_13, %c0_14, %c0_15] : memref<1x1x32xf32, #tpu.memory_space<vmem>>, vector<1x1x32xf32>
    %17 = vector.shape_cast %16 : vector<1x1x32xf32> to vector<1x32xf32>
    %18 = vector.broadcast %17 : vector<1x32xf32> to vector<16x32xf32>
    %19 = arith.addf %15, %18 : vector<16x32xf32>
    %c0_16 = arith.constant 0 : index
    %c0_17 = arith.constant 0 : index
    %c0_18 = arith.constant 0 : index
    %20 = vector.load %arg7[%c0_16, %c0_17, %c0_18] : memref<1x32x32xbf16, #tpu.memory_space<vmem>>, vector<1x32x32xbf16>
    %21 = vector.shape_cast %20 : vector<1x32x32xbf16> to vector<32x32xbf16>
    %cst_19 = arith.constant dense<0.000000e+00> : vector<16x32xf32>
    %22 = tpu.matmul %5, %21, %cst_19 {dimension_numbers = #tpu.dot_dimension_numbers<[1], [0], [0], [1], [0, 0, 1, 1], [], []>} : vector<16x32xbf16>, vector<32x32xbf16>, vector<16x32xf32> -> vector<16x32xf32>
    %c0_20 = arith.constant 0 : index
    %c0_21 = arith.constant 0 : index
    %c0_22 = arith.constant 0 : index
    %23 = vector.load %arg8[%c0_20, %c0_21, %c0_22] : memref<1x1x32xf32, #tpu.memory_space<vmem>>, vector<1x1x32xf32>
    %24 = vector.shape_cast %23 : vector<1x1x32xf32> to vector<1x32xf32>
    %25 = vector.broadcast %24 : vector<1x32xf32> to vector<16x32xf32>
    %26 = arith.addf %22, %25 : vector<16x32xf32>
    %c0_23 = arith.constant 0 : index
    %c0_24 = arith.constant 0 : index
    %c0_25 = arith.constant 0 : index
    %27 = vector.load %arg9[%c0_23, %c0_24, %c0_25] : memref<1x32x32xbf16, #tpu.memory_space<vmem>>, vector<1x32x32xbf16>
    %28 = vector.shape_cast %27 : vector<1x32x32xbf16> to vector<32x32xbf16>
    %c0_26 = arith.constant 0 : index
    %c0_27 = arith.constant 0 : index
    %c0_28 = arith.constant 0 : index
    %29 = vector.load %arg10[%c0_26, %c0_27, %c0_28] : memref<1x1x32xf32, #tpu.memory_space<vmem>>, vector<1x1x32xf32>
    %30 = vector.shape_cast %29 : vector<1x1x32xf32> to vector<1x32xf32>
    %cst_29 = arith.constant 0.353553385 : f32
    %31 = vector.broadcast %cst_29 : f32 to vector<16x32xf32>
    %32 = arith.mulf %12, %31 : vector<16x32xf32>
    %33 = vector.shape_cast %32 : vector<16x32xf32> to vector<2x8x32xf32>
    %34 = arith.truncf %33 : vector<2x8x32xf32> to vector<2x8x32xbf16>
    %35 = vector.shape_cast %19 : vector<16x32xf32> to vector<2x8x32xf32>
    %36 = arith.truncf %35 : vector<2x8x32xf32> to vector<2x8x32xbf16>
    %37 = vector.shape_cast %26 : vector<16x32xf32> to vector<2x8x32xf32>
    %38 = arith.truncf %37 : vector<2x8x32xf32> to vector<2x8x32xbf16>
    %39 = vector.extract_strided_slice %34 {offsets = [0, 0, 0], sizes = [2, 8, 8], strides = [1, 1, 1]} : vector<2x8x32xbf16> to vector<2x8x8xbf16>
    %40 = vector.extract_strided_slice %36 {offsets = [0, 0, 0], sizes = [2, 8, 8], strides = [1, 1, 1]} : vector<2x8x32xbf16> to vector<2x8x8xbf16>
    "tpu.trace_start"() <{level = 10 : i32, message = "bqd,bkd->bqk"}> : () -> ()
    %cst_30 = arith.constant dense<0.000000e+00> : vector<2x8x8xf32>
    %41 = tpu.matmul %39, %40, %cst_30 {dimension_numbers = #tpu.dot_dimension_numbers<[2], [2], [1], [1], [0, 0, 0, 1, 1, 1], [0], [0]>} : vector<2x8x8xbf16>, vector<2x8x8xbf16>, vector<2x8x8xf32> -> vector<2x8x8xf32>
    "tpu.trace_stop"() : () -> ()
    %cst_31 = arith.constant dense<0xFF800000> : vector<2x8xf32>
    %42 = vector.multi_reduction <maximumf>, %41, %cst_31 [2] : vector<2x8x8xf32> to vector<2x8xf32>
    %43 = vector.shape_cast %42 : vector<2x8xf32> to vector<2x8x1xf32>
    %44 = vector.broadcast %43 : vector<2x8x1xf32> to vector<2x8x8xf32>
    %45 = arith.subf %41, %44 : vector<2x8x8xf32>
    %46 = math.exp %45 : vector<2x8x8xf32>
    %cst_32 = arith.constant dense<0.000000e+00> : vector<2x8xf32>
    %47 = vector.multi_reduction <add>, %46, %cst_32 [2] : vector<2x8x8xf32> to vector<2x8xf32>
    %48 = vector.shape_cast %47 : vector<2x8xf32> to vector<2x8x1xf32>
    %49 = tpu.reciprocal %48 {approx = true} : vector<2x8x1xf32> -> vector<2x8x1xf32>
    %50 = vector.broadcast %49 : vector<2x8x1xf32> to vector<2x8x8xf32>
    %51 = arith.mulf %46, %50 : vector<2x8x8xf32>
    %52 = arith.truncf %51 : vector<2x8x8xf32> to vector<2x8x8xbf16>
    %53 = vector.extract_strided_slice %38 {offsets = [0, 0, 0], sizes = [2, 8, 8], strides = [1, 1, 1]} : vector<2x8x32xbf16> to vector<2x8x8xbf16>
    "tpu.trace_start"() <{level = 10 : i32, message = "bqk,bkd->bqd"}> : () -> ()
    %cst_33 = arith.constant dense<0.000000e+00> : vector<2x8x8xf32>
    %54 = tpu.matmul %52, %53, %cst_33 {dimension_numbers = #tpu.dot_dimension_numbers<[2], [1], [1], [2], [0, 0, 0, 1, 1, 2], [0], [0]>} : vector<2x8x8xbf16>, vector<2x8x8xbf16>, vector<2x8x8xf32> -> vector<2x8x8xf32>
    "tpu.trace_stop"() : () -> ()
    %55 = vector.extract_strided_slice %34 {offsets = [0, 0, 8], sizes = [2, 8, 8], strides = [1, 1, 1]} : vector<2x8x32xbf16> to vector<2x8x8xbf16>
    %56 = vector.extract_strided_slice %36 {offsets = [0, 0, 8], sizes = [2, 8, 8], strides = [1, 1, 1]} : vector<2x8x32xbf16> to vector<2x8x8xbf16>
    "tpu.trace_start"() <{level = 10 : i32, message = "bqd,bkd->bqk"}> : () -> ()
    %cst_34 = arith.constant dense<0.000000e+00> : vector<2x8x8xf32>
    %57 = tpu.matmul %55, %56, %cst_34 {dimension_numbers = #tpu.dot_dimension_numbers<[2], [2], [1], [1], [0, 0, 0, 1, 1, 1], [0], [0]>} : vector<2x8x8xbf16>, vector<2x8x8xbf16>, vector<2x8x8xf32> -> vector<2x8x8xf32>
    "tpu.trace_stop"() : () -> ()
    %cst_35 = arith.constant dense<0xFF800000> : vector<2x8xf32>
    %58 = vector.multi_reduction <maximumf>, %57, %cst_35 [2] : vector<2x8x8xf32> to vector<2x8xf32>
    %59 = vector.shape_cast %58 : vector<2x8xf32> to vector<2x8x1xf32>
    %60 = vector.broadcast %59 : vector<2x8x1xf32> to vector<2x8x8xf32>
    %61 = arith.subf %57, %60 : vector<2x8x8xf32>
    %62 = math.exp %61 : vector<2x8x8xf32>
    %cst_36 = arith.constant dense<0.000000e+00> : vector<2x8xf32>
    %63 = vector.multi_reduction <add>, %62, %cst_36 [2] : vector<2x8x8xf32> to vector<2x8xf32>
    %64 = vector.shape_cast %63 : vector<2x8xf32> to vector<2x8x1xf32>
    %65 = tpu.reciprocal %64 {approx = true} : vector<2x8x1xf32> -> vector<2x8x1xf32>
    %66 = vector.broadcast %65 : vector<2x8x1xf32> to vector<2x8x8xf32>
    %67 = arith.mulf %62, %66 : vector<2x8x8xf32>
    %68 = arith.truncf %67 : vector<2x8x8xf32> to vector<2x8x8xbf16>
    %69 = vector.extract_strided_slice %38 {offsets = [0, 0, 8], sizes = [2, 8, 8], strides = [1, 1, 1]} : vector<2x8x32xbf16> to vector<2x8x8xbf16>
    "tpu.trace_start"() <{level = 10 : i32, message = "bqk,bkd->bqd"}> : () -> ()
    %cst_37 = arith.constant dense<0.000000e+00> : vector<2x8x8xf32>
    %70 = tpu.matmul %68, %69, %cst_37 {dimension_numbers = #tpu.dot_dimension_numbers<[2], [1], [1], [2], [0, 0, 0, 1, 1, 2], [0], [0]>} : vector<2x8x8xbf16>, vector<2x8x8xbf16>, vector<2x8x8xf32> -> vector<2x8x8xf32>
    "tpu.trace_stop"() : () -> ()
    %71 = vector.extract_strided_slice %34 {offsets = [0, 0, 16], sizes = [2, 8, 8], strides = [1, 1, 1]} : vector<2x8x32xbf16> to vector<2x8x8xbf16>
    %72 = vector.extract_strided_slice %36 {offsets = [0, 0, 16], sizes = [2, 8, 8], strides = [1, 1, 1]} : vector<2x8x32xbf16> to vector<2x8x8xbf16>
    "tpu.trace_start"() <{level = 10 : i32, message = "bqd,bkd->bqk"}> : () -> ()
    %cst_38 = arith.constant dense<0.000000e+00> : vector<2x8x8xf32>
    %73 = tpu.matmul %71, %72, %cst_38 {dimension_numbers = #tpu.dot_dimension_numbers<[2], [2], [1], [1], [0, 0, 0, 1, 1, 1], [0], [0]>} : vector<2x8x8xbf16>, vector<2x8x8xbf16>, vector<2x8x8xf32> -> vector<2x8x8xf32>
    "tpu.trace_stop"() : () -> ()
    %cst_39 = arith.constant dense<0xFF800000> : vector<2x8xf32>
    %74 = vector.multi_reduction <maximumf>, %73, %cst_39 [2] : vector<2x8x8xf32> to vector<2x8xf32>
    %75 = vector.shape_cast %74 : vector<2x8xf32> to vector<2x8x1xf32>
    %76 = vector.broadcast %75 : vector<2x8x1xf32> to vector<2x8x8xf32>
    %77 = arith.subf %73, %76 : vector<2x8x8xf32>
    %78 = math.exp %77 : vector<2x8x8xf32>
    %cst_40 = arith.constant dense<0.000000e+00> : vector<2x8xf32>
    %79 = vector.multi_reduction <add>, %78, %cst_40 [2] : vector<2x8x8xf32> to vector<2x8xf32>
    %80 = vector.shape_cast %79 : vector<2x8xf32> to vector<2x8x1xf32>
    %81 = tpu.reciprocal %80 {approx = true} : vector<2x8x1xf32> -> vector<2x8x1xf32>
    %82 = vector.broadcast %81 : vector<2x8x1xf32> to vector<2x8x8xf32>
    %83 = arith.mulf %78, %82 : vector<2x8x8xf32>
    %84 = arith.truncf %83 : vector<2x8x8xf32> to vector<2x8x8xbf16>
    %85 = vector.extract_strided_slice %38 {offsets = [0, 0, 16], sizes = [2, 8, 8], strides = [1, 1, 1]} : vector<2x8x32xbf16> to vector<2x8x8xbf16>
    "tpu.trace_start"() <{level = 10 : i32, message = "bqk,bkd->bqd"}> : () -> ()
    %cst_41 = arith.constant dense<0.000000e+00> : vector<2x8x8xf32>
    %86 = tpu.matmul %84, %85, %cst_41 {dimension_numbers = #tpu.dot_dimension_numbers<[2], [1], [1], [2], [0, 0, 0, 1, 1, 2], [0], [0]>} : vector<2x8x8xbf16>, vector<2x8x8xbf16>, vector<2x8x8xf32> -> vector<2x8x8xf32>
    "tpu.trace_stop"() : () -> ()
    %87 = vector.extract_strided_slice %34 {offsets = [0, 0, 24], sizes = [2, 8, 8], strides = [1, 1, 1]} : vector<2x8x32xbf16> to vector<2x8x8xbf16>
    %88 = vector.extract_strided_slice %36 {offsets = [0, 0, 24], sizes = [2, 8, 8], strides = [1, 1, 1]} : vector<2x8x32xbf16> to vector<2x8x8xbf16>
    "tpu.trace_start"() <{level = 10 : i32, message = "bqd,bkd->bqk"}> : () -> ()
    %cst_42 = arith.constant dense<0.000000e+00> : vector<2x8x8xf32>
    %89 = tpu.matmul %87, %88, %cst_42 {dimension_numbers = #tpu.dot_dimension_numbers<[2], [2], [1], [1], [0, 0, 0, 1, 1, 1], [0], [0]>} : vector<2x8x8xbf16>, vector<2x8x8xbf16>, vector<2x8x8xf32> -> vector<2x8x8xf32>
    "tpu.trace_stop"() : () -> ()
    %cst_43 = arith.constant dense<0xFF800000> : vector<2x8xf32>
    %90 = vector.multi_reduction <maximumf>, %89, %cst_43 [2] : vector<2x8x8xf32> to vector<2x8xf32>
    %91 = vector.shape_cast %90 : vector<2x8xf32> to vector<2x8x1xf32>
    %92 = vector.broadcast %91 : vector<2x8x1xf32> to vector<2x8x8xf32>
    %93 = arith.subf %89, %92 : vector<2x8x8xf32>
    %94 = math.exp %93 : vector<2x8x8xf32>
    %cst_44 = arith.constant dense<0.000000e+00> : vector<2x8xf32>
    %95 = vector.multi_reduction <add>, %94, %cst_44 [2] : vector<2x8x8xf32> to vector<2x8xf32>
    %96 = vector.shape_cast %95 : vector<2x8xf32> to vector<2x8x1xf32>
    %97 = tpu.reciprocal %96 {approx = true} : vector<2x8x1xf32> -> vector<2x8x1xf32>
    %98 = vector.broadcast %97 : vector<2x8x1xf32> to vector<2x8x8xf32>
    %99 = arith.mulf %94, %98 : vector<2x8x8xf32>
    %100 = arith.truncf %99 : vector<2x8x8xf32> to vector<2x8x8xbf16>
    %101 = vector.extract_strided_slice %38 {offsets = [0, 0, 24], sizes = [2, 8, 8], strides = [1, 1, 1]} : vector<2x8x32xbf16> to vector<2x8x8xbf16>
    "tpu.trace_start"() <{level = 10 : i32, message = "bqk,bkd->bqd"}> : () -> ()
    %cst_45 = arith.constant dense<0.000000e+00> : vector<2x8x8xf32>
    %102 = tpu.matmul %100, %101, %cst_45 {dimension_numbers = #tpu.dot_dimension_numbers<[2], [1], [1], [2], [0, 0, 0, 1, 1, 2], [0], [0]>} : vector<2x8x8xbf16>, vector<2x8x8xbf16>, vector<2x8x8xf32> -> vector<2x8x8xf32>
    "tpu.trace_stop"() : () -> ()
    %103 = tpu.concatenate %54, %70, %86, %102 in 2 : vector<2x8x8xf32>, vector<2x8x8xf32>, vector<2x8x8xf32>, vector<2x8x8xf32> -> vector<2x8x32xf32>
    %104 = vector.shape_cast %103 : vector<2x8x32xf32> to vector<16x32xf32>
    %105 = arith.truncf %104 : vector<16x32xf32> to vector<16x32xbf16>
    %cst_46 = arith.constant dense<0.000000e+00> : vector<16x32xf32>
    %106 = tpu.matmul %105, %28, %cst_46 {dimension_numbers = #tpu.dot_dimension_numbers<[1], [0], [0], [1], [0, 0, 1, 1], [], []>} : vector<16x32xbf16>, vector<32x32xbf16>, vector<16x32xf32> -> vector<16x32xf32>
    %107 = vector.broadcast %30 : vector<1x32xf32> to vector<16x32xf32>
    %108 = arith.addf %106, %107 : vector<16x32xf32>
    %109 = arith.addf %4, %108 : vector<16x32xf32>
    %c0_47 = arith.constant 0 : index
    %c0_48 = arith.constant 0 : index
    %c0_49 = arith.constant 0 : index
    %110 = vector.load %arg11[%c0_47, %c0_48, %c0_49] : memref<1x1x32xf32, #tpu.memory_space<vmem>>, vector<1x1x32xf32>
    %111 = vector.shape_cast %110 : vector<1x1x32xf32> to vector<1x32xf32>
    %c0_50 = arith.constant 0 : index
    %c0_51 = arith.constant 0 : index
    %c0_52 = arith.constant 0 : index
    %112 = vector.load %arg12[%c0_50, %c0_51, %c0_52] : memref<1x1x32xf32, #tpu.memory_space<vmem>>, vector<1x1x32xf32>
    %113 = vector.shape_cast %112 : vector<1x1x32xf32> to vector<1x32xf32>
    %cst_53 = arith.constant dense<0.000000e+00> : vector<16xf32>
    %114 = vector.multi_reduction <add>, %109, %cst_53 [1] : vector<16x32xf32> to vector<16xf32>
    %115 = vector.shape_cast %114 : vector<16xf32> to vector<16x1xf32>
    %cst_54 = arith.constant 3.200000e+01 : f32
    %116 = vector.broadcast %cst_54 : f32 to vector<16x1xf32>
    %117 = arith.divf %115, %116 : vector<16x1xf32>
    %118 = vector.broadcast %117 : vector<16x1xf32> to vector<16x32xf32>
    %119 = arith.subf %109, %118 : vector<16x32xf32>
    %120 = arith.mulf %119, %119 : vector<16x32xf32>
    %cst_55 = arith.constant dense<0.000000e+00> : vector<16xf32>
    %121 = vector.multi_reduction <add>, %120, %cst_55 [1] : vector<16x32xf32> to vector<16xf32>
    %122 = vector.shape_cast %121 : vector<16xf32> to vector<16x1xf32>
    %cst_56 = arith.constant 3.200000e+01 : f32
    %123 = vector.broadcast %cst_56 : f32 to vector<16x1xf32>
    %124 = arith.divf %122, %123 : vector<16x1xf32>
    %125 = vector.broadcast %117 : vector<16x1xf32> to vector<16x32xf32>
    %126 = arith.subf %109, %125 : vector<16x32xf32>
    %cst_57 = arith.constant 9.99999974E-6 : f32
    %127 = vector.broadcast %cst_57 : f32 to vector<16x1xf32>
    %128 = arith.addf %124, %127 : vector<16x1xf32>
    %129 = math.rsqrt %128 : vector<16x1xf32>
    %130 = vector.broadcast %129 : vector<16x1xf32> to vector<16x32xf32>
    %131 = arith.mulf %126, %130 : vector<16x32xf32>
    %132 = vector.broadcast %111 : vector<1x32xf32> to vector<16x32xf32>
    %133 = arith.mulf %131, %132 : vector<16x32xf32>
    %134 = vector.broadcast %113 : vector<1x32xf32> to vector<16x32xf32>
    %135 = arith.addf %133, %134 : vector<16x32xf32>
    %136 = arith.truncf %135 : vector<16x32xf32> to vector<16x32xbf16>
    %c0_58 = arith.constant 0 : index
    %c0_59 = arith.constant 0 : index
    %c0_60 = arith.constant 0 : index
    %137 = vector.load %arg13[%c0_58, %c0_59, %c0_60] : memref<1x32x64xbf16, #tpu.memory_space<vmem>>, vector<1x32x64xbf16>
    %138 = vector.shape_cast %137 : vector<1x32x64xbf16> to vector<32x64xbf16>
    %cst_61 = arith.constant dense<0.000000e+00> : vector<16x64xf32>
    %139 = tpu.matmul %136, %138, %cst_61 {dimension_numbers = #tpu.dot_dimension_numbers<[1], [0], [0], [1], [0, 0, 1, 1], [], []>} : vector<16x32xbf16>, vector<32x64xbf16>, vector<16x64xf32> -> vector<16x64xf32>
    %c0_62 = arith.constant 0 : index
    %c0_63 = arith.constant 0 : index
    %c0_64 = arith.constant 0 : index
    %140 = vector.load %arg14[%c0_62, %c0_63, %c0_64] : memref<1x1x64xf32, #tpu.memory_space<vmem>>, vector<1x1x64xf32>
    %141 = vector.shape_cast %140 : vector<1x1x64xf32> to vector<1x64xf32>
    %142 = vector.broadcast %141 : vector<1x64xf32> to vector<16x64xf32>
    %143 = arith.addf %139, %142 : vector<16x64xf32>
    %cst_65 = arith.constant 0.000000e+00 : f32
    %144 = vector.broadcast %cst_65 : f32 to vector<16x64xf32>
    %145 = arith.maximumf %143, %144 : vector<16x64xf32>
    %146 = arith.truncf %145 : vector<16x64xf32> to vector<16x64xbf16>
    %c0_66 = arith.constant 0 : index
    %c0_67 = arith.constant 0 : index
    %c0_68 = arith.constant 0 : index
    %147 = vector.load %arg15[%c0_66, %c0_67, %c0_68] : memref<1x64x32xbf16, #tpu.memory_space<vmem>>, vector<1x64x32xbf16>
    %148 = vector.shape_cast %147 : vector<1x64x32xbf16> to vector<64x32xbf16>
    %cst_69 = arith.constant dense<0.000000e+00> : vector<16x32xf32>
    %149 = tpu.matmul %146, %148, %cst_69 {dimension_numbers = #tpu.dot_dimension_numbers<[1], [0], [0], [1], [0, 0, 1, 1], [], []>} : vector<16x64xbf16>, vector<64x32xbf16>, vector<16x32xf32> -> vector<16x32xf32>
    %c0_70 = arith.constant 0 : index
    %c0_71 = arith.constant 0 : index
    %c0_72 = arith.constant 0 : index
    %150 = vector.load %arg16[%c0_70, %c0_71, %c0_72] : memref<1x1x32xf32, #tpu.memory_space<vmem>>, vector<1x1x32xf32>
    %151 = vector.shape_cast %150 : vector<1x1x32xf32> to vector<1x32xf32>
    %152 = vector.broadcast %151 : vector<1x32xf32> to vector<16x32xf32>
    %153 = arith.addf %149, %152 : vector<16x32xf32>
    %154 = arith.addf %135, %153 : vector<16x32xf32>
    %c0_73 = arith.constant 0 : index
    %c0_74 = arith.constant 0 : index
    %c0_75 = arith.constant 0 : index
    %155 = vector.load %arg17[%c0_73, %c0_74, %c0_75] : memref<1x1x32xf32, #tpu.memory_space<vmem>>, vector<1x1x32xf32>
    %156 = vector.shape_cast %155 : vector<1x1x32xf32> to vector<1x32xf32>
    %c0_76 = arith.constant 0 : index
    %c0_77 = arith.constant 0 : index
    %c0_78 = arith.constant 0 : index
    %157 = vector.load %arg18[%c0_76, %c0_77, %c0_78] : memref<1x1x32xf32, #tpu.memory_space<vmem>>, vector<1x1x32xf32>
    %158 = vector.shape_cast %157 : vector<1x1x32xf32> to vector<1x32xf32>
    %cst_79 = arith.constant dense<0.000000e+00> : vector<16xf32>
    %159 = vector.multi_reduction <add>, %154, %cst_79 [1] : vector<16x32xf32> to vector<16xf32>
    %160 = vector.shape_cast %159 : vector<16xf32> to vector<16x1xf32>
    %cst_80 = arith.constant 3.200000e+01 : f32
    %161 = vector.broadcast %cst_80 : f32 to vector<16x1xf32>
    %162 = arith.divf %160, %161 : vector<16x1xf32>
    %163 = vector.broadcast %162 : vector<16x1xf32> to vector<16x32xf32>
    %164 = arith.subf %154, %163 : vector<16x32xf32>
    %165 = arith.mulf %164, %164 : vector<16x32xf32>
    %cst_81 = arith.constant dense<0.000000e+00> : vector<16xf32>
    %166 = vector.multi_reduction <add>, %165, %cst_81 [1] : vector<16x32xf32> to vector<16xf32>
    %167 = vector.shape_cast %166 : vector<16xf32> to vector<16x1xf32>
    %cst_82 = arith.constant 3.200000e+01 : f32
    %168 = vector.broadcast %cst_82 : f32 to vector<16x1xf32>
    %169 = arith.divf %167, %168 : vector<16x1xf32>
    %170 = vector.broadcast %162 : vector<16x1xf32> to vector<16x32xf32>
    %171 = arith.subf %154, %170 : vector<16x32xf32>
    %cst_83 = arith.constant 9.99999974E-6 : f32
    %172 = vector.broadcast %cst_83 : f32 to vector<16x1xf32>
    %173 = arith.addf %169, %172 : vector<16x1xf32>
    %174 = math.rsqrt %173 : vector<16x1xf32>
    %175 = vector.broadcast %174 : vector<16x1xf32> to vector<16x32xf32>
    %176 = arith.mulf %171, %175 : vector<16x32xf32>
    %177 = vector.broadcast %156 : vector<1x32xf32> to vector<16x32xf32>
    %178 = arith.mulf %176, %177 : vector<16x32xf32>
    %179 = vector.broadcast %158 : vector<1x32xf32> to vector<16x32xf32>
    %180 = arith.addf %178, %179 : vector<16x32xf32>
    %181 = vector.shape_cast %180 : vector<16x32xf32> to vector<2x8x32xf32>
    %c0_84 = arith.constant 0 : index
    %c0_85 = arith.constant 0 : index
    %c0_86 = arith.constant 0 : index
    %182 = vector.load %arg19[%c0_84, %c0_85, %c0_86] : memref<2x8x32xf32, #tpu.memory_space<vmem>>, vector<2x8x32xf32>
    tpu.vector_store %arg19[%c0_84, %c0_85, %c0_86], %181 {strides = array<i32>} : memref<2x8x32xf32, #tpu.memory_space<vmem>>, vector<2x8x32xf32>,
    return
  }
  func.func @transform_0(%arg0: i32, %arg1: i32) -> (i32, i32, i32) {
    %c0_i32 = arith.constant 0 : i32
    %c0_i32_0 = arith.constant 0 : i32
    %c0_i32_1 = arith.constant 0 : i32
    return %arg0, %c0_i32, %c0_i32_0 : i32, i32, i32
  }
  func.func @transform_1(%arg0: i32, %arg1: i32) -> (i32, i32, i32) {
    %c0_i32 = arith.constant 0 : i32
    %c0_i32_0 = arith.constant 0 : i32
    %c0_i32_1 = arith.constant 0 : i32
    return %arg1, %c0_i32, %c0_i32_0 : i32, i32, i32
  }
  func.func @transform_2(%arg0: i32, %arg1: i32) -> (i32, i32, i32) {
    %c0_i32 = arith.constant 0 : i32
    %c0_i32_0 = arith.constant 0 : i32
    %c0_i32_1 = arith.constant 0 : i32
    return %arg1, %c0_i32, %c0_i32_0 : i32, i32, i32
  }
  func.func @transform_3(%arg0: i32, %arg1: i32) -> (i32, i32, i32) {
    %c0_i32 = arith.constant 0 : i32
    %c0_i32_0 = arith.constant 0 : i32
    %c0_i32_1 = arith.constant 0 : i32
    return %arg1, %c0_i32, %c0_i32_0 : i32, i32, i32
  }
  func.func @transform_4(%arg0: i32, %arg1: i32) -> (i32, i32, i32) {
    %c0_i32 = arith.constant 0 : i32
    %c0_i32_0 = arith.constant 0 : i32
    %c0_i32_1 = arith.constant 0 : i32
    return %arg1, %c0_i32, %c0_i32_0 : i32, i32, i32
  }
  func.func @transform_5(%arg0: i32, %arg1: i32) -> (i32, i32, i32) {
    %c0_i32 = arith.constant 0 : i32
    %c0_i32_0 = arith.constant 0 : i32
    %c0_i32_1 = arith.constant 0 : i32
    return %arg1, %c0_i32, %c0_i32_0 : i32, i32, i32
  }
  func.func @transform_6(%arg0: i32, %arg1: i32) -> (i32, i32, i32) {
    %c0_i32 = arith.constant 0 : i32
    %c0_i32_0 = arith.constant 0 : i32
    %c0_i32_1 = arith.constant 0 : i32
    return %arg1, %c0_i32, %c0_i32_0 : i32, i32, i32
  }
  func.func @transform_7(%arg0: i32, %arg1: i32) -> (i32, i32, i32) {
    %c0_i32 = arith.constant 0 : i32
    %c0_i32_0 = arith.constant 0 : i32
    %c0_i32_1 = arith.constant 0 : i32
    return %arg1, %c0_i32, %c0_i32_0 : i32, i32, i32
  }
  func.func @transform_8(%arg0: i32, %arg1: i32) -> (i32, i32, i32) {
    %c0_i32 = arith.constant 0 : i32
    %c0_i32_0 = arith.constant 0 : i32
    %c0_i32_1 = arith.constant 0 : i32
    return %arg1, %c0_i32, %c0_i32_0 : i32, i32, i32
  }
  func.func @transform_9(%arg0: i32, %arg1: i32) -> (i32, i32, i32) {
    %c0_i32 = arith.constant 0 : i32
    %c0_i32_0 = arith.constant 0 : i32
    %c0_i32_1 = arith.constant 0 : i32
    return %arg1, %c0_i32, %c0_i32_0 : i32, i32, i32
  }
  func.func @transform_10(%arg0: i32, %arg1: i32) -> (i32, i32, i32) {
    %c0_i32 = arith.constant 0 : i32
    %c0_i32_0 = arith.constant 0 : i32
    %c0_i32_1 = arith.constant 0 : i32
    return %arg1, %c0_i32, %c0_i32_0 : i32, i32, i32
  }
  func.func @transform_11(%arg0: i32, %arg1: i32) -> (i32, i32, i32) {
    %c0_i32 = arith.constant 0 : i32
    %c0_i32_0 = arith.constant 0 : i32
    %c0_i32_1 = arith.constant 0 : i32
    return %arg1, %c0_i32, %c0_i32_0 : i32, i32, i32
  }
  func.func @transform_12(%arg0: i32, %arg1: i32) -> (i32, i32, i32) {
    %c0_i32 = arith.constant 0 : i32
    %c0_i32_0 = arith.constant 0 : i32
    %c0_i32_1 = arith.constant 0 : i32
    return %arg1, %c0_i32, %c0_i32_0 : i32, i32, i32
  }
  func.func @transform_13(%arg0: i32, %arg1: i32) -> (i32, i32, i32) {
    %c0_i32 = arith.constant 0 : i32
    %c0_i32_0 = arith.constant 0 : i32
    %c0_i32_1 = arith.constant 0 : i32
    return %arg1, %c0_i32, %c0_i32_0 : i32, i32, i32
  }
  func.func @transform_14(%arg0: i32, %arg1: i32) -> (i32, i32, i32) {
    %c0_i32 = arith.constant 0 : i32
    %c0_i32_0 = arith.constant 0 : i32
    %c0_i32_1 = arith.constant 0 : i32
    return %arg1, %c0_i32, %c0_i32_0 : i32, i32, i32
  }
  func.func @transform_15(%arg0: i32, %arg1: i32) -> (i32, i32, i32) {
    %c0_i32 = arith.constant 0 : i32
    %c0_i32_0 = arith.constant 0 : i32
    %c0_i32_1 = arith.constant 0 : i32
    return %arg1, %c0_i32, %c0_i32_0 : i32, i32, i32
  }
  func.func @transform_16(%arg0: i32, %arg1: i32) -> (i32, i32, i32) {
    %c0_i32 = arith.constant 0 : i32
    %c0_i32_0 = arith.constant 0 : i32
    %c0_i32_1 = arith.constant 0 : i32
    return %arg1, %c0_i32, %c0_i32_0 : i32, i32, i32
  }
  func.func @transform_17(%arg0: i32, %arg1: i32) -> (i32, i32, i32) {
    %c0_i32 = arith.constant 0 : i32
    %c0_i32_0 = arith.constant 0 : i32
    %c0_i32_1 = arith.constant 0 : i32
    return %arg0, %c0_i32, %c0_i32_0 : i32, i32, i32
  }
}

module attributes {stable_mosaic.version = 11 : i64} {
  func.func @_decoder_stack_kernel(%arg0: i32, %arg1: i32, %arg2: memref<2x8x32xf32, #tpu.memory_space<vmem>>, %arg3: memref<2x8x32xf32, #tpu.memory_space<vmem>>, %arg4: memref<1x32x32xbf16, #tpu.memory_space<vmem>>, %arg5: memref<1x1x32xf32, #tpu.memory_space<vmem>>, %arg6: memref<1x32x32xbf16, #tpu.memory_space<vmem>>, %arg7: memref<1x1x32xf32, #tpu.memory_space<vmem>>, %arg8: memref<1x32x32xbf16, #tpu.memory_space<vmem>>, %arg9: memref<1x1x32xf32, #tpu.memory_space<vmem>>, %arg10: memref<1x32x32xbf16, #tpu.memory_space<vmem>>, %arg11: memref<1x1x32xf32, #tpu.memory_space<vmem>>, %arg12: memref<1x1x32xf32, #tpu.memory_space<vmem>>, %arg13: memref<1x1x32xf32, #tpu.memory_space<vmem>>, %arg14: memref<1x32x32xbf16, #tpu.memory_space<vmem>>, %arg15: memref<1x1x32xf32, #tpu.memory_space<vmem>>, %arg16: memref<1x32x32xbf16, #tpu.memory_space<vmem>>, %arg17: memref<1x1x32xf32, #tpu.memory_space<vmem>>, %arg18: memref<1x32x32xbf16, #tpu.memory_space<vmem>>, %arg19: memref<1x1x32xf32, #tpu.memory_space<vmem>>, %arg20: memref<1x32x32xbf16, #tpu.memory_space<vmem>>, %arg21: memref<1x1x32xf32, #tpu.memory_space<vmem>>, %arg22: memref<1x1x32xf32, #tpu.memory_space<vmem>>, %arg23: memref<1x1x32xf32, #tpu.memory_space<vmem>>, %arg24: memref<1x32x64xbf16, #tpu.memory_space<vmem>>, %arg25: memref<1x1x64xf32, #tpu.memory_space<vmem>>, %arg26: memref<1x64x32xbf16, #tpu.memory_space<vmem>>, %arg27: memref<1x1x32xf32, #tpu.memory_space<vmem>>, %arg28: memref<1x1x32xf32, #tpu.memory_space<vmem>>, %arg29: memref<1x1x32xf32, #tpu.memory_space<vmem>>, %arg30: memref<2x8x32xf32, #tpu.memory_space<vmem>>) attributes {dimension_semantics = [#tpu.dimension_semantics<parallel>, #tpu.dimension_semantics<arbitrary>], iteration_bounds = array<i64: 1, 2>, scalar_prefetch = 0 : i64, scratch_operands = 0 : i64, tpu.core_type = #tpu.core_type<tc>, window_params = [{transform_indices = @transform_0, window_bounds = array<i64: 2, 8, 32>}, {transform_indices = @transform_1, window_bounds = array<i64: 2, 8, 32>}, {transform_indices = @transform_2, window_bounds = array<i64: 1, 32, 32>}, {transform_indices = @transform_3, window_bounds = array<i64: 1, 1, 32>}, {transform_indices = @transform_4, window_bounds = array<i64: 1, 32, 32>}, {transform_indices = @transform_5, window_bounds = array<i64: 1, 1, 32>}, {transform_indices = @transform_6, window_bounds = array<i64: 1, 32, 32>}, {transform_indices = @transform_7, window_bounds = array<i64: 1, 1, 32>}, {transform_indices = @transform_8, window_bounds = array<i64: 1, 32, 32>}, {transform_indices = @transform_9, window_bounds = array<i64: 1, 1, 32>}, {transform_indices = @transform_10, window_bounds = array<i64: 1, 1, 32>}, {transform_indices = @transform_11, window_bounds = array<i64: 1, 1, 32>}, {transform_indices = @transform_12, window_bounds = array<i64: 1, 32, 32>}, {transform_indices = @transform_13, window_bounds = array<i64: 1, 1, 32>}, {transform_indices = @transform_14, window_bounds = array<i64: 1, 32, 32>}, {transform_indices = @transform_15, window_bounds = array<i64: 1, 1, 32>}, {transform_indices = @transform_16, window_bounds = array<i64: 1, 32, 32>}, {transform_indices = @transform_17, window_bounds = array<i64: 1, 1, 32>}, {transform_indices = @transform_18, window_bounds = array<i64: 1, 32, 32>}, {transform_indices = @transform_19, window_bounds = array<i64: 1, 1, 32>}, {transform_indices = @transform_20, window_bounds = array<i64: 1, 1, 32>}, {transform_indices = @transform_21, window_bounds = array<i64: 1, 1, 32>}, {transform_indices = @transform_22, window_bounds = array<i64: 1, 32, 64>}, {transform_indices = @transform_23, window_bounds = array<i64: 1, 1, 64>}, {transform_indices = @transform_24, window_bounds = array<i64: 1, 64, 32>}, {transform_indices = @transform_25, window_bounds = array<i64: 1, 1, 32>}, {transform_indices = @transform_26, window_bounds = array<i64: 1, 1, 32>}, {transform_indices = @transform_27, window_bounds = array<i64: 1, 1, 32>}, {transform_indices = @transform_28, window_bounds = array<i64: 2, 8, 32>}]} {
    %c0_i32 = arith.constant 0 : i32
    %0 = arith.cmpi eq, %arg1, %c0_i32 : i32
    %1 = arith.extui %0 : i1 to i32
    %c0_i32_0 = arith.constant 0 : i32
    %2 = arith.cmpi ne, %1, %c0_i32_0 : i32
    scf.if %2 {
      %c0_148 = arith.constant 0 : index
      %c0_149 = arith.constant 0 : index
      %c0_150 = arith.constant 0 : index
      %332 = vector.load %arg2[%c0_148, %c0_149, %c0_150] : memref<2x8x32xf32, #tpu.memory_space<vmem>>, vector<2x8x32xf32>
      %c0_151 = arith.constant 0 : index
      %c0_152 = arith.constant 0 : index
      %c0_153 = arith.constant 0 : index
      %333 = vector.load %arg30[%c0_151, %c0_152, %c0_153] : memref<2x8x32xf32, #tpu.memory_space<vmem>>, vector<2x8x32xf32>
      tpu.vector_store %arg30[%c0_151, %c0_152, %c0_153], %332 {strides = array<i32>} : memref<2x8x32xf32, #tpu.memory_space<vmem>>, vector<2x8x32xf32>,
    } else {
    }
    %c0 = arith.constant 0 : index
    %c0_1 = arith.constant 0 : index
    %c0_2 = arith.constant 0 : index
    %3 = vector.load %arg30[%c0, %c0_1, %c0_2] : memref<2x8x32xf32, #tpu.memory_space<vmem>>, vector<2x8x32xf32>
    %4 = vector.shape_cast %3 : vector<2x8x32xf32> to vector<16x32xf32>
    %5 = arith.truncf %4 : vector<16x32xf32> to vector<16x32xbf16>
    %c0_3 = arith.constant 0 : index
    %c0_4 = arith.constant 0 : index
    %c0_5 = arith.constant 0 : index
    %6 = vector.load %arg4[%c0_3, %c0_4, %c0_5] : memref<1x32x32xbf16, #tpu.memory_space<vmem>>, vector<1x32x32xbf16>
    %7 = vector.shape_cast %6 : vector<1x32x32xbf16> to vector<32x32xbf16>
    %cst = arith.constant dense<0.000000e+00> : vector<16x32xf32>
    %8 = tpu.matmul %5, %7, %cst {dimension_numbers = #tpu.dot_dimension_numbers<[1], [0], [0], [1], [0, 0, 1, 1], [], []>} : vector<16x32xbf16>, vector<32x32xbf16>, vector<16x32xf32> -> vector<16x32xf32>
    %c0_6 = arith.constant 0 : index
    %c0_7 = arith.constant 0 : index
    %c0_8 = arith.constant 0 : index
    %9 = vector.load %arg5[%c0_6, %c0_7, %c0_8] : memref<1x1x32xf32, #tpu.memory_space<vmem>>, vector<1x1x32xf32>
    %10 = vector.shape_cast %9 : vector<1x1x32xf32> to vector<1x32xf32>
    %11 = vector.broadcast %10 : vector<1x32xf32> to vector<16x32xf32>
    %12 = arith.addf %8, %11 : vector<16x32xf32>
    %c0_9 = arith.constant 0 : index
    %c0_10 = arith.constant 0 : index
    %c0_11 = arith.constant 0 : index
    %13 = vector.load %arg6[%c0_9, %c0_10, %c0_11] : memref<1x32x32xbf16, #tpu.memory_space<vmem>>, vector<1x32x32xbf16>
    %14 = vector.shape_cast %13 : vector<1x32x32xbf16> to vector<32x32xbf16>
    %cst_12 = arith.constant dense<0.000000e+00> : vector<16x32xf32>
    %15 = tpu.matmul %5, %14, %cst_12 {dimension_numbers = #tpu.dot_dimension_numbers<[1], [0], [0], [1], [0, 0, 1, 1], [], []>} : vector<16x32xbf16>, vector<32x32xbf16>, vector<16x32xf32> -> vector<16x32xf32>
    %c0_13 = arith.constant 0 : index
    %c0_14 = arith.constant 0 : index
    %c0_15 = arith.constant 0 : index
    %16 = vector.load %arg7[%c0_13, %c0_14, %c0_15] : memref<1x1x32xf32, #tpu.memory_space<vmem>>, vector<1x1x32xf32>
    %17 = vector.shape_cast %16 : vector<1x1x32xf32> to vector<1x32xf32>
    %18 = vector.broadcast %17 : vector<1x32xf32> to vector<16x32xf32>
    %19 = arith.addf %15, %18 : vector<16x32xf32>
    %c0_16 = arith.constant 0 : index
    %c0_17 = arith.constant 0 : index
    %c0_18 = arith.constant 0 : index
    %20 = vector.load %arg8[%c0_16, %c0_17, %c0_18] : memref<1x32x32xbf16, #tpu.memory_space<vmem>>, vector<1x32x32xbf16>
    %21 = vector.shape_cast %20 : vector<1x32x32xbf16> to vector<32x32xbf16>
    %cst_19 = arith.constant dense<0.000000e+00> : vector<16x32xf32>
    %22 = tpu.matmul %5, %21, %cst_19 {dimension_numbers = #tpu.dot_dimension_numbers<[1], [0], [0], [1], [0, 0, 1, 1], [], []>} : vector<16x32xbf16>, vector<32x32xbf16>, vector<16x32xf32> -> vector<16x32xf32>
    %c0_20 = arith.constant 0 : index
    %c0_21 = arith.constant 0 : index
    %c0_22 = arith.constant 0 : index
    %23 = vector.load %arg9[%c0_20, %c0_21, %c0_22] : memref<1x1x32xf32, #tpu.memory_space<vmem>>, vector<1x1x32xf32>
    %24 = vector.shape_cast %23 : vector<1x1x32xf32> to vector<1x32xf32>
    %25 = vector.broadcast %24 : vector<1x32xf32> to vector<16x32xf32>
    %26 = arith.addf %22, %25 : vector<16x32xf32>
    %c0_23 = arith.constant 0 : index
    %c0_24 = arith.constant 0 : index
    %c0_25 = arith.constant 0 : index
    %27 = vector.load %arg10[%c0_23, %c0_24, %c0_25] : memref<1x32x32xbf16, #tpu.memory_space<vmem>>, vector<1x32x32xbf16>
    %28 = vector.shape_cast %27 : vector<1x32x32xbf16> to vector<32x32xbf16>
    %c0_26 = arith.constant 0 : index
    %c0_27 = arith.constant 0 : index
    %c0_28 = arith.constant 0 : index
    %29 = vector.load %arg11[%c0_26, %c0_27, %c0_28] : memref<1x1x32xf32, #tpu.memory_space<vmem>>, vector<1x1x32xf32>
    %30 = vector.shape_cast %29 : vector<1x1x32xf32> to vector<1x32xf32>
    %cst_29 = arith.constant 0.353553385 : f32
    %31 = vector.broadcast %cst_29 : f32 to vector<16x32xf32>
    %32 = arith.mulf %12, %31 : vector<16x32xf32>
    %33 = vector.shape_cast %32 : vector<16x32xf32> to vector<2x8x32xf32>
    %34 = arith.truncf %33 : vector<2x8x32xf32> to vector<2x8x32xbf16>
    %35 = vector.shape_cast %19 : vector<16x32xf32> to vector<2x8x32xf32>
    %36 = arith.truncf %35 : vector<2x8x32xf32> to vector<2x8x32xbf16>
    %37 = vector.shape_cast %26 : vector<16x32xf32> to vector<2x8x32xf32>
    %38 = arith.truncf %37 : vector<2x8x32xf32> to vector<2x8x32xbf16>
    %39 = tpu.iota {dimensions = array<i32: 0>} : vector<8x8xi32>
    %40 = tpu.iota {dimensions = array<i32: 1>} : vector<8x8xi32>
    %41 = arith.cmpi sgt, %40, %39 : vector<8x8xi32>
    %cst_30 = arith.constant -1.000000e+09 : f32
    %cst_31 = arith.constant 0.000000e+00 : f32
    %42 = vector.broadcast %cst_30 : f32 to vector<8x8xf32>
    %43 = vector.broadcast %cst_31 : f32 to vector<8x8xf32>
    %44 = arith.select %41, %42, %43 : vector<8x8xi1>, vector<8x8xf32>
    %45 = vector.shape_cast %44 : vector<8x8xf32> to vector<1x8x8xf32>
    %46 = vector.extract_strided_slice %34 {offsets = [0, 0, 0], sizes = [2, 8, 8], strides = [1, 1, 1]} : vector<2x8x32xbf16> to vector<2x8x8xbf16>
    %47 = vector.extract_strided_slice %36 {offsets = [0, 0, 0], sizes = [2, 8, 8], strides = [1, 1, 1]} : vector<2x8x32xbf16> to vector<2x8x8xbf16>
    "tpu.trace_start"() <{level = 10 : i32, message = "bqd,bkd->bqk"}> : () -> ()
    %cst_32 = arith.constant dense<0.000000e+00> : vector<2x8x8xf32>
    %48 = tpu.matmul %46, %47, %cst_32 {dimension_numbers = #tpu.dot_dimension_numbers<[2], [2], [1], [1], [0, 0, 0, 1, 1, 1], [0], [0]>} : vector<2x8x8xbf16>, vector<2x8x8xbf16>, vector<2x8x8xf32> -> vector<2x8x8xf32>
    "tpu.trace_stop"() : () -> ()
    %49 = vector.broadcast %45 : vector<1x8x8xf32> to vector<2x8x8xf32>
    %50 = arith.addf %48, %49 : vector<2x8x8xf32>
    %cst_33 = arith.constant dense<0xFF800000> : vector<2x8xf32>
    %51 = vector.multi_reduction <maximumf>, %50, %cst_33 [2] : vector<2x8x8xf32> to vector<2x8xf32>
    %52 = vector.shape_cast %51 : vector<2x8xf32> to vector<2x8x1xf32>
    %53 = vector.broadcast %52 : vector<2x8x1xf32> to vector<2x8x8xf32>
    %54 = arith.subf %50, %53 : vector<2x8x8xf32>
    %55 = math.exp %54 : vector<2x8x8xf32>
    %cst_34 = arith.constant dense<0.000000e+00> : vector<2x8xf32>
    %56 = vector.multi_reduction <add>, %55, %cst_34 [2] : vector<2x8x8xf32> to vector<2x8xf32>
    %57 = vector.shape_cast %56 : vector<2x8xf32> to vector<2x8x1xf32>
    %58 = tpu.reciprocal %57 {approx = true} : vector<2x8x1xf32> -> vector<2x8x1xf32>
    %59 = vector.broadcast %58 : vector<2x8x1xf32> to vector<2x8x8xf32>
    %60 = arith.mulf %55, %59 : vector<2x8x8xf32>
    %61 = arith.truncf %60 : vector<2x8x8xf32> to vector<2x8x8xbf16>
    %62 = vector.extract_strided_slice %38 {offsets = [0, 0, 0], sizes = [2, 8, 8], strides = [1, 1, 1]} : vector<2x8x32xbf16> to vector<2x8x8xbf16>
    "tpu.trace_start"() <{level = 10 : i32, message = "bqk,bkd->bqd"}> : () -> ()
    %cst_35 = arith.constant dense<0.000000e+00> : vector<2x8x8xf32>
    %63 = tpu.matmul %61, %62, %cst_35 {dimension_numbers = #tpu.dot_dimension_numbers<[2], [1], [1], [2], [0, 0, 0, 1, 1, 2], [0], [0]>} : vector<2x8x8xbf16>, vector<2x8x8xbf16>, vector<2x8x8xf32> -> vector<2x8x8xf32>
    "tpu.trace_stop"() : () -> ()
    %64 = vector.extract_strided_slice %34 {offsets = [0, 0, 8], sizes = [2, 8, 8], strides = [1, 1, 1]} : vector<2x8x32xbf16> to vector<2x8x8xbf16>
    %65 = vector.extract_strided_slice %36 {offsets = [0, 0, 8], sizes = [2, 8, 8], strides = [1, 1, 1]} : vector<2x8x32xbf16> to vector<2x8x8xbf16>
    "tpu.trace_start"() <{level = 10 : i32, message = "bqd,bkd->bqk"}> : () -> ()
    %cst_36 = arith.constant dense<0.000000e+00> : vector<2x8x8xf32>
    %66 = tpu.matmul %64, %65, %cst_36 {dimension_numbers = #tpu.dot_dimension_numbers<[2], [2], [1], [1], [0, 0, 0, 1, 1, 1], [0], [0]>} : vector<2x8x8xbf16>, vector<2x8x8xbf16>, vector<2x8x8xf32> -> vector<2x8x8xf32>
    "tpu.trace_stop"() : () -> ()
    %67 = vector.broadcast %45 : vector<1x8x8xf32> to vector<2x8x8xf32>
    %68 = arith.addf %66, %67 : vector<2x8x8xf32>
    %cst_37 = arith.constant dense<0xFF800000> : vector<2x8xf32>
    %69 = vector.multi_reduction <maximumf>, %68, %cst_37 [2] : vector<2x8x8xf32> to vector<2x8xf32>
    %70 = vector.shape_cast %69 : vector<2x8xf32> to vector<2x8x1xf32>
    %71 = vector.broadcast %70 : vector<2x8x1xf32> to vector<2x8x8xf32>
    %72 = arith.subf %68, %71 : vector<2x8x8xf32>
    %73 = math.exp %72 : vector<2x8x8xf32>
    %cst_38 = arith.constant dense<0.000000e+00> : vector<2x8xf32>
    %74 = vector.multi_reduction <add>, %73, %cst_38 [2] : vector<2x8x8xf32> to vector<2x8xf32>
    %75 = vector.shape_cast %74 : vector<2x8xf32> to vector<2x8x1xf32>
    %76 = tpu.reciprocal %75 {approx = true} : vector<2x8x1xf32> -> vector<2x8x1xf32>
    %77 = vector.broadcast %76 : vector<2x8x1xf32> to vector<2x8x8xf32>
    %78 = arith.mulf %73, %77 : vector<2x8x8xf32>
    %79 = arith.truncf %78 : vector<2x8x8xf32> to vector<2x8x8xbf16>
    %80 = vector.extract_strided_slice %38 {offsets = [0, 0, 8], sizes = [2, 8, 8], strides = [1, 1, 1]} : vector<2x8x32xbf16> to vector<2x8x8xbf16>
    "tpu.trace_start"() <{level = 10 : i32, message = "bqk,bkd->bqd"}> : () -> ()
    %cst_39 = arith.constant dense<0.000000e+00> : vector<2x8x8xf32>
    %81 = tpu.matmul %79, %80, %cst_39 {dimension_numbers = #tpu.dot_dimension_numbers<[2], [1], [1], [2], [0, 0, 0, 1, 1, 2], [0], [0]>} : vector<2x8x8xbf16>, vector<2x8x8xbf16>, vector<2x8x8xf32> -> vector<2x8x8xf32>
    "tpu.trace_stop"() : () -> ()
    %82 = vector.extract_strided_slice %34 {offsets = [0, 0, 16], sizes = [2, 8, 8], strides = [1, 1, 1]} : vector<2x8x32xbf16> to vector<2x8x8xbf16>
    %83 = vector.extract_strided_slice %36 {offsets = [0, 0, 16], sizes = [2, 8, 8], strides = [1, 1, 1]} : vector<2x8x32xbf16> to vector<2x8x8xbf16>
    "tpu.trace_start"() <{level = 10 : i32, message = "bqd,bkd->bqk"}> : () -> ()
    %cst_40 = arith.constant dense<0.000000e+00> : vector<2x8x8xf32>
    %84 = tpu.matmul %82, %83, %cst_40 {dimension_numbers = #tpu.dot_dimension_numbers<[2], [2], [1], [1], [0, 0, 0, 1, 1, 1], [0], [0]>} : vector<2x8x8xbf16>, vector<2x8x8xbf16>, vector<2x8x8xf32> -> vector<2x8x8xf32>
    "tpu.trace_stop"() : () -> ()
    %85 = vector.broadcast %45 : vector<1x8x8xf32> to vector<2x8x8xf32>
    %86 = arith.addf %84, %85 : vector<2x8x8xf32>
    %cst_41 = arith.constant dense<0xFF800000> : vector<2x8xf32>
    %87 = vector.multi_reduction <maximumf>, %86, %cst_41 [2] : vector<2x8x8xf32> to vector<2x8xf32>
    %88 = vector.shape_cast %87 : vector<2x8xf32> to vector<2x8x1xf32>
    %89 = vector.broadcast %88 : vector<2x8x1xf32> to vector<2x8x8xf32>
    %90 = arith.subf %86, %89 : vector<2x8x8xf32>
    %91 = math.exp %90 : vector<2x8x8xf32>
    %cst_42 = arith.constant dense<0.000000e+00> : vector<2x8xf32>
    %92 = vector.multi_reduction <add>, %91, %cst_42 [2] : vector<2x8x8xf32> to vector<2x8xf32>
    %93 = vector.shape_cast %92 : vector<2x8xf32> to vector<2x8x1xf32>
    %94 = tpu.reciprocal %93 {approx = true} : vector<2x8x1xf32> -> vector<2x8x1xf32>
    %95 = vector.broadcast %94 : vector<2x8x1xf32> to vector<2x8x8xf32>
    %96 = arith.mulf %91, %95 : vector<2x8x8xf32>
    %97 = arith.truncf %96 : vector<2x8x8xf32> to vector<2x8x8xbf16>
    %98 = vector.extract_strided_slice %38 {offsets = [0, 0, 16], sizes = [2, 8, 8], strides = [1, 1, 1]} : vector<2x8x32xbf16> to vector<2x8x8xbf16>
    "tpu.trace_start"() <{level = 10 : i32, message = "bqk,bkd->bqd"}> : () -> ()
    %cst_43 = arith.constant dense<0.000000e+00> : vector<2x8x8xf32>
    %99 = tpu.matmul %97, %98, %cst_43 {dimension_numbers = #tpu.dot_dimension_numbers<[2], [1], [1], [2], [0, 0, 0, 1, 1, 2], [0], [0]>} : vector<2x8x8xbf16>, vector<2x8x8xbf16>, vector<2x8x8xf32> -> vector<2x8x8xf32>
    "tpu.trace_stop"() : () -> ()
    %100 = vector.extract_strided_slice %34 {offsets = [0, 0, 24], sizes = [2, 8, 8], strides = [1, 1, 1]} : vector<2x8x32xbf16> to vector<2x8x8xbf16>
    %101 = vector.extract_strided_slice %36 {offsets = [0, 0, 24], sizes = [2, 8, 8], strides = [1, 1, 1]} : vector<2x8x32xbf16> to vector<2x8x8xbf16>
    "tpu.trace_start"() <{level = 10 : i32, message = "bqd,bkd->bqk"}> : () -> ()
    %cst_44 = arith.constant dense<0.000000e+00> : vector<2x8x8xf32>
    %102 = tpu.matmul %100, %101, %cst_44 {dimension_numbers = #tpu.dot_dimension_numbers<[2], [2], [1], [1], [0, 0, 0, 1, 1, 1], [0], [0]>} : vector<2x8x8xbf16>, vector<2x8x8xbf16>, vector<2x8x8xf32> -> vector<2x8x8xf32>
    "tpu.trace_stop"() : () -> ()
    %103 = vector.broadcast %45 : vector<1x8x8xf32> to vector<2x8x8xf32>
    %104 = arith.addf %102, %103 : vector<2x8x8xf32>
    %cst_45 = arith.constant dense<0xFF800000> : vector<2x8xf32>
    %105 = vector.multi_reduction <maximumf>, %104, %cst_45 [2] : vector<2x8x8xf32> to vector<2x8xf32>
    %106 = vector.shape_cast %105 : vector<2x8xf32> to vector<2x8x1xf32>
    %107 = vector.broadcast %106 : vector<2x8x1xf32> to vector<2x8x8xf32>
    %108 = arith.subf %104, %107 : vector<2x8x8xf32>
    %109 = math.exp %108 : vector<2x8x8xf32>
    %cst_46 = arith.constant dense<0.000000e+00> : vector<2x8xf32>
    %110 = vector.multi_reduction <add>, %109, %cst_46 [2] : vector<2x8x8xf32> to vector<2x8xf32>
    %111 = vector.shape_cast %110 : vector<2x8xf32> to vector<2x8x1xf32>
    %112 = tpu.reciprocal %111 {approx = true} : vector<2x8x1xf32> -> vector<2x8x1xf32>
    %113 = vector.broadcast %112 : vector<2x8x1xf32> to vector<2x8x8xf32>
    %114 = arith.mulf %109, %113 : vector<2x8x8xf32>
    %115 = arith.truncf %114 : vector<2x8x8xf32> to vector<2x8x8xbf16>
    %116 = vector.extract_strided_slice %38 {offsets = [0, 0, 24], sizes = [2, 8, 8], strides = [1, 1, 1]} : vector<2x8x32xbf16> to vector<2x8x8xbf16>
    "tpu.trace_start"() <{level = 10 : i32, message = "bqk,bkd->bqd"}> : () -> ()
    %cst_47 = arith.constant dense<0.000000e+00> : vector<2x8x8xf32>
    %117 = tpu.matmul %115, %116, %cst_47 {dimension_numbers = #tpu.dot_dimension_numbers<[2], [1], [1], [2], [0, 0, 0, 1, 1, 2], [0], [0]>} : vector<2x8x8xbf16>, vector<2x8x8xbf16>, vector<2x8x8xf32> -> vector<2x8x8xf32>
    "tpu.trace_stop"() : () -> ()
    %118 = tpu.concatenate %63, %81, %99, %117 in 2 : vector<2x8x8xf32>, vector<2x8x8xf32>, vector<2x8x8xf32>, vector<2x8x8xf32> -> vector<2x8x32xf32>
    %119 = vector.shape_cast %118 : vector<2x8x32xf32> to vector<16x32xf32>
    %120 = arith.truncf %119 : vector<16x32xf32> to vector<16x32xbf16>
    %cst_48 = arith.constant dense<0.000000e+00> : vector<16x32xf32>
    %121 = tpu.matmul %120, %28, %cst_48 {dimension_numbers = #tpu.dot_dimension_numbers<[1], [0], [0], [1], [0, 0, 1, 1], [], []>} : vector<16x32xbf16>, vector<32x32xbf16>, vector<16x32xf32> -> vector<16x32xf32>
    %122 = vector.broadcast %30 : vector<1x32xf32> to vector<16x32xf32>
    %123 = arith.addf %121, %122 : vector<16x32xf32>
    %124 = arith.addf %4, %123 : vector<16x32xf32>
    %c0_49 = arith.constant 0 : index
    %c0_50 = arith.constant 0 : index
    %c0_51 = arith.constant 0 : index
    %125 = vector.load %arg12[%c0_49, %c0_50, %c0_51] : memref<1x1x32xf32, #tpu.memory_space<vmem>>, vector<1x1x32xf32>
    %126 = vector.shape_cast %125 : vector<1x1x32xf32> to vector<1x32xf32>
    %c0_52 = arith.constant 0 : index
    %c0_53 = arith.constant 0 : index
    %c0_54 = arith.constant 0 : index
    %127 = vector.load %arg13[%c0_52, %c0_53, %c0_54] : memref<1x1x32xf32, #tpu.memory_space<vmem>>, vector<1x1x32xf32>
    %128 = vector.shape_cast %127 : vector<1x1x32xf32> to vector<1x32xf32>
    %cst_55 = arith.constant dense<0.000000e+00> : vector<16xf32>
    %129 = vector.multi_reduction <add>, %124, %cst_55 [1] : vector<16x32xf32> to vector<16xf32>
    %130 = vector.shape_cast %129 : vector<16xf32> to vector<16x1xf32>
    %cst_56 = arith.constant 3.200000e+01 : f32
    %131 = vector.broadcast %cst_56 : f32 to vector<16x1xf32>
    %132 = arith.divf %130, %131 : vector<16x1xf32>
    %133 = vector.broadcast %132 : vector<16x1xf32> to vector<16x32xf32>
    %134 = arith.subf %124, %133 : vector<16x32xf32>
    %135 = arith.mulf %134, %134 : vector<16x32xf32>
    %cst_57 = arith.constant dense<0.000000e+00> : vector<16xf32>
    %136 = vector.multi_reduction <add>, %135, %cst_57 [1] : vector<16x32xf32> to vector<16xf32>
    %137 = vector.shape_cast %136 : vector<16xf32> to vector<16x1xf32>
    %cst_58 = arith.constant 3.200000e+01 : f32
    %138 = vector.broadcast %cst_58 : f32 to vector<16x1xf32>
    %139 = arith.divf %137, %138 : vector<16x1xf32>
    %140 = vector.broadcast %132 : vector<16x1xf32> to vector<16x32xf32>
    %141 = arith.subf %124, %140 : vector<16x32xf32>
    %cst_59 = arith.constant 9.99999974E-6 : f32
    %142 = vector.broadcast %cst_59 : f32 to vector<16x1xf32>
    %143 = arith.addf %139, %142 : vector<16x1xf32>
    %144 = math.rsqrt %143 : vector<16x1xf32>
    %145 = vector.broadcast %144 : vector<16x1xf32> to vector<16x32xf32>
    %146 = arith.mulf %141, %145 : vector<16x32xf32>
    %147 = vector.broadcast %126 : vector<1x32xf32> to vector<16x32xf32>
    %148 = arith.mulf %146, %147 : vector<16x32xf32>
    %149 = vector.broadcast %128 : vector<1x32xf32> to vector<16x32xf32>
    %150 = arith.addf %148, %149 : vector<16x32xf32>
    %151 = arith.truncf %150 : vector<16x32xf32> to vector<16x32xbf16>
    %c0_60 = arith.constant 0 : index
    %c0_61 = arith.constant 0 : index
    %c0_62 = arith.constant 0 : index
    %152 = vector.load %arg3[%c0_60, %c0_61, %c0_62] : memref<2x8x32xf32, #tpu.memory_space<vmem>>, vector<2x8x32xf32>
    %153 = vector.shape_cast %152 : vector<2x8x32xf32> to vector<16x32xf32>
    %154 = arith.truncf %153 : vector<16x32xf32> to vector<16x32xbf16>
    %c0_63 = arith.constant 0 : index
    %c0_64 = arith.constant 0 : index
    %c0_65 = arith.constant 0 : index
    %155 = vector.load %arg14[%c0_63, %c0_64, %c0_65] : memref<1x32x32xbf16, #tpu.memory_space<vmem>>, vector<1x32x32xbf16>
    %156 = vector.shape_cast %155 : vector<1x32x32xbf16> to vector<32x32xbf16>
    %cst_66 = arith.constant dense<0.000000e+00> : vector<16x32xf32>
    %157 = tpu.matmul %151, %156, %cst_66 {dimension_numbers = #tpu.dot_dimension_numbers<[1], [0], [0], [1], [0, 0, 1, 1], [], []>} : vector<16x32xbf16>, vector<32x32xbf16>, vector<16x32xf32> -> vector<16x32xf32>
    %c0_67 = arith.constant 0 : index
    %c0_68 = arith.constant 0 : index
    %c0_69 = arith.constant 0 : index
    %158 = vector.load %arg15[%c0_67, %c0_68, %c0_69] : memref<1x1x32xf32, #tpu.memory_space<vmem>>, vector<1x1x32xf32>
    %159 = vector.shape_cast %158 : vector<1x1x32xf32> to vector<1x32xf32>
    %160 = vector.broadcast %159 : vector<1x32xf32> to vector<16x32xf32>
    %161 = arith.addf %157, %160 : vector<16x32xf32>
    %c0_70 = arith.constant 0 : index
    %c0_71 = arith.constant 0 : index
    %c0_72 = arith.constant 0 : index
    %162 = vector.load %arg16[%c0_70, %c0_71, %c0_72] : memref<1x32x32xbf16, #tpu.memory_space<vmem>>, vector<1x32x32xbf16>
    %163 = vector.shape_cast %162 : vector<1x32x32xbf16> to vector<32x32xbf16>
    %cst_73 = arith.constant dense<0.000000e+00> : vector<16x32xf32>
    %164 = tpu.matmul %154, %163, %cst_73 {dimension_numbers = #tpu.dot_dimension_numbers<[1], [0], [0], [1], [0, 0, 1, 1], [], []>} : vector<16x32xbf16>, vector<32x32xbf16>, vector<16x32xf32> -> vector<16x32xf32>
    %c0_74 = arith.constant 0 : index
    %c0_75 = arith.constant 0 : index
    %c0_76 = arith.constant 0 : index
    %165 = vector.load %arg17[%c0_74, %c0_75, %c0_76] : memref<1x1x32xf32, #tpu.memory_space<vmem>>, vector<1x1x32xf32>
    %166 = vector.shape_cast %165 : vector<1x1x32xf32> to vector<1x32xf32>
    %167 = vector.broadcast %166 : vector<1x32xf32> to vector<16x32xf32>
    %168 = arith.addf %164, %167 : vector<16x32xf32>
    %c0_77 = arith.constant 0 : index
    %c0_78 = arith.constant 0 : index
    %c0_79 = arith.constant 0 : index
    %169 = vector.load %arg18[%c0_77, %c0_78, %c0_79] : memref<1x32x32xbf16, #tpu.memory_space<vmem>>, vector<1x32x32xbf16>
    %170 = vector.shape_cast %169 : vector<1x32x32xbf16> to vector<32x32xbf16>
    %cst_80 = arith.constant dense<0.000000e+00> : vector<16x32xf32>
    %171 = tpu.matmul %154, %170, %cst_80 {dimension_numbers = #tpu.dot_dimension_numbers<[1], [0], [0], [1], [0, 0, 1, 1], [], []>} : vector<16x32xbf16>, vector<32x32xbf16>, vector<16x32xf32> -> vector<16x32xf32>
    %c0_81 = arith.constant 0 : index
    %c0_82 = arith.constant 0 : index
    %c0_83 = arith.constant 0 : index
    %172 = vector.load %arg19[%c0_81, %c0_82, %c0_83] : memref<1x1x32xf32, #tpu.memory_space<vmem>>, vector<1x1x32xf32>
    %173 = vector.shape_cast %172 : vector<1x1x32xf32> to vector<1x32xf32>
    %174 = vector.broadcast %173 : vector<1x32xf32> to vector<16x32xf32>
    %175 = arith.addf %171, %174 : vector<16x32xf32>
    %c0_84 = arith.constant 0 : index
    %c0_85 = arith.constant 0 : index
    %c0_86 = arith.constant 0 : index
    %176 = vector.load %arg20[%c0_84, %c0_85, %c0_86] : memref<1x32x32xbf16, #tpu.memory_space<vmem>>, vector<1x32x32xbf16>
    %177 = vector.shape_cast %176 : vector<1x32x32xbf16> to vector<32x32xbf16>
    %c0_87 = arith.constant 0 : index
    %c0_88 = arith.constant 0 : index
    %c0_89 = arith.constant 0 : index
    %178 = vector.load %arg21[%c0_87, %c0_88, %c0_89] : memref<1x1x32xf32, #tpu.memory_space<vmem>>, vector<1x1x32xf32>
    %179 = vector.shape_cast %178 : vector<1x1x32xf32> to vector<1x32xf32>
    %cst_90 = arith.constant 0.353553385 : f32
    %180 = vector.broadcast %cst_90 : f32 to vector<16x32xf32>
    %181 = arith.mulf %161, %180 : vector<16x32xf32>
    %182 = vector.shape_cast %181 : vector<16x32xf32> to vector<2x8x32xf32>
    %183 = arith.truncf %182 : vector<2x8x32xf32> to vector<2x8x32xbf16>
    %184 = vector.shape_cast %168 : vector<16x32xf32> to vector<2x8x32xf32>
    %185 = arith.truncf %184 : vector<2x8x32xf32> to vector<2x8x32xbf16>
    %186 = vector.shape_cast %175 : vector<16x32xf32> to vector<2x8x32xf32>
    %187 = arith.truncf %186 : vector<2x8x32xf32> to vector<2x8x32xbf16>
    %188 = vector.extract_strided_slice %183 {offsets = [0, 0, 0], sizes = [2, 8, 8], strides = [1, 1, 1]} : vector<2x8x32xbf16> to vector<2x8x8xbf16>
    %189 = vector.extract_strided_slice %185 {offsets = [0, 0, 0], sizes = [2, 8, 8], strides = [1, 1, 1]} : vector<2x8x32xbf16> to vector<2x8x8xbf16>
    "tpu.trace_start"() <{level = 10 : i32, message = "bqd,bkd->bqk"}> : () -> ()
    %cst_91 = arith.constant dense<0.000000e+00> : vector<2x8x8xf32>
    %190 = tpu.matmul %188, %189, %cst_91 {dimension_numbers = #tpu.dot_dimension_numbers<[2], [2], [1], [1], [0, 0, 0, 1, 1, 1], [0], [0]>} : vector<2x8x8xbf16>, vector<2x8x8xbf16>, vector<2x8x8xf32> -> vector<2x8x8xf32>
    "tpu.trace_stop"() : () -> ()
    %cst_92 = arith.constant dense<0xFF800000> : vector<2x8xf32>
    %191 = vector.multi_reduction <maximumf>, %190, %cst_92 [2] : vector<2x8x8xf32> to vector<2x8xf32>
    %192 = vector.shape_cast %191 : vector<2x8xf32> to vector<2x8x1xf32>
    %193 = vector.broadcast %192 : vector<2x8x1xf32> to vector<2x8x8xf32>
    %194 = arith.subf %190, %193 : vector<2x8x8xf32>
    %195 = math.exp %194 : vector<2x8x8xf32>
    %cst_93 = arith.constant dense<0.000000e+00> : vector<2x8xf32>
    %196 = vector.multi_reduction <add>, %195, %cst_93 [2] : vector<2x8x8xf32> to vector<2x8xf32>
    %197 = vector.shape_cast %196 : vector<2x8xf32> to vector<2x8x1xf32>
    %198 = tpu.reciprocal %197 {approx = true} : vector<2x8x1xf32> -> vector<2x8x1xf32>
    %199 = vector.broadcast %198 : vector<2x8x1xf32> to vector<2x8x8xf32>
    %200 = arith.mulf %195, %199 : vector<2x8x8xf32>
    %201 = arith.truncf %200 : vector<2x8x8xf32> to vector<2x8x8xbf16>
    %202 = vector.extract_strided_slice %187 {offsets = [0, 0, 0], sizes = [2, 8, 8], strides = [1, 1, 1]} : vector<2x8x32xbf16> to vector<2x8x8xbf16>
    "tpu.trace_start"() <{level = 10 : i32, message = "bqk,bkd->bqd"}> : () -> ()
    %cst_94 = arith.constant dense<0.000000e+00> : vector<2x8x8xf32>
    %203 = tpu.matmul %201, %202, %cst_94 {dimension_numbers = #tpu.dot_dimension_numbers<[2], [1], [1], [2], [0, 0, 0, 1, 1, 2], [0], [0]>} : vector<2x8x8xbf16>, vector<2x8x8xbf16>, vector<2x8x8xf32> -> vector<2x8x8xf32>
    "tpu.trace_stop"() : () -> ()
    %204 = vector.extract_strided_slice %183 {offsets = [0, 0, 8], sizes = [2, 8, 8], strides = [1, 1, 1]} : vector<2x8x32xbf16> to vector<2x8x8xbf16>
    %205 = vector.extract_strided_slice %185 {offsets = [0, 0, 8], sizes = [2, 8, 8], strides = [1, 1, 1]} : vector<2x8x32xbf16> to vector<2x8x8xbf16>
    "tpu.trace_start"() <{level = 10 : i32, message = "bqd,bkd->bqk"}> : () -> ()
    %cst_95 = arith.constant dense<0.000000e+00> : vector<2x8x8xf32>
    %206 = tpu.matmul %204, %205, %cst_95 {dimension_numbers = #tpu.dot_dimension_numbers<[2], [2], [1], [1], [0, 0, 0, 1, 1, 1], [0], [0]>} : vector<2x8x8xbf16>, vector<2x8x8xbf16>, vector<2x8x8xf32> -> vector<2x8x8xf32>
    "tpu.trace_stop"() : () -> ()
    %cst_96 = arith.constant dense<0xFF800000> : vector<2x8xf32>
    %207 = vector.multi_reduction <maximumf>, %206, %cst_96 [2] : vector<2x8x8xf32> to vector<2x8xf32>
    %208 = vector.shape_cast %207 : vector<2x8xf32> to vector<2x8x1xf32>
    %209 = vector.broadcast %208 : vector<2x8x1xf32> to vector<2x8x8xf32>
    %210 = arith.subf %206, %209 : vector<2x8x8xf32>
    %211 = math.exp %210 : vector<2x8x8xf32>
    %cst_97 = arith.constant dense<0.000000e+00> : vector<2x8xf32>
    %212 = vector.multi_reduction <add>, %211, %cst_97 [2] : vector<2x8x8xf32> to vector<2x8xf32>
    %213 = vector.shape_cast %212 : vector<2x8xf32> to vector<2x8x1xf32>
    %214 = tpu.reciprocal %213 {approx = true} : vector<2x8x1xf32> -> vector<2x8x1xf32>
    %215 = vector.broadcast %214 : vector<2x8x1xf32> to vector<2x8x8xf32>
    %216 = arith.mulf %211, %215 : vector<2x8x8xf32>
    %217 = arith.truncf %216 : vector<2x8x8xf32> to vector<2x8x8xbf16>
    %218 = vector.extract_strided_slice %187 {offsets = [0, 0, 8], sizes = [2, 8, 8], strides = [1, 1, 1]} : vector<2x8x32xbf16> to vector<2x8x8xbf16>
    "tpu.trace_start"() <{level = 10 : i32, message = "bqk,bkd->bqd"}> : () -> ()
    %cst_98 = arith.constant dense<0.000000e+00> : vector<2x8x8xf32>
    %219 = tpu.matmul %217, %218, %cst_98 {dimension_numbers = #tpu.dot_dimension_numbers<[2], [1], [1], [2], [0, 0, 0, 1, 1, 2], [0], [0]>} : vector<2x8x8xbf16>, vector<2x8x8xbf16>, vector<2x8x8xf32> -> vector<2x8x8xf32>
    "tpu.trace_stop"() : () -> ()
    %220 = vector.extract_strided_slice %183 {offsets = [0, 0, 16], sizes = [2, 8, 8], strides = [1, 1, 1]} : vector<2x8x32xbf16> to vector<2x8x8xbf16>
    %221 = vector.extract_strided_slice %185 {offsets = [0, 0, 16], sizes = [2, 8, 8], strides = [1, 1, 1]} : vector<2x8x32xbf16> to vector<2x8x8xbf16>
    "tpu.trace_start"() <{level = 10 : i32, message = "bqd,bkd->bqk"}> : () -> ()
    %cst_99 = arith.constant dense<0.000000e+00> : vector<2x8x8xf32>
    %222 = tpu.matmul %220, %221, %cst_99 {dimension_numbers = #tpu.dot_dimension_numbers<[2], [2], [1], [1], [0, 0, 0, 1, 1, 1], [0], [0]>} : vector<2x8x8xbf16>, vector<2x8x8xbf16>, vector<2x8x8xf32> -> vector<2x8x8xf32>
    "tpu.trace_stop"() : () -> ()
    %cst_100 = arith.constant dense<0xFF800000> : vector<2x8xf32>
    %223 = vector.multi_reduction <maximumf>, %222, %cst_100 [2] : vector<2x8x8xf32> to vector<2x8xf32>
    %224 = vector.shape_cast %223 : vector<2x8xf32> to vector<2x8x1xf32>
    %225 = vector.broadcast %224 : vector<2x8x1xf32> to vector<2x8x8xf32>
    %226 = arith.subf %222, %225 : vector<2x8x8xf32>
    %227 = math.exp %226 : vector<2x8x8xf32>
    %cst_101 = arith.constant dense<0.000000e+00> : vector<2x8xf32>
    %228 = vector.multi_reduction <add>, %227, %cst_101 [2] : vector<2x8x8xf32> to vector<2x8xf32>
    %229 = vector.shape_cast %228 : vector<2x8xf32> to vector<2x8x1xf32>
    %230 = tpu.reciprocal %229 {approx = true} : vector<2x8x1xf32> -> vector<2x8x1xf32>
    %231 = vector.broadcast %230 : vector<2x8x1xf32> to vector<2x8x8xf32>
    %232 = arith.mulf %227, %231 : vector<2x8x8xf32>
    %233 = arith.truncf %232 : vector<2x8x8xf32> to vector<2x8x8xbf16>
    %234 = vector.extract_strided_slice %187 {offsets = [0, 0, 16], sizes = [2, 8, 8], strides = [1, 1, 1]} : vector<2x8x32xbf16> to vector<2x8x8xbf16>
    "tpu.trace_start"() <{level = 10 : i32, message = "bqk,bkd->bqd"}> : () -> ()
    %cst_102 = arith.constant dense<0.000000e+00> : vector<2x8x8xf32>
    %235 = tpu.matmul %233, %234, %cst_102 {dimension_numbers = #tpu.dot_dimension_numbers<[2], [1], [1], [2], [0, 0, 0, 1, 1, 2], [0], [0]>} : vector<2x8x8xbf16>, vector<2x8x8xbf16>, vector<2x8x8xf32> -> vector<2x8x8xf32>
    "tpu.trace_stop"() : () -> ()
    %236 = vector.extract_strided_slice %183 {offsets = [0, 0, 24], sizes = [2, 8, 8], strides = [1, 1, 1]} : vector<2x8x32xbf16> to vector<2x8x8xbf16>
    %237 = vector.extract_strided_slice %185 {offsets = [0, 0, 24], sizes = [2, 8, 8], strides = [1, 1, 1]} : vector<2x8x32xbf16> to vector<2x8x8xbf16>
    "tpu.trace_start"() <{level = 10 : i32, message = "bqd,bkd->bqk"}> : () -> ()
    %cst_103 = arith.constant dense<0.000000e+00> : vector<2x8x8xf32>
    %238 = tpu.matmul %236, %237, %cst_103 {dimension_numbers = #tpu.dot_dimension_numbers<[2], [2], [1], [1], [0, 0, 0, 1, 1, 1], [0], [0]>} : vector<2x8x8xbf16>, vector<2x8x8xbf16>, vector<2x8x8xf32> -> vector<2x8x8xf32>
    "tpu.trace_stop"() : () -> ()
    %cst_104 = arith.constant dense<0xFF800000> : vector<2x8xf32>
    %239 = vector.multi_reduction <maximumf>, %238, %cst_104 [2] : vector<2x8x8xf32> to vector<2x8xf32>
    %240 = vector.shape_cast %239 : vector<2x8xf32> to vector<2x8x1xf32>
    %241 = vector.broadcast %240 : vector<2x8x1xf32> to vector<2x8x8xf32>
    %242 = arith.subf %238, %241 : vector<2x8x8xf32>
    %243 = math.exp %242 : vector<2x8x8xf32>
    %cst_105 = arith.constant dense<0.000000e+00> : vector<2x8xf32>
    %244 = vector.multi_reduction <add>, %243, %cst_105 [2] : vector<2x8x8xf32> to vector<2x8xf32>
    %245 = vector.shape_cast %244 : vector<2x8xf32> to vector<2x8x1xf32>
    %246 = tpu.reciprocal %245 {approx = true} : vector<2x8x1xf32> -> vector<2x8x1xf32>
    %247 = vector.broadcast %246 : vector<2x8x1xf32> to vector<2x8x8xf32>
    %248 = arith.mulf %243, %247 : vector<2x8x8xf32>
    %249 = arith.truncf %248 : vector<2x8x8xf32> to vector<2x8x8xbf16>
    %250 = vector.extract_strided_slice %187 {offsets = [0, 0, 24], sizes = [2, 8, 8], strides = [1, 1, 1]} : vector<2x8x32xbf16> to vector<2x8x8xbf16>
    "tpu.trace_start"() <{level = 10 : i32, message = "bqk,bkd->bqd"}> : () -> ()
    %cst_106 = arith.constant dense<0.000000e+00> : vector<2x8x8xf32>
    %251 = tpu.matmul %249, %250, %cst_106 {dimension_numbers = #tpu.dot_dimension_numbers<[2], [1], [1], [2], [0, 0, 0, 1, 1, 2], [0], [0]>} : vector<2x8x8xbf16>, vector<2x8x8xbf16>, vector<2x8x8xf32> -> vector<2x8x8xf32>
    "tpu.trace_stop"() : () -> ()
    %252 = tpu.concatenate %203, %219, %235, %251 in 2 : vector<2x8x8xf32>, vector<2x8x8xf32>, vector<2x8x8xf32>, vector<2x8x8xf32> -> vector<2x8x32xf32>
    %253 = vector.shape_cast %252 : vector<2x8x32xf32> to vector<16x32xf32>
    %254 = arith.truncf %253 : vector<16x32xf32> to vector<16x32xbf16>
    %cst_107 = arith.constant dense<0.000000e+00> : vector<16x32xf32>
    %255 = tpu.matmul %254, %177, %cst_107 {dimension_numbers = #tpu.dot_dimension_numbers<[1], [0], [0], [1], [0, 0, 1, 1], [], []>} : vector<16x32xbf16>, vector<32x32xbf16>, vector<16x32xf32> -> vector<16x32xf32>
    %256 = vector.broadcast %179 : vector<1x32xf32> to vector<16x32xf32>
    %257 = arith.addf %255, %256 : vector<16x32xf32>
    %258 = arith.addf %150, %257 : vector<16x32xf32>
    %c0_108 = arith.constant 0 : index
    %c0_109 = arith.constant 0 : index
    %c0_110 = arith.constant 0 : index
    %259 = vector.load %arg22[%c0_108, %c0_109, %c0_110] : memref<1x1x32xf32, #tpu.memory_space<vmem>>, vector<1x1x32xf32>
    %260 = vector.shape_cast %259 : vector<1x1x32xf32> to vector<1x32xf32>
    %c0_111 = arith.constant 0 : index
    %c0_112 = arith.constant 0 : index
    %c0_113 = arith.constant 0 : index
    %261 = vector.load %arg23[%c0_111, %c0_112, %c0_113] : memref<1x1x32xf32, #tpu.memory_space<vmem>>, vector<1x1x32xf32>
    %262 = vector.shape_cast %261 : vector<1x1x32xf32> to vector<1x32xf32>
    %cst_114 = arith.constant dense<0.000000e+00> : vector<16xf32>
    %263 = vector.multi_reduction <add>, %258, %cst_114 [1] : vector<16x32xf32> to vector<16xf32>
    %264 = vector.shape_cast %263 : vector<16xf32> to vector<16x1xf32>
    %cst_115 = arith.constant 3.200000e+01 : f32
    %265 = vector.broadcast %cst_115 : f32 to vector<16x1xf32>
    %266 = arith.divf %264, %265 : vector<16x1xf32>
    %267 = vector.broadcast %266 : vector<16x1xf32> to vector<16x32xf32>
    %268 = arith.subf %258, %267 : vector<16x32xf32>
    %269 = arith.mulf %268, %268 : vector<16x32xf32>
    %cst_116 = arith.constant dense<0.000000e+00> : vector<16xf32>
    %270 = vector.multi_reduction <add>, %269, %cst_116 [1] : vector<16x32xf32> to vector<16xf32>
    %271 = vector.shape_cast %270 : vector<16xf32> to vector<16x1xf32>
    %cst_117 = arith.constant 3.200000e+01 : f32
    %272 = vector.broadcast %cst_117 : f32 to vector<16x1xf32>
    %273 = arith.divf %271, %272 : vector<16x1xf32>
    %274 = vector.broadcast %266 : vector<16x1xf32> to vector<16x32xf32>
    %275 = arith.subf %258, %274 : vector<16x32xf32>
    %cst_118 = arith.constant 9.99999974E-6 : f32
    %276 = vector.broadcast %cst_118 : f32 to vector<16x1xf32>
    %277 = arith.addf %273, %276 : vector<16x1xf32>
    %278 = math.rsqrt %277 : vector<16x1xf32>
    %279 = vector.broadcast %278 : vector<16x1xf32> to vector<16x32xf32>
    %280 = arith.mulf %275, %279 : vector<16x32xf32>
    %281 = vector.broadcast %260 : vector<1x32xf32> to vector<16x32xf32>
    %282 = arith.mulf %280, %281 : vector<16x32xf32>
    %283 = vector.broadcast %262 : vector<1x32xf32> to vector<16x32xf32>
    %284 = arith.addf %282, %283 : vector<16x32xf32>
    %285 = arith.truncf %284 : vector<16x32xf32> to vector<16x32xbf16>
    %c0_119 = arith.constant 0 : index
    %c0_120 = arith.constant 0 : index
    %c0_121 = arith.constant 0 : index
    %286 = vector.load %arg24[%c0_119, %c0_120, %c0_121] : memref<1x32x64xbf16, #tpu.memory_space<vmem>>, vector<1x32x64xbf16>
    %287 = vector.shape_cast %286 : vector<1x32x64xbf16> to vector<32x64xbf16>
    %cst_122 = arith.constant dense<0.000000e+00> : vector<16x64xf32>
    %288 = tpu.matmul %285, %287, %cst_122 {dimension_numbers = #tpu.dot_dimension_numbers<[1], [0], [0], [1], [0, 0, 1, 1], [], []>} : vector<16x32xbf16>, vector<32x64xbf16>, vector<16x64xf32> -> vector<16x64xf32>
    %c0_123 = arith.constant 0 : index
    %c0_124 = arith.constant 0 : index
    %c0_125 = arith.constant 0 : index
    %289 = vector.load %arg25[%c0_123, %c0_124, %c0_125] : memref<1x1x64xf32, #tpu.memory_space<vmem>>, vector<1x1x64xf32>
    %290 = vector.shape_cast %289 : vector<1x1x64xf32> to vector<1x64xf32>
    %291 = vector.broadcast %290 : vector<1x64xf32> to vector<16x64xf32>
    %292 = arith.addf %288, %291 : vector<16x64xf32>
    %cst_126 = arith.constant 0.000000e+00 : f32
    %293 = vector.broadcast %cst_126 : f32 to vector<16x64xf32>
    %294 = arith.maximumf %292, %293 : vector<16x64xf32>
    %295 = arith.truncf %294 : vector<16x64xf32> to vector<16x64xbf16>
    %c0_127 = arith.constant 0 : index
    %c0_128 = arith.constant 0 : index
    %c0_129 = arith.constant 0 : index
    %296 = vector.load %arg26[%c0_127, %c0_128, %c0_129] : memref<1x64x32xbf16, #tpu.memory_space<vmem>>, vector<1x64x32xbf16>
    %297 = vector.shape_cast %296 : vector<1x64x32xbf16> to vector<64x32xbf16>
    %cst_130 = arith.constant dense<0.000000e+00> : vector<16x32xf32>
    %298 = tpu.matmul %295, %297, %cst_130 {dimension_numbers = #tpu.dot_dimension_numbers<[1], [0], [0], [1], [0, 0, 1, 1], [], []>} : vector<16x64xbf16>, vector<64x32xbf16>, vector<16x32xf32> -> vector<16x32xf32>
    %c0_131 = arith.constant 0 : index
    %c0_132 = arith.constant 0 : index
    %c0_133 = arith.constant 0 : index
    %299 = vector.load %arg27[%c0_131, %c0_132, %c0_133] : memref<1x1x32xf32, #tpu.memory_space<vmem>>, vector<1x1x32xf32>
    %300 = vector.shape_cast %299 : vector<1x1x32xf32> to vector<1x32xf32>
    %301 = vector.broadcast %300 : vector<1x32xf32> to vector<16x32xf32>
    %302 = arith.addf %298, %301 : vector<16x32xf32>
    %303 = arith.addf %284, %302 : vector<16x32xf32>
    %c0_134 = arith.constant 0 : index
    %c0_135 = arith.constant 0 : index
    %c0_136 = arith.constant 0 : index
    %304 = vector.load %arg28[%c0_134, %c0_135, %c0_136] : memref<1x1x32xf32, #tpu.memory_space<vmem>>, vector<1x1x32xf32>
    %305 = vector.shape_cast %304 : vector<1x1x32xf32> to vector<1x32xf32>
    %c0_137 = arith.constant 0 : index
    %c0_138 = arith.constant 0 : index
    %c0_139 = arith.constant 0 : index
    %306 = vector.load %arg29[%c0_137, %c0_138, %c0_139] : memref<1x1x32xf32, #tpu.memory_space<vmem>>, vector<1x1x32xf32>
    %307 = vector.shape_cast %306 : vector<1x1x32xf32> to vector<1x32xf32>
    %cst_140 = arith.constant dense<0.000000e+00> : vector<16xf32>
    %308 = vector.multi_reduction <add>, %303, %cst_140 [1] : vector<16x32xf32> to vector<16xf32>
    %309 = vector.shape_cast %308 : vector<16xf32> to vector<16x1xf32>
    %cst_141 = arith.constant 3.200000e+01 : f32
    %310 = vector.broadcast %cst_141 : f32 to vector<16x1xf32>
    %311 = arith.divf %309, %310 : vector<16x1xf32>
    %312 = vector.broadcast %311 : vector<16x1xf32> to vector<16x32xf32>
    %313 = arith.subf %303, %312 : vector<16x32xf32>
    %314 = arith.mulf %313, %313 : vector<16x32xf32>
    %cst_142 = arith.constant dense<0.000000e+00> : vector<16xf32>
    %315 = vector.multi_reduction <add>, %314, %cst_142 [1] : vector<16x32xf32> to vector<16xf32>
    %316 = vector.shape_cast %315 : vector<16xf32> to vector<16x1xf32>
    %cst_143 = arith.constant 3.200000e+01 : f32
    %317 = vector.broadcast %cst_143 : f32 to vector<16x1xf32>
    %318 = arith.divf %316, %317 : vector<16x1xf32>
    %319 = vector.broadcast %311 : vector<16x1xf32> to vector<16x32xf32>
    %320 = arith.subf %303, %319 : vector<16x32xf32>
    %cst_144 = arith.constant 9.99999974E-6 : f32
    %321 = vector.broadcast %cst_144 : f32 to vector<16x1xf32>
    %322 = arith.addf %318, %321 : vector<16x1xf32>
    %323 = math.rsqrt %322 : vector<16x1xf32>
    %324 = vector.broadcast %323 : vector<16x1xf32> to vector<16x32xf32>
    %325 = arith.mulf %320, %324 : vector<16x32xf32>
    %326 = vector.broadcast %305 : vector<1x32xf32> to vector<16x32xf32>
    %327 = arith.mulf %325, %326 : vector<16x32xf32>
    %328 = vector.broadcast %307 : vector<1x32xf32> to vector<16x32xf32>
    %329 = arith.addf %327, %328 : vector<16x32xf32>
    %330 = vector.shape_cast %329 : vector<16x32xf32> to vector<2x8x32xf32>
    %c0_145 = arith.constant 0 : index
    %c0_146 = arith.constant 0 : index
    %c0_147 = arith.constant 0 : index
    %331 = vector.load %arg30[%c0_145, %c0_146, %c0_147] : memref<2x8x32xf32, #tpu.memory_space<vmem>>, vector<2x8x32xf32>
    tpu.vector_store %arg30[%c0_145, %c0_146, %c0_147], %330 {strides = array<i32>} : memref<2x8x32xf32, #tpu.memory_space<vmem>>, vector<2x8x32xf32>,
    return
  }
  func.func @transform_0(%arg0: i32, %arg1: i32) -> (i32, i32, i32) {
    %c0_i32 = arith.constant 0 : i32
    %c0_i32_0 = arith.constant 0 : i32
    %c0_i32_1 = arith.constant 0 : i32
    return %arg0, %c0_i32, %c0_i32_0 : i32, i32, i32
  }
  func.func @transform_1(%arg0: i32, %arg1: i32) -> (i32, i32, i32) {
    %c0_i32 = arith.constant 0 : i32
    %c0_i32_0 = arith.constant 0 : i32
    %c0_i32_1 = arith.constant 0 : i32
    return %arg0, %c0_i32, %c0_i32_0 : i32, i32, i32
  }
  func.func @transform_2(%arg0: i32, %arg1: i32) -> (i32, i32, i32) {
    %c0_i32 = arith.constant 0 : i32
    %c0_i32_0 = arith.constant 0 : i32
    %c0_i32_1 = arith.constant 0 : i32
    return %arg1, %c0_i32, %c0_i32_0 : i32, i32, i32
  }
  func.func @transform_3(%arg0: i32, %arg1: i32) -> (i32, i32, i32) {
    %c0_i32 = arith.constant 0 : i32
    %c0_i32_0 = arith.constant 0 : i32
    %c0_i32_1 = arith.constant 0 : i32
    return %arg1, %c0_i32, %c0_i32_0 : i32, i32, i32
  }
  func.func @transform_4(%arg0: i32, %arg1: i32) -> (i32, i32, i32) {
    %c0_i32 = arith.constant 0 : i32
    %c0_i32_0 = arith.constant 0 : i32
    %c0_i32_1 = arith.constant 0 : i32
    return %arg1, %c0_i32, %c0_i32_0 : i32, i32, i32
  }
  func.func @transform_5(%arg0: i32, %arg1: i32) -> (i32, i32, i32) {
    %c0_i32 = arith.constant 0 : i32
    %c0_i32_0 = arith.constant 0 : i32
    %c0_i32_1 = arith.constant 0 : i32
    return %arg1, %c0_i32, %c0_i32_0 : i32, i32, i32
  }
  func.func @transform_6(%arg0: i32, %arg1: i32) -> (i32, i32, i32) {
    %c0_i32 = arith.constant 0 : i32
    %c0_i32_0 = arith.constant 0 : i32
    %c0_i32_1 = arith.constant 0 : i32
    return %arg1, %c0_i32, %c0_i32_0 : i32, i32, i32
  }
  func.func @transform_7(%arg0: i32, %arg1: i32) -> (i32, i32, i32) {
    %c0_i32 = arith.constant 0 : i32
    %c0_i32_0 = arith.constant 0 : i32
    %c0_i32_1 = arith.constant 0 : i32
    return %arg1, %c0_i32, %c0_i32_0 : i32, i32, i32
  }
  func.func @transform_8(%arg0: i32, %arg1: i32) -> (i32, i32, i32) {
    %c0_i32 = arith.constant 0 : i32
    %c0_i32_0 = arith.constant 0 : i32
    %c0_i32_1 = arith.constant 0 : i32
    return %arg1, %c0_i32, %c0_i32_0 : i32, i32, i32
  }
  func.func @transform_9(%arg0: i32, %arg1: i32) -> (i32, i32, i32) {
    %c0_i32 = arith.constant 0 : i32
    %c0_i32_0 = arith.constant 0 : i32
    %c0_i32_1 = arith.constant 0 : i32
    return %arg1, %c0_i32, %c0_i32_0 : i32, i32, i32
  }
  func.func @transform_10(%arg0: i32, %arg1: i32) -> (i32, i32, i32) {
    %c0_i32 = arith.constant 0 : i32
    %c0_i32_0 = arith.constant 0 : i32
    %c0_i32_1 = arith.constant 0 : i32
    return %arg1, %c0_i32, %c0_i32_0 : i32, i32, i32
  }
  func.func @transform_11(%arg0: i32, %arg1: i32) -> (i32, i32, i32) {
    %c0_i32 = arith.constant 0 : i32
    %c0_i32_0 = arith.constant 0 : i32
    %c0_i32_1 = arith.constant 0 : i32
    return %arg1, %c0_i32, %c0_i32_0 : i32, i32, i32
  }
  func.func @transform_12(%arg0: i32, %arg1: i32) -> (i32, i32, i32) {
    %c0_i32 = arith.constant 0 : i32
    %c0_i32_0 = arith.constant 0 : i32
    %c0_i32_1 = arith.constant 0 : i32
    return %arg1, %c0_i32, %c0_i32_0 : i32, i32, i32
  }
  func.func @transform_13(%arg0: i32, %arg1: i32) -> (i32, i32, i32) {
    %c0_i32 = arith.constant 0 : i32
    %c0_i32_0 = arith.constant 0 : i32
    %c0_i32_1 = arith.constant 0 : i32
    return %arg1, %c0_i32, %c0_i32_0 : i32, i32, i32
  }
  func.func @transform_14(%arg0: i32, %arg1: i32) -> (i32, i32, i32) {
    %c0_i32 = arith.constant 0 : i32
    %c0_i32_0 = arith.constant 0 : i32
    %c0_i32_1 = arith.constant 0 : i32
    return %arg1, %c0_i32, %c0_i32_0 : i32, i32, i32
  }
  func.func @transform_15(%arg0: i32, %arg1: i32) -> (i32, i32, i32) {
    %c0_i32 = arith.constant 0 : i32
    %c0_i32_0 = arith.constant 0 : i32
    %c0_i32_1 = arith.constant 0 : i32
    return %arg1, %c0_i32, %c0_i32_0 : i32, i32, i32
  }
  func.func @transform_16(%arg0: i32, %arg1: i32) -> (i32, i32, i32) {
    %c0_i32 = arith.constant 0 : i32
    %c0_i32_0 = arith.constant 0 : i32
    %c0_i32_1 = arith.constant 0 : i32
    return %arg1, %c0_i32, %c0_i32_0 : i32, i32, i32
  }
  func.func @transform_17(%arg0: i32, %arg1: i32) -> (i32, i32, i32) {
    %c0_i32 = arith.constant 0 : i32
    %c0_i32_0 = arith.constant 0 : i32
    %c0_i32_1 = arith.constant 0 : i32
    return %arg1, %c0_i32, %c0_i32_0 : i32, i32, i32
  }
  func.func @transform_18(%arg0: i32, %arg1: i32) -> (i32, i32, i32) {
    %c0_i32 = arith.constant 0 : i32
    %c0_i32_0 = arith.constant 0 : i32
    %c0_i32_1 = arith.constant 0 : i32
    return %arg1, %c0_i32, %c0_i32_0 : i32, i32, i32
  }
  func.func @transform_19(%arg0: i32, %arg1: i32) -> (i32, i32, i32) {
    %c0_i32 = arith.constant 0 : i32
    %c0_i32_0 = arith.constant 0 : i32
    %c0_i32_1 = arith.constant 0 : i32
    return %arg1, %c0_i32, %c0_i32_0 : i32, i32, i32
  }
  func.func @transform_20(%arg0: i32, %arg1: i32) -> (i32, i32, i32) {
    %c0_i32 = arith.constant 0 : i32
    %c0_i32_0 = arith.constant 0 : i32
    %c0_i32_1 = arith.constant 0 : i32
    return %arg1, %c0_i32, %c0_i32_0 : i32, i32, i32
  }
  func.func @transform_21(%arg0: i32, %arg1: i32) -> (i32, i32, i32) {
    %c0_i32 = arith.constant 0 : i32
    %c0_i32_0 = arith.constant 0 : i32
    %c0_i32_1 = arith.constant 0 : i32
    return %arg1, %c0_i32, %c0_i32_0 : i32, i32, i32
  }
  func.func @transform_22(%arg0: i32, %arg1: i32) -> (i32, i32, i32) {
    %c0_i32 = arith.constant 0 : i32
    %c0_i32_0 = arith.constant 0 : i32
    %c0_i32_1 = arith.constant 0 : i32
    return %arg1, %c0_i32, %c0_i32_0 : i32, i32, i32
  }
  func.func @transform_23(%arg0: i32, %arg1: i32) -> (i32, i32, i32) {
    %c0_i32 = arith.constant 0 : i32
    %c0_i32_0 = arith.constant 0 : i32
    %c0_i32_1 = arith.constant 0 : i32
    return %arg1, %c0_i32, %c0_i32_0 : i32, i32, i32
  }
  func.func @transform_24(%arg0: i32, %arg1: i32) -> (i32, i32, i32) {
    %c0_i32 = arith.constant 0 : i32
    %c0_i32_0 = arith.constant 0 : i32
    %c0_i32_1 = arith.constant 0 : i32
    return %arg1, %c0_i32, %c0_i32_0 : i32, i32, i32
  }
  func.func @transform_25(%arg0: i32, %arg1: i32) -> (i32, i32, i32) {
    %c0_i32 = arith.constant 0 : i32
    %c0_i32_0 = arith.constant 0 : i32
    %c0_i32_1 = arith.constant 0 : i32
    return %arg1, %c0_i32, %c0_i32_0 : i32, i32, i32
  }
  func.func @transform_26(%arg0: i32, %arg1: i32) -> (i32, i32, i32) {
    %c0_i32 = arith.constant 0 : i32
    %c0_i32_0 = arith.constant 0 : i32
    %c0_i32_1 = arith.constant 0 : i32
    return %arg1, %c0_i32, %c0_i32_0 : i32, i32, i32
  }
  func.func @transform_27(%arg0: i32, %arg1: i32) -> (i32, i32, i32) {
    %c0_i32 = arith.constant 0 : i32
    %c0_i32_0 = arith.constant 0 : i32
    %c0_i32_1 = arith.constant 0 : i32
    return %arg1, %c0_i32, %c0_i32_0 : i32, i32, i32
  }
  func.func @transform_28(%arg0: i32, %arg1: i32) -> (i32, i32, i32) {
    %c0_i32 = arith.constant 0 : i32
    %c0_i32_0 = arith.constant 0 : i32
    %c0_i32_1 = arith.constant 0 : i32
    return %arg0, %c0_i32, %c0_i32_0 : i32, i32, i32
  }
}

</mosaic_0001>

<llo_original>
// kernel: transformer_forward.2
$region0: #{transformer_forward.2}
  #allocation0 [shape = 'u32[]', space=smem, size = 0x4, offset = 0x4, fixed_abs, tag = 'smem constant byte address 0x4 - core index']
  #allocation1 [shape = 'u32[72,128]{1,0:T(1,128)}', space=vmem, size = 0x9000, scoped, tag = 'internal scratch']
  %s0 = inlined_call_operand.vmem [shape: f32[2,8,32], index: 0, kind: input, shape index: {}]
  %s1 = inlined_call_operand.vmem [shape: bf16[2,32,32], index: 1, kind: input, shape index: {}]
  %s2 = inlined_call_operand.vmem [shape: f32[2,1,32], index: 2, kind: input, shape index: {}]
  %s3 = inlined_call_operand.vmem [shape: bf16[2,32,32], index: 3, kind: input, shape index: {}]
  %s4 = inlined_call_operand.vmem [shape: f32[2,1,32], index: 4, kind: input, shape index: {}]
  %s5 = inlined_call_operand.vmem [shape: bf16[2,32,32], index: 5, kind: input, shape index: {}]
  %s6 = inlined_call_operand.vmem [shape: f32[2,1,32], index: 6, kind: input, shape index: {}]
  %s7 = inlined_call_operand.vmem [shape: bf16[2,32,32], index: 7, kind: input, shape index: {}]
  %s8 = inlined_call_operand.vmem [shape: f32[2,1,32], index: 8, kind: input, shape index: {}]
  %s9 = inlined_call_operand.vmem [shape: f32[2,1,32], index: 9, kind: input, shape index: {}]
  %s10 = inlined_call_operand.vmem [shape: f32[2,1,32], index: 10, kind: input, shape index: {}]
  %s11 = inlined_call_operand.vmem [shape: bf16[2,32,64], index: 11, kind: input, shape index: {}]
  %s12 = inlined_call_operand.vmem [shape: f32[2,1,64], index: 12, kind: input, shape index: {}]
  %s13 = inlined_call_operand.vmem [shape: bf16[2,64,32], index: 13, kind: input, shape index: {}]
  %s14 = inlined_call_operand.vmem [shape: f32[2,1,32], index: 14, kind: input, shape index: {}]
  %s15 = inlined_call_operand.vmem [shape: f32[2,1,32], index: 15, kind: input, shape index: {}]
  %s16 = inlined_call_operand.vmem [shape: f32[2,1,32], index: 16, kind: input, shape index: {}]
  %s17 = inlined_call_operand.vmem [shape: f32[2,8,32], index: 17, kind: output, shape index: {}]
  %s18 = sld [smem:[#allocation0]]
  $region105: #{transformer_forward.2} parent=0
    _
  %s20 = ssub.s32 1, %s18
  %s21 = scalar_select 0, %s20, %s18
  loop: start=0, step=1, limit=4
  $region2: #{transformer_forward.2} parent=0 // loop_pre_header
    _
  $region3: #{transformer_forward.2} parent=0 // loop_header
    %s23 = sphi 0, %s27
    %p24 = scmp.ge.s32.totalorder %s23, 4
    %s30 = sphi 0, %s42
    %s31 = sphi 0, %s38
    %s32 = sphi 0, %s30
    %s33 = sphi 0, %s31
    %s34 = sphi 0, %s32
    %s35 = sphi 0, %s33
    %s45 = sphi 0, %s47
    %s48 = sphi 0, %s45
    %s49 = sphi 0, %s48
    %s65 = sphi 0, %s49
    %s71 = sphi 0, %s73
    %s74 = sphi 0, %s71
    %s75 = sphi 0, %s74
    %s91 = sphi 0, %s75
    %s97 = sphi 0, %s99
    %s100 = sphi 0, %s97
    %s101 = sphi 0, %s100
    %s117 = sphi 0, %s101
    %s123 = sphi 0, %s125
    %s126 = sphi 0, %s123
    %s127 = sphi 0, %s126
    %s143 = sphi 0, %s127
    %s149 = sphi 0, %s151
    %s152 = sphi 0, %s149
    %s153 = sphi 0, %s152
    %s169 = sphi 0, %s153
    %s175 = sphi 0, %s177
    %s178 = sphi 0, %s175
    %s179 = sphi 0, %s178
    %s195 = sphi 0, %s179
    %s201 = sphi 0, %s203
    %s204 = sphi 0, %s201
    %s205 = sphi 0, %s204
    %s221 = sphi 0, %s205
    %s227 = sphi 0, %s229
    %s230 = sphi 0, %s227
    %s231 = sphi 0, %s230
    %s247 = sphi 0, %s231
    %s253 = sphi 0, %s255
    %s256 = sphi 0, %s253
    %s257 = sphi 0, %s256
    %s273 = sphi 0, %s257
    %s279 = sphi 0, %s281
    %s282 = sphi 0, %s279
    %s283 = sphi 0, %s282
    %s299 = sphi 0, %s283
    %s305 = sphi 0, %s307
    %s308 = sphi 0, %s305
    %s309 = sphi 0, %s308
    %s325 = sphi 0, %s309
    %s331 = sphi 0, %s333
    %s334 = sphi 0, %s331
    %s335 = sphi 0, %s334
    %s351 = sphi 0, %s335
    %s357 = sphi 0, %s359
    %s360 = sphi 0, %s357
    %s361 = sphi 0, %s360
    %s377 = sphi 0, %s361
    %s383 = sphi 0, %s385
    %s386 = sphi 0, %s383
    %s387 = sphi 0, %s386
    %s403 = sphi 0, %s387
    %s409 = sphi 0, %s411
    %s412 = sphi 0, %s409
    %s413 = sphi 0, %s412
    %s429 = sphi 0, %s413
    %s435 = sphi 0, %s437
    %s438 = sphi 0, %s435
    %s439 = sphi 0, %s438
    %s455 = sphi 0, %s439
    %s461 = sphi 0, %s463
    %s464 = sphi 0, %s461
    %s465 = sphi 0, %s464
    %s481 = sphi 0, %s465
    %s487 = sphi 0, %s489
    %s490 = sphi 0, %s487
    %s491 = sphi 0, %s490
    %s507 = sphi 0, %s491
  $region4: #{transformer_forward.2} parent=0 // loop_header_branch
    %26 = sbr.rel (%p24) target = $region8
  $region5: #{transformer_forward.2} parent=0 // loop_body
    %s28 = ssub.s32 %s23, 1
    %s29 = ssub.s32 %s23, 2
    %s36 = sadd.s32 1, %s31
    %p37 = scmp.ge.s32.totalorder %s36, 2
    %s38 = scalar_select %p37, 0, %s36
    %s39 = sadd.s32 1, %s30
    %s40 = scalar_select %p37, %s39, %s30
    %p41 = scmp.ge.s32.totalorder %s40, 1
    %s42 = scalar_select %p41, 0, %s40
    %s43 = ssub.s32 %s30, %s42
    %p44 = scmp.eq.s32.totalorder %s43, 0
    %s46 = sadd.s32 %s45, 1
    %s47 = scalar_select %p44, %s45, %s46
    %p50 = pneg %p44
    %p51 = scmp.eq.s32.totalorder %s23, 1
    %p52 = por %p50, %p51
    %p53 = scmp.ne.s32.totalorder %s45, %s48
    %p54 = scmp.eq.s32.totalorder %s23, 0
    %p55 = por %p53, %p54
    %p56 = scmp.ne.s32.totalorder %s45, %s48
    %p57 = scmp.eq.s32.totalorder %s28, 1
    %p58 = por %p56, %p57
    %p59 = scmp.ne.s32.totalorder %s48, %s49
    %p60 = scmp.eq.s32.totalorder %s28, 0
    %p61 = por %p59, %p60
    %p62 = scmp.ne.s32.totalorder %s48, %s49
    %p63 = scmp.eq.s32.totalorder %s29, 1
    %p64 = por %p62, %p63
    %p66 = scmp.ne.s32.totalorder %s49, %s65
    %p67 = scmp.eq.s32.totalorder %s29, 0
    %p68 = por %p66, %p67
    %s69 = ssub.s32 %s31, %s38
    %p70 = scmp.eq.s32.totalorder %s69, 0
    %s72 = sadd.s32 %s71, 1
    %s73 = scalar_select %p70, %s71, %s72
    %p76 = pneg %p70
    %p77 = scmp.eq.s32.totalorder %s23, 1
    %p78 = por %p76, %p77
    %p79 = scmp.ne.s32.totalorder %s71, %s74
    %p80 = scmp.eq.s32.totalorder %s23, 0
    %p81 = por %p79, %p80
    %p82 = scmp.ne.s32.totalorder %s71, %s74
    %p83 = scmp.eq.s32.totalorder %s28, 1
    %p84 = por %p82, %p83
    %p85 = scmp.ne.s32.totalorder %s74, %s75
    %p86 = scmp.eq.s32.totalorder %s28, 0
    %p87 = por %p85, %p86
    %p88 = scmp.ne.s32.totalorder %s74, %s75
    %p89 = scmp.eq.s32.totalorder %s29, 1
    %p90 = por %p88, %p89
    %p92 = scmp.ne.s32.totalorder %s75, %s91
    %p93 = scmp.eq.s32.totalorder %s29, 0
    %p94 = por %p92, %p93
    %s95 = ssub.s32 %s31, %s38
    %p96 = scmp.eq.s32.totalorder %s95, 0
    %s98 = sadd.s32 %s97, 1
    %s99 = scalar_select %p96, %s97, %s98
    %p102 = pneg %p96
    %p103 = scmp.eq.s32.totalorder %s23, 1
    %p104 = por %p102, %p103
    %p105 = scmp.ne.s32.totalorder %s97, %s100
    %p106 = scmp.eq.s32.totalorder %s23, 0
    %p107 = por %p105, %p106
    %p108 = scmp.ne.s32.totalorder %s97, %s100
    %p109 = scmp.eq.s32.totalorder %s28, 1
    %p110 = por %p108, %p109
    %p111 = scmp.ne.s32.totalorder %s100, %s101
    %p112 = scmp.eq.s32.totalorder %s28, 0
    %p113 = por %p111, %p112
    %p114 = scmp.ne.s32.totalorder %s100, %s101
    %p115 = scmp.eq.s32.totalorder %s29, 1
    %p116 = por %p114, %p115
    %p118 = scmp.ne.s32.totalorder %s101, %s117
    %p119 = scmp.eq.s32.totalorder %s29, 0
    %p120 = por %p118, %p119
    %s121 = ssub.s32 %s31, %s38
    %p122 = scmp.eq.s32.totalorder %s121, 0
    %s124 = sadd.s32 %s123, 1
    %s125 = scalar_select %p122, %s123, %s124
    %p128 = pneg %p122
    %p129 = scmp.eq.s32.totalorder %s23, 1
    %p130 = por %p128, %p129
    %p131 = scmp.ne.s32.totalorder %s123, %s126
    %p132 = scmp.eq.s32.totalorder %s23, 0
    %p133 = por %p131, %p132
    %p134 = scmp.ne.s32.totalorder %s123, %s126
    %p135 = scmp.eq.s32.totalorder %s28, 1
    %p136 = por %p134, %p135
    %p137 = scmp.ne.s32.totalorder %s126, %s127
    %p138 = scmp.eq.s32.totalorder %s28, 0
    %p139 = por %p137, %p138
    %p140 = scmp.ne.s32.totalorder %s126, %s127
    %p141 = scmp.eq.s32.totalorder %s29, 1
    %p142 = por %p140, %p141
    %p144 = scmp.ne.s32.totalorder %s127, %s143
    %p145 = scmp.eq.s32.totalorder %s29, 0
    %p146 = por %p144, %p145
    %s147 = ssub.s32 %s31, %s38
    %p148 = scmp.eq.s32.totalorder %s147, 0
    %s150 = sadd.s32 %s149, 1
    %s151 = scalar_select %p148, %s149, %s150
    %p154 = pneg %p148
    %p155 = scmp.eq.s32.totalorder %s23, 1
    %p156 = por %p154, %p155
    %p157 = scmp.ne.s32.totalorder %s149, %s152
    %p158 = scmp.eq.s32.totalorder %s23, 0
    %p159 = por %p157, %p158
    %p160 = scmp.ne.s32.totalorder %s149, %s152
    %p161 = scmp.eq.s32.totalorder %s28, 1
    %p162 = por %p160, %p161
    %p163 = scmp.ne.s32.totalorder %s152, %s153
    %p164 = scmp.eq.s32.totalorder %s28, 0
    %p165 = por %p163, %p164
    %p166 = scmp.ne.s32.totalorder %s152, %s153
    %p167 = scmp.eq.s32.totalorder %s29, 1
    %p168 = por %p166, %p167
    %p170 = scmp.ne.s32.totalorder %s153, %s169
    %p171 = scmp.eq.s32.totalorder %s29, 0
    %p172 = por %p170, %p171
    %s173 = ssub.s32 %s31, %s38
    %p174 = scmp.eq.s32.totalorder %s173, 0
    %s176 = sadd.s32 %s175, 1
    %s177 = scalar_select %p174, %s175, %s176
    %p180 = pneg %p174
    %p181 = scmp.eq.s32.totalorder %s23, 1
    %p182 = por %p180, %p181
    %p183 = scmp.ne.s32.totalorder %s175, %s178
    %p184 = scmp.eq.s32.totalorder %s23, 0
    %p185 = por %p183, %p184
    %p186 = scmp.ne.s32.totalorder %s175, %s178
    %p187 = scmp.eq.s32.totalorder %s28, 1
    %p188 = por %p186, %p187
    %p189 = scmp.ne.s32.totalorder %s178, %s179
    %p190 = scmp.eq.s32.totalorder %s28, 0
    %p191 = por %p189, %p190
    %p192 = scmp.ne.s32.totalorder %s178, %s179
    %p193 = scmp.eq.s32.totalorder %s29, 1
    %p194 = por %p192, %p193
    %p196 = scmp.ne.s32.totalorder %s179, %s195
    %p197 = scmp.eq.s32.totalorder %s29, 0
    %p198 = por %p196, %p197
    %s199 = ssub.s32 %s31, %s38
    %p200 = scmp.eq.s32.totalorder %s199, 0
    %s202 = sadd.s32 %s201, 1
    %s203 = scalar_select %p200, %s201, %s202
    %p206 = pneg %p200
    %p207 = scmp.eq.s32.totalorder %s23, 1
    %p208 = por %p206, %p207
    %p209 = scmp.ne.s32.totalorder %s201, %s204
    %p210 = scmp.eq.s32.totalorder %s23, 0
    %p211 = por %p209, %p210
    %p212 = scmp.ne.s32.totalorder %s201, %s204
    %p213 = scmp.eq.s32.totalorder %s28, 1
    %p214 = por %p212, %p213
    %p215 = scmp.ne.s32.totalorder %s204, %s205
    %p216 = scmp.eq.s32.totalorder %s28, 0
    %p217 = por %p215, %p216
    %p218 = scmp.ne.s32.totalorder %s204, %s205
    %p219 = scmp.eq.s32.totalorder %s29, 1
    %p220 = por %p218, %p219
    %p222 = scmp.ne.s32.totalorder %s205, %s221
    %p223 = scmp.eq.s32.totalorder %s29, 0
    %p224 = por %p222, %p223
    %s225 = ssub.s32 %s31, %s38
    %p226 = scmp.eq.s32.totalorder %s225, 0
    %s228 = sadd.s32 %s227, 1
    %s229 = scalar_select %p226, %s227, %s228
    %p232 = pneg %p226
    %p233 = scmp.eq.s32.totalorder %s23, 1
    %p234 = por %p232, %p233
    %p235 = scmp.ne.s32.totalorder %s227, %s230
    %p236 = scmp.eq.s32.totalorder %s23, 0
    %p237 = por %p235, %p236
    %p238 = scmp.ne.s32.totalorder %s227, %s230
    %p239 = scmp.eq.s32.totalorder %s28, 1
    %p240 = por %p238, %p239
    %p241 = scmp.ne.s32.totalorder %s230, %s231
    %p242 = scmp.eq.s32.totalorder %s28, 0
    %p243 = por %p241, %p242
    %p244 = scmp.ne.s32.totalorder %s230, %s231
    %p245 = scmp.eq.s32.totalorder %s29, 1
    %p246 = por %p244, %p245
    %p248 = scmp.ne.s32.totalorder %s231, %s247
    %p249 = scmp.eq.s32.totalorder %s29, 0
    %p250 = por %p248, %p249
    %s251 = ssub.s32 %s31, %s38
    %p252 = scmp.eq.s32.totalorder %s251, 0
    %s254 = sadd.s32 %s253, 1
    %s255 = scalar_select %p252, %s253, %s254
    %p258 = pneg %p252
    %p259 = scmp.eq.s32.totalorder %s23, 1
    %p260 = por %p258, %p259
    %p261 = scmp.ne.s32.totalorder %s253, %s256
    %p262 = scmp.eq.s32.totalorder %s23, 0
    %p263 = por %p261, %p262
    %p264 = scmp.ne.s32.totalorder %s253, %s256
    %p265 = scmp.eq.s32.totalorder %s28, 1
    %p266 = por %p264, %p265
    %p267 = scmp.ne.s32.totalorder %s256, %s257
    %p268 = scmp.eq.s32.totalorder %s28, 0
    %p269 = por %p267, %p268
    %p270 = scmp.ne.s32.totalorder %s256, %s257
    %p271 = scmp.eq.s32.totalorder %s29, 1
    %p272 = por %p270, %p271
    %p274 = scmp.ne.s32.totalorder %s257, %s273
    %p275 = scmp.eq.s32.totalorder %s29, 0
    %p276 = por %p274, %p275
    %s277 = ssub.s32 %s31, %s38
    %p278 = scmp.eq.s32.totalorder %s277, 0
    %s280 = sadd.s32 %s279, 1
    %s281 = scalar_select %p278, %s279, %s280
    %p284 = pneg %p278
    %p285 = scmp.eq.s32.totalorder %s23, 1
    %p286 = por %p284, %p285
    %p287 = scmp.ne.s32.totalorder %s279, %s282
    %p288 = scmp.eq.s32.totalorder %s23, 0
    %p289 = por %p287, %p288
    %p290 = scmp.ne.s32.totalorder %s279, %s282
    %p291 = scmp.eq.s32.totalorder %s28, 1
    %p292 = por %p290, %p291
    %p293 = scmp.ne.s32.totalorder %s282, %s283
    %p294 = scmp.eq.s32.totalorder %s28, 0
    %p295 = por %p293, %p294
    %p296 = scmp.ne.s32.totalorder %s282, %s283
    %p297 = scmp.eq.s32.totalorder %s29, 1
    %p298 = por %p296, %p297
    %p300 = scmp.ne.s32.totalorder %s283, %s299
    %p301 = scmp.eq.s32.totalorder %s29, 0
    %p302 = por %p300, %p301
    %s303 = ssub.s32 %s31, %s38
    %p304 = scmp.eq.s32.totalorder %s303, 0
    %s306 = sadd.s32 %s305, 1
    %s307 = scalar_select %p304, %s305, %s306
    %p310 = pneg %p304
    %p311 = scmp.eq.s32.totalorder %s23, 1
    %p312 = por %p310, %p311
    %p313 = scmp.ne.s32.totalorder %s305, %s308
    %p314 = scmp.eq.s32.totalorder %s23, 0
    %p315 = por %p313, %p314
    %p316 = scmp.ne.s32.totalorder %s305, %s308
    %p317 = scmp.eq.s32.totalorder %s28, 1
    %p318 = por %p316, %p317
    %p319 = scmp.ne.s32.totalorder %s308, %s309
    %p320 = scmp.eq.s32.totalorder %s28, 0
    %p321 = por %p319, %p320
    %p322 = scmp.ne.s32.totalorder %s308, %s309
    %p323 = scmp.eq.s32.totalorder %s29, 1
    %p324 = por %p322, %p323
    %p326 = scmp.ne.s32.totalorder %s309, %s325
    %p327 = scmp.eq.s32.totalorder %s29, 0
    %p328 = por %p326, %p327
    %s329 = ssub.s32 %s31, %s38
    %p330 = scmp.eq.s32.totalorder %s329, 0
    %s332 = sadd.s32 %s331, 1
    %s333 = scalar_select %p330, %s331, %s332
    %p336 = pneg %p330
    %p337 = scmp.eq.s32.totalorder %s23, 1
    %p338 = por %p336, %p337
    %p339 = scmp.ne.s32.totalorder %s331, %s334
    %p340 = scmp.eq.s32.totalorder %s23, 0
    %p341 = por %p339, %p340
    %p342 = scmp.ne.s32.totalorder %s331, %s334
    %p343 = scmp.eq.s32.totalorder %s28, 1
    %p344 = por %p342, %p343
    %p345 = scmp.ne.s32.totalorder %s334, %s335
    %p346 = scmp.eq.s32.totalorder %s28, 0
    %p347 = por %p345, %p346
    %p348 = scmp.ne.s32.totalorder %s334, %s335
    %p349 = scmp.eq.s32.totalorder %s29, 1
    %p350 = por %p348, %p349
    %p352 = scmp.ne.s32.totalorder %s335, %s351
    %p353 = scmp.eq.s32.totalorder %s29, 0
    %p354 = por %p352, %p353
    %s355 = ssub.s32 %s31, %s38
    %p356 = scmp.eq.s32.totalorder %s355, 0
    %s358 = sadd.s32 %s357, 1
    %s359 = scalar_select %p356, %s357, %s358
    %p362 = pneg %p356
    %p363 = scmp.eq.s32.totalorder %s23, 1
    %p364 = por %p362, %p363
    %p365 = scmp.ne.s32.totalorder %s357, %s360
    %p366 = scmp.eq.s32.totalorder %s23, 0
    %p367 = por %p365, %p366
    %p368 = scmp.ne.s32.totalorder %s357, %s360
    %p369 = scmp.eq.s32.totalorder %s28, 1
    %p370 = por %p368, %p369
    %p371 = scmp.ne.s32.totalorder %s360, %s361
    %p372 = scmp.eq.s32.totalorder %s28, 0
    %p373 = por %p371, %p372
    %p374 = scmp.ne.s32.totalorder %s360, %s361
    %p375 = scmp.eq.s32.totalorder %s29, 1
    %p376 = por %p374, %p375
    %p378 = scmp.ne.s32.totalorder %s361, %s377
    %p379 = scmp.eq.s32.totalorder %s29, 0
    %p380 = por %p378, %p379
    %s381 = ssub.s32 %s31, %s38
    %p382 = scmp.eq.s32.totalorder %s381, 0
    %s384 = sadd.s32 %s383, 1
    %s385 = scalar_select %p382, %s383, %s384
    %p388 = pneg %p382
    %p389 = scmp.eq.s32.totalorder %s23, 1
    %p390 = por %p388, %p389
    %p391 = scmp.ne.s32.totalorder %s383, %s386
    %p392 = scmp.eq.s32.totalorder %s23, 0
    %p393 = por %p391, %p392
    %p394 = scmp.ne.s32.totalorder %s383, %s386
    %p395 = scmp.eq.s32.totalorder %s28, 1
    %p396 = por %p394, %p395
    %p397 = scmp.ne.s32.totalorder %s386, %s387
    %p398 = scmp.eq.s32.totalorder %s28, 0
    %p399 = por %p397, %p398
    %p400 = scmp.ne.s32.totalorder %s386, %s387
    %p401 = scmp.eq.s32.totalorder %s29, 1
    %p402 = por %p400, %p401
    %p404 = scmp.ne.s32.totalorder %s387, %s403
    %p405 = scmp.eq.s32.totalorder %s29, 0
    %p406 = por %p404, %p405
    %s407 = ssub.s32 %s31, %s38
    %p408 = scmp.eq.s32.totalorder %s407, 0
    %s410 = sadd.s32 %s409, 1
    %s411 = scalar_select %p408, %s409, %s410
    %p414 = pneg %p408
    %p415 = scmp.eq.s32.totalorder %s23, 1
    %p416 = por %p414, %p415
    %p417 = scmp.ne.s32.totalorder %s409, %s412
    %p418 = scmp.eq.s32.totalorder %s23, 0
    %p419 = por %p417, %p418
    %p420 = scmp.ne.s32.totalorder %s409, %s412
    %p421 = scmp.eq.s32.totalorder %s28, 1
    %p422 = por %p420, %p421
    %p423 = scmp.ne.s32.totalorder %s412, %s413
    %p424 = scmp.eq.s32.totalorder %s28, 0
    %p425 = por %p423, %p424
    %p426 = scmp.ne.s32.totalorder %s412, %s413
    %p427 = scmp.eq.s32.totalorder %s29, 1
    %p428 = por %p426, %p427
    %p430 = scmp.ne.s32.totalorder %s413, %s429
    %p431 = scmp.eq.s32.totalorder %s29, 0
    %p432 = por %p430, %p431
    %s433 = ssub.s32 %s31, %s38
    %p434 = scmp.eq.s32.totalorder %s433, 0
    %s436 = sadd.s32 %s435, 1
    %s437 = scalar_select %p434, %s435, %s436
    %p440 = pneg %p434
    %p441 = scmp.eq.s32.totalorder %s23, 1
    %p442 = por %p440, %p441
    %p443 = scmp.ne.s32.totalorder %s435, %s438
    %p444 = scmp.eq.s32.totalorder %s23, 0
    %p445 = por %p443, %p444
    %p446 = scmp.ne.s32.totalorder %s435, %s438
    %p447 = scmp.eq.s32.totalorder %s28, 1
    %p448 = por %p446, %p447
    %p449 = scmp.ne.s32.totalorder %s438, %s439
    %p450 = scmp.eq.s32.totalorder %s28, 0
    %p451 = por %p449, %p450
    %p452 = scmp.ne.s32.totalorder %s438, %s439
    %p453 = scmp.eq.s32.totalorder %s29, 1
    %p454 = por %p452, %p453
    %p456 = scmp.ne.s32.totalorder %s439, %s455
    %p457 = scmp.eq.s32.totalorder %s29, 0
    %p458 = por %p456, %p457
    %s459 = ssub.s32 %s31, %s38
    %p460 = scmp.eq.s32.totalorder %s459, 0
    %s462 = sadd.s32 %s461, 1
    %s463 = scalar_select %p460, %s461, %s462
    %p466 = pneg %p460
    %p467 = scmp.eq.s32.totalorder %s23, 1
    %p468 = por %p466, %p467
    %p469 = scmp.ne.s32.totalorder %s461, %s464
    %p470 = scmp.eq.s32.totalorder %s23, 0
    %p471 = por %p469, %p470
    %p472 = scmp.ne.s32.totalorder %s461, %s464
    %p473 = scmp.eq.s32.totalorder %s28, 1
    %p474 = por %p472, %p473
    %p475 = scmp.ne.s32.totalorder %s464, %s465
    %p476 = scmp.eq.s32.totalorder %s28, 0
    %p477 = por %p475, %p476
    %p478 = scmp.ne.s32.totalorder %s464, %s465
    %p479 = scmp.eq.s32.totalorder %s29, 1
    %p480 = por %p478, %p479
    %p482 = scmp.ne.s32.totalorder %s465, %s481
    %p483 = scmp.eq.s32.totalorder %s29, 0
    %p484 = por %p482, %p483
    %s485 = ssub.s32 %s30, %s42
    %p486 = scmp.eq.s32.totalorder %s485, 0
    %s488 = sadd.s32 %s487, 1
    %s489 = scalar_select %p486, %s487, %s488
    %p492 = pneg %p486
    %p493 = scmp.eq.s32.totalorder %s23, 1
    %p494 = por %p492, %p493
    %p495 = scmp.ne.s32.totalorder %s487, %s490
    %p496 = scmp.eq.s32.totalorder %s23, 0
    %p497 = por %p495, %p496
    %p498 = scmp.ne.s32.totalorder %s487, %s490
    %p499 = scmp.eq.s32.totalorder %s28, 1
    %p500 = por %p498, %p499
    %p501 = scmp.ne.s32.totalorder %s490, %s491
    %p502 = scmp.eq.s32.totalorder %s28, 0
    %p503 = por %p501, %p502
    %p504 = scmp.ne.s32.totalorder %s490, %s491
    %p505 = scmp.eq.s32.totalorder %s29, 1
    %p506 = por %p504, %p505
    %p508 = scmp.ne.s32.totalorder %s491, %s507
    %p509 = scmp.eq.s32.totalorder %s29, 0
    %p510 = por %p508, %p509
    %p511 = scmp.le.s32.totalorder 1, %s23
    %p512 = scmp.lt.s32.totalorder %s23, 3
    %p513 = pnand %p511, %p512
    %p514 = pneg %p513
    // Predicated region
    $region9: #{transformer_forward.2} parent=5 // pred_check
      _
    $region10: #{transformer_forward.2} parent=5 // pred_check_branch
      %516 = sbr.rel (%p513) target = $region12
    $region11: #{transformer_forward.2} parent=5 // pred_region
      %s517 = ssub.s32 %s23, 1
      // Predicated region
      $region13: #{transformer_forward.2} parent=11 // pred_check
        %p518 = pneg %p61
      $region14: #{transformer_forward.2} parent=11 // pred_check_branch
        %520 = sbr.rel (%p518) target = $region16
      $region15: #{transformer_forward.2} parent=11 // pred_region
        %s521 = smul.u32 2, %s32
        %p522 = scmp.lt.s32.totalorder %s521, 1
        %s523 = scalar_select %p522, %s521, 1
        %s524 = smul.addr %s523, 8
        %s525 = scalar_lea.vmem %s0, %s524
        %s526 = smul.u32 2, %s32
      $region16: #{transformer_forward.2} parent=11 // pred_fallthru
        _
    $region12: #{transformer_forward.2} parent=5 // pred_fallthru
      _
    %p527 = scmp.lt.s32.totalorder %s23, 2
    // Predicated region
    $region17: #{transformer_forward.2} parent=5 // pred_check
      %p528 = pneg %p527
    $region18: #{transformer_forward.2} parent=5 // pred_check_branch
      %530 = sbr.rel (%p528) target = $region20
    $region19: #{transformer_forward.2} parent=5 // pred_region
      // Predicated region
      $region21: #{transformer_forward.2} parent=19 // pred_check
        %p531 = pneg %p81
      $region22: #{transformer_forward.2} parent=19 // pred_check_branch
        %533 = sbr.rel (%p531) target = $region24
      $region23: #{transformer_forward.2} parent=19 // pred_region
        %p534 = scmp.lt.s32.totalorder %s31, 1
        %s535 = scalar_select %p534, %s31, 1
        %s536 = smul.addr %s535, 4
        %s537 = smul.addr %s536, 4
        %s538 = scalar_lea.vmem %s1, %s537
      $region24: #{transformer_forward.2} parent=19 // pred_fallthru
        _
      // Predicated region
      $region25: #{transformer_forward.2} parent=19 // pred_check
        %p539 = pneg %p107
      $region26: #{transformer_forward.2} parent=19 // pred_check_branch
        %541 = sbr.rel (%p539) target = $region28
      $region27: #{transformer_forward.2} parent=19 // pred_region
        %p542 = scmp.lt.s32.totalorder %s31, 1
        %s543 = scalar_select %p542, %s31, 1
        %s544 = scalar_lea.vmem %s2, %s543
      $region28: #{transformer_forward.2} parent=19 // pred_fallthru
        _
      // Predicated region
      $region29: #{transformer_forward.2} parent=19 // pred_check
        %p545 = pneg %p133
      $region30: #{transformer_forward.2} parent=19 // pred_check_branch
        %547 = sbr.rel (%p545) target = $region32
      $region31: #{transformer_forward.2} parent=19 // pred_region
        %p548 = scmp.lt.s32.totalorder %s31, 1
        %s549 = scalar_select %p548, %s31, 1
        %s550 = smul.addr %s549, 4
        %s551 = smul.addr %s550, 4
        %s552 = scalar_lea.vmem %s3, %s551
      $region32: #{transformer_forward.2} parent=19 // pred_fallthru
        _
      // Predicated region
      $region33: #{transformer_forward.2} parent=19 // pred_check
        %p553 = pneg %p159
      $region34: #{transformer_forward.2} parent=19 // pred_check_branch
        %555 = sbr.rel (%p553) target = $region36
      $region35: #{transformer_forward.2} parent=19 // pred_region
        %p556 = scmp.lt.s32.totalorder %s31, 1
        %s557 = scalar_select %p556, %s31, 1
        %s558 = scalar_lea.vmem %s4, %s557
      $region36: #{transformer_forward.2} parent=19 // pred_fallthru
        _
      // Predicated region
      $region37: #{transformer_forward.2} parent=19 // pred_check
        %p559 = pneg %p185
      $region38: #{transformer_forward.2} parent=19 // pred_check_branch
        %561 = sbr.rel (%p559) target = $region40
      $region39: #{transformer_forward.2} parent=19 // pred_region
        %p562 = scmp.lt.s32.totalorder %s31, 1
        %s563 = scalar_select %p562, %s31, 1
        %s564 = smul.addr %s563, 4
        %s565 = smul.addr %s564, 4
        %s566 = scalar_lea.vmem %s5, %s565
      $region40: #{transformer_forward.2} parent=19 // pred_fallthru
        _
      // Predicated region
      $region41: #{transformer_forward.2} parent=19 // pred_check
        %p567 = pneg %p211
      $region42: #{transformer_forward.2} parent=19 // pred_check_branch
        %569 = sbr.rel (%p567) target = $region44
      $region43: #{transformer_forward.2} parent=19 // pred_region
        %p570 = scmp.lt.s32.totalorder %s31, 1
        %s571 = scalar_select %p570, %s31, 1
        %s572 = scalar_lea.vmem %s6, %s571
      $region44: #{transformer_forward.2} parent=19 // pred_fallthru
        _
      // Predicated region
      $region45: #{transformer_forward.2} parent=19 // pred_check
        %p573 = pneg %p237
      $region46: #{transformer_forward.2} parent=19 // pred_check_branch
        %575 = sbr.rel (%p573) target = $region48
      $region47: #{transformer_forward.2} parent=19 // pred_region
        %p576 = scmp.lt.s32.totalorder %s31, 1
        %s577 = scalar_select %p576, %s31, 1
        %s578 = smul.addr %s577, 4
        %s579 = smul.addr %s578, 4
        %s580 = scalar_lea.vmem %s7, %s579
      $region48: #{transformer_forward.2} parent=19 // pred_fallthru
        _
      // Predicated region
      $region49: #{transformer_forward.2} parent=19 // pred_check
        %p581 = pneg %p263
      $region50: #{transformer_forward.2} parent=19 // pred_check_branch
        %583 = sbr.rel (%p581) target = $region52
      $region51: #{transformer_forward.2} parent=19 // pred_region
        %p584 = scmp.lt.s32.totalorder %s31, 1
        %s585 = scalar_select %p584, %s31, 1
        %s586 = scalar_lea.vmem %s8, %s585
      $region52: #{transformer_forward.2} parent=19 // pred_fallthru
        _
      // Predicated region
      $region53: #{transformer_forward.2} parent=19 // pred_check
        %p587 = pneg %p289
      $region54: #{transformer_forward.2} parent=19 // pred_check_branch
        %589 = sbr.rel (%p587) target = $region56
      $region55: #{transformer_forward.2} parent=19 // pred_region
        %p590 = scmp.lt.s32.totalorder %s31, 1
        %s591 = scalar_select %p590, %s31, 1
        %s592 = scalar_lea.vmem %s9, %s591
      $region56: #{transformer_forward.2} parent=19 // pred_fallthru
        _
      // Predicated region
      $region57: #{transformer_forward.2} parent=19 // pred_check
        %p593 = pneg %p315
      $region58: #{transformer_forward.2} parent=19 // pred_check_branch
        %595 = sbr.rel (%p593) target = $region60
      $region59: #{transformer_forward.2} parent=19 // pred_region
        %p596 = scmp.lt.s32.totalorder %s31, 1
        %s597 = scalar_select %p596, %s31, 1
        %s598 = scalar_lea.vmem %s10, %s597
      $region60: #{transformer_forward.2} parent=19 // pred_fallthru
        _
      // Predicated region
      $region61: #{transformer_forward.2} parent=19 // pred_check
        %p599 = pneg %p341
      $region62: #{transformer_forward.2} parent=19 // pred_check_branch
        %601 = sbr.rel (%p599) target = $region64
      $region63: #{transformer_forward.2} parent=19 // pred_region
        %p602 = scmp.lt.s32.totalorder %s31, 1
        %s603 = scalar_select %p602, %s31, 1
        %s604 = smul.addr %s603, 4
        %s605 = smul.addr %s604, 4
        %s606 = scalar_lea.vmem %s11, %s605
      $region64: #{transformer_forward.2} parent=19 // pred_fallthru
        _
      // Predicated region
      $region65: #{transformer_forward.2} parent=19 // pred_check
        %p607 = pneg %p367
      $region66: #{transformer_forward.2} parent=19 // pred_check_branch
        %609 = sbr.rel (%p607) target = $region68
      $region67: #{transformer_forward.2} parent=19 // pred_region
        %p610 = scmp.lt.s32.totalorder %s31, 1
        %s611 = scalar_select %p610, %s31, 1
        %s612 = scalar_lea.vmem %s12, %s611
      $region68: #{transformer_forward.2} parent=19 // pred_fallthru
        _
      // Predicated region
      $region69: #{transformer_forward.2} parent=19 // pred_check
        %p613 = pneg %p393
      $region70: #{transformer_forward.2} parent=19 // pred_check_branch
        %615 = sbr.rel (%p613) target = $region72
      $region71: #{transformer_forward.2} parent=19 // pred_region
        %p616 = scmp.lt.s32.totalorder %s31, 1
        %s617 = scalar_select %p616, %s31, 1
        %s618 = smul.addr %s617, 8
        %s619 = smul.addr %s618, 4
        %s620 = scalar_lea.vmem %s13, %s619
      $region72: #{transformer_forward.2} parent=19 // pred_fallthru
        _
      // Predicated region
      $region73: #{transformer_forward.2} parent=19 // pred_check
        %p621 = pneg %p419
      $region74: #{transformer_forward.2} parent=19 // pred_check_branch
        %623 = sbr.rel (%p621) target = $region76
      $region75: #{transformer_forward.2} parent=19 // pred_region
        %p624 = scmp.lt.s32.totalorder %s31, 1
        %s625 = scalar_select %p624, %s31, 1
        %s626 = scalar_lea.vmem %s14, %s625
      $region76: #{transformer_forward.2} parent=19 // pred_fallthru
        _
      // Predicated region
      $region77: #{transformer_forward.2} parent=19 // pred_check
        %p627 = pneg %p445
      $region78: #{transformer_forward.2} parent=19 // pred_check_branch
        %629 = sbr.rel (%p627) target = $region80
      $region79: #{transformer_forward.2} parent=19 // pred_region
        %p630 = scmp.lt.s32.totalorder %s31, 1
        %s631 = scalar_select %p630, %s31, 1
        %s632 = scalar_lea.vmem %s15, %s631
      $region80: #{transformer_forward.2} parent=19 // pred_fallthru
        _
      // Predicated region
      $region81: #{transformer_forward.2} parent=19 // pred_check
        %p633 = pneg %p471
      $region82: #{transformer_forward.2} parent=19 // pred_check_branch
        %635 = sbr.rel (%p633) target = $region84
      $region83: #{transformer_forward.2} parent=19 // pred_region
        %p636 = scmp.lt.s32.totalorder %s31, 1
        %s637 = scalar_select %p636, %s31, 1
        %s638 = scalar_lea.vmem %s16, %s637
      $region84: #{transformer_forward.2} parent=19 // pred_fallthru
        _
    $region20: #{transformer_forward.2} parent=5 // pred_fallthru
      _
    %p639 = scmp.le.s32.totalorder 1, %s23
    %p640 = scmp.lt.s32.totalorder %s23, 3
    %p641 = pnand %p639, %p640
    %p642 = pneg %p641
    // Predicated region
    $region85: #{transformer_forward.2} parent=5 // pred_check
      _
    $region86: #{transformer_forward.2} parent=5 // pred_check_branch
      %644 = sbr.rel (%p641) target = $region88
    $region87: #{transformer_forward.2} parent=5 // pred_region
      %s645 = ssub.s32 %s23, 1
      %s646 = smul.u32 2, %s32
      %p647 = scmp.lt.s32.totalorder %s646, 1
      %s648 = scalar_select %p647, %s646, 1
      %s649 = smul.addr %s648, 8
      %s650 = scalar_lea.vmem %s0, %s649
      %p651 = pneg %p61
      %p652 = pneg %p58
      %p653 = scmp.lt.s32.totalorder %s33, 1
      %s654 = scalar_select %p653, %s33, 1
      %s655 = smul.addr %s654, 4
      %s656 = smul.addr %s655, 4
      %s657 = scalar_lea.vmem %s1, %s656
      %p658 = pneg %p87
      %p659 = pneg %p84
      %p660 = scmp.lt.s32.totalorder %s33, 1
      %s661 = scalar_select %p660, %s33, 1
      %s662 = scalar_lea.vmem %s2, %s661
      %p663 = pneg %p113
      %p664 = pneg %p110
      %p665 = scmp.lt.s32.totalorder %s33, 1
      %s666 = scalar_select %p665, %s33, 1
      %s667 = smul.addr %s666, 4
      %s668 = smul.addr %s667, 4
      %s669 = scalar_lea.vmem %s3, %s668
      %p670 = pneg %p139
      %p671 = pneg %p136
      %p672 = scmp.lt.s32.totalorder %s33, 1
      %s673 = scalar_select %p672, %s33, 1
      %s674 = scalar_lea.vmem %s4, %s673
      %p675 = pneg %p165
      %p676 = pneg %p162
      %p677 = scmp.lt.s32.totalorder %s33, 1
      %s678 = scalar_select %p677, %s33, 1
      %s679 = smul.addr %s678, 4
      %s680 = smul.addr %s679, 4
      %s681 = scalar_lea.vmem %s5, %s680
      %p682 = pneg %p191
      %p683 = pneg %p188
      %p684 = scmp.lt.s32.totalorder %s33, 1
      %s685 = scalar_select %p684, %s33, 1
      %s686 = scalar_lea.vmem %s6, %s685
      %p687 = pneg %p217
      %p688 = pneg %p214
      %p689 = scmp.lt.s32.totalorder %s33, 1
      %s690 = scalar_select %p689, %s33, 1
      %s691 = smul.addr %s690, 4
      %s692 = smul.addr %s691, 4
      %s693 = scalar_lea.vmem %s7, %s692
      %p694 = pneg %p243
      %p695 = pneg %p240
      %p696 = scmp.lt.s32.totalorder %s33, 1
      %s697 = scalar_select %p696, %s33, 1
      %s698 = scalar_lea.vmem %s8, %s697
      %p699 = pneg %p269
      %p700 = pneg %p266
      %p701 = scmp.lt.s32.totalorder %s33, 1
      %s702 = scalar_select %p701, %s33, 1
      %s703 = scalar_lea.vmem %s9, %s702
      %p704 = pneg %p295
      %p705 = pneg %p292
      %p706 = scmp.lt.s32.totalorder %s33, 1
      %s707 = scalar_select %p706, %s33, 1
      %s708 = scalar_lea.vmem %s10, %s707
      %p709 = pneg %p321
      %p710 = pneg %p318
      %p711 = scmp.lt.s32.totalorder %s33, 1
      %s712 = scalar_select %p711, %s33, 1
      %s713 = smul.addr %s712, 4
      %s714 = smul.addr %s713, 4
      %s715 = scalar_lea.vmem %s11, %s714
      %p716 = pneg %p347
      %p717 = pneg %p344
      %p718 = scmp.lt.s32.totalorder %s33, 1
      %s719 = scalar_select %p718, %s33, 1
      %s720 = scalar_lea.vmem %s12, %s719
      %p721 = pneg %p373
      %p722 = pneg %p370
      %p723 = scmp.lt.s32.totalorder %s33, 1
      %s724 = scalar_select %p723, %s33, 1
      %s725 = smul.addr %s724, 8
      %s726 = smul.addr %s725, 4
      %s727 = scalar_lea.vmem %s13, %s726
      %p728 = pneg %p399
      %p729 = pneg %p396
      %p730 = scmp.lt.s32.totalorder %s33, 1
      %s731 = scalar_select %p730, %s33, 1
      %s732 = scalar_lea.vmem %s14, %s731
      %p733 = pneg %p425
      %p734 = pneg %p422
      %p735 = scmp.lt.s32.totalorder %s33, 1
      %s736 = scalar_select %p735, %s33, 1
      %s737 = scalar_lea.vmem %s15, %s736
      %p738 = pneg %p451
      %p739 = pneg %p448
      %p740 = scmp.lt.s32.totalorder %s33, 1
      %s741 = scalar_select %p740, %s33, 1
      %s742 = scalar_lea.vmem %s16, %s741
      %p743 = pneg %p477
      %p744 = pneg %p474
      %p745 = pneg %p503
      %p746 = pneg %p500
      %s747 = smul.u32 2, %s32
      %p748 = scmp.lt.s32.totalorder %s747, 1
      %s749 = scalar_select %p748, %s747, 1
      %s750 = smul.addr %s749, 8
      %s751 = scalar_lea.vmem %s17, %s750
      %s752 = smul.u32 2, %s32
      %p753 = scmp.lt.s32.totalorder %s752, 1
      %s754 = scalar_select %p753, %s752, 1
      %s755 = smul.addr %s754, 8
      %s756 = scalar_lea.vmem %s0, %s755
      %s757 = smul.u32 2, %s32
      %p758 = scmp.lt.s32.totalorder %s33, 1
      %s759 = scalar_select %p758, %s33, 1
      %s760 = smul.addr %s759, 4
      %s761 = smul.addr %s760, 4
      %s762 = scalar_lea.vmem %s1, %s761
      %p763 = scmp.lt.s32.totalorder %s33, 1
      %s764 = scalar_select %p763, %s33, 1
      %s765 = scalar_lea.vmem %s2, %s764
      %p766 = scmp.lt.s32.totalorder %s33, 1
      %s767 = scalar_select %p766, %s33, 1
      %s768 = smul.addr %s767, 4
      %s769 = smul.addr %s768, 4
      %s770 = scalar_lea.vmem %s3, %s769
      %p771 = scmp.lt.s32.totalorder %s33, 1
      %s772 = scalar_select %p771, %s33, 1
      %s773 = scalar_lea.vmem %s4, %s772
      %p774 = scmp.lt.s32.totalorder %s33, 1
      %s775 = scalar_select %p774, %s33, 1
      %s776 = smul.addr %s775, 4
      %s777 = smul.addr %s776, 4
      %s778 = scalar_lea.vmem %s5, %s777
      %p779 = scmp.lt.s32.totalorder %s33, 1
      %s780 = scalar_select %p779, %s33, 1
      %s781 = scalar_lea.vmem %s6, %s780
      %p782 = scmp.lt.s32.totalorder %s33, 1
      %s783 = scalar_select %p782, %s33, 1
      %s784 = smul.addr %s783, 4
      %s785 = smul.addr %s784, 4
      %s786 = scalar_lea.vmem %s7, %s785
      %p787 = scmp.lt.s32.totalorder %s33, 1
      %s788 = scalar_select %p787, %s33, 1
      %s789 = scalar_lea.vmem %s8, %s788
      %p790 = scmp.lt.s32.totalorder %s33, 1
      %s791 = scalar_select %p790, %s33, 1
      %s792 = scalar_lea.vmem %s9, %s791
      %p793 = scmp.lt.s32.totalorder %s33, 1
      %s794 = scalar_select %p793, %s33, 1
      %s795 = scalar_lea.vmem %s10, %s794
      %p796 = scmp.lt.s32.totalorder %s33, 1
      %s797 = scalar_select %p796, %s33, 1
      %s798 = smul.addr %s797, 4
      %s799 = smul.addr %s798, 4
      %s800 = scalar_lea.vmem %s11, %s799
      %p801 = scmp.lt.s32.totalorder %s33, 1
      %s802 = scalar_select %p801, %s33, 1
      %s803 = scalar_lea.vmem %s12, %s802
      %p804 = scmp.lt.s32.totalorder %s33, 1
      %s805 = scalar_select %p804, %s33, 1
      %s806 = smul.addr %s805, 8
      %s807 = smul.addr %s806, 4
      %s808 = scalar_lea.vmem %s13, %s807
      %p809 = scmp.lt.s32.totalorder %s33, 1
      %s810 = scalar_select %p809, %s33, 1
      %s811 = scalar_lea.vmem %s14, %s810
      %p812 = scmp.lt.s32.totalorder %s33, 1
      %s813 = scalar_select %p812, %s33, 1
      %s814 = scalar_lea.vmem %s15, %s813
      %p815 = scmp.lt.s32.totalorder %s33, 1
      %s816 = scalar_select %p815, %s33, 1
      %s817 = scalar_lea.vmem %s16, %s816
      %s818 = smul.u32 2, %s32
      %p819 = scmp.lt.s32.totalorder %s818, 1
      %s820 = scalar_select %p819, %s818, 1
      %s821 = smul.addr %s820, 8
      %s822 = scalar_lea.vmem %s17, %s821
      %s823 = smul.u32 2, %s32
      %p825 = scmp.eq.s32.totalorder %s33, 0
      // Predicated region
      $region89: #{transformer_forward.2} parent=87 // pred_check
        %p826 = pneg %p825
      $region90: #{transformer_forward.2} parent=87 // pred_check_branch
        %828 = sbr.rel (%p826) target = $region92
      $region91: #{transformer_forward.2} parent=87 // pred_region
        %v829 = vld [vmem:[%s756] sm:$0xff]
        %v830 = vld [vmem:[%s756 + $0x8] sm:$0xff]
        %vm831 = vcmask 261120
        %832 = vst.msk [vmem:[%s822] sm:$0xff] %vm831, %v829
        %833 = vst.msk [vmem:[%s822 + $0x8] sm:$0xff] %vm831, %v830
      $region92: #{transformer_forward.2} parent=87 // pred_fallthru
        _
      %v834 = vld [vmem:[%s822] sm:$0xff]
      %v835 = vld [vmem:[%s822 + $0x8] sm:$0xff]
      %v836 = vpack.c.bf16 %v835, %v834
      %v837 = vld [vmem:[%s762] sm:$0xf]
      %v838 = vld [vmem:[%s762 + $0x4] sm:$0xf]
      %v839 = vld [vmem:[%s762 + $0x8] sm:$0xf]
      %v840 = vld [vmem:[%s762 + $0xc] sm:$0xf]
      %v841 = vld [vmem:[%s765] sm:$0x1]
      %v843 = vperm.slane %v841, 0
      %v849 = vunpack.c.l.b16 %v837
      %v850 = vunpack.c.l.b16 %v838
      %v851 = vunpack.c.l.b16 %v839
      %v852 = vunpack.c.l.b16 %v840
      %v853 = vpack.c.b16 %v850, %v849
      %v854 = vpack.c.b16 %v852, %v851
      %vm857 = vcmask 261120
      %v859 = vsel %vm857, %v836, 0
      %861 = vmatpush.bf16.msra.mxu0 0
      %862 = vmatpush.bf16.msra.mxu0 0
      %863 = vmatpush.bf16.msra.mxu0 0
      %864 = vmatpush.bf16.msra.mxu0 0
      %865 = vmatpush.bf16.msra.mxu0 0
      %866 = vmatpush.bf16.msra.mxu0 0
      %867 = vmatpush.bf16.msra.mxu0 %v854
      %868 = vmatpush.bf16.msra.mxu0 %v853
      %869 = vmatmul.bf16.gmra.mxu0 %v859
      %v870 = vpop.f32.mrf.mxu0
      %v871 = vadd.f32 %v843, %v870
      %v872 = vpop.f32.mrf.mxu0
      %v873 = vadd.f32 %v843, %v872
      %874 = vdwg.mxu0
      %v875 = vld [vmem:[%s770] sm:$0xf]
      %v876 = vld [vmem:[%s770 + $0x4] sm:$0xf]
      %v877 = vld [vmem:[%s770 + $0x8] sm:$0xf]
      %v878 = vld [vmem:[%s770 + $0xc] sm:$0xf]
      %v879 = vld [vmem:[%s773] sm:$0x1]
      %v881 = vperm.slane %v879, 0
      %v887 = vunpack.c.l.b16 %v875
      %v888 = vunpack.c.l.b16 %v876
      %v889 = vunpack.c.l.b16 %v877
      %v890 = vunpack.c.l.b16 %v878
      %v891 = vpack.c.b16 %v888, %v887
      %v892 = vpack.c.b16 %v890, %v889
      %895 = vmatpush.bf16.msra.mxu0 0
      %896 = vmatpush.bf16.msra.mxu0 0
      %897 = vmatpush.bf16.msra.mxu0 0
      %898 = vmatpush.bf16.msra.mxu0 0
      %899 = vmatpush.bf16.msra.mxu0 0
      %900 = vmatpush.bf16.msra.mxu0 0
      %901 = vmatpush.bf16.msra.mxu0 %v892
      %902 = vmatpush.bf16.msra.mxu0 %v891
      %903 = vmatmul.bf16.gmra.mxu0 %v859
      %v904 = vpop.f32.mrf.mxu0
      %v905 = vadd.f32 %v881, %v904
      %v906 = vpop.f32.mrf.mxu0
      %v907 = vadd.f32 %v881, %v906
      %908 = vdwg.mxu0
      %v909 = vld [vmem:[%s778] sm:$0xf]
      %v910 = vld [vmem:[%s778 + $0x4] sm:$0xf]
      %v911 = vld [vmem:[%s778 + $0x8] sm:$0xf]
      %v912 = vld [vmem:[%s778 + $0xc] sm:$0xf]
      %v913 = vld [vmem:[%s781] sm:$0x1]
      %v915 = vperm.slane %v913, 0
      %v921 = vunpack.c.l.b16 %v909
      %v922 = vunpack.c.l.b16 %v910
      %v923 = vunpack.c.l.b16 %v911
      %v924 = vunpack.c.l.b16 %v912
      %v925 = vpack.c.b16 %v922, %v921
      %v926 = vpack.c.b16 %v924, %v923
      %929 = vmatpush.bf16.msra.mxu0 0
      %930 = vmatpush.bf16.msra.mxu0 0
      %931 = vmatpush.bf16.msra.mxu0 0
      %932 = vmatpush.bf16.msra.mxu0 0
      %933 = vmatpush.bf16.msra.mxu0 0
      %934 = vmatpush.bf16.msra.mxu0 0
      %935 = vmatpush.bf16.msra.mxu0 %v926
      %936 = vmatpush.bf16.msra.mxu0 %v925
      %937 = vmatmul.bf16.gmra.mxu0 %v859
      %v938 = vpop.f32.mrf.mxu0
      %v939 = vadd.f32 %v915, %v938
      %v940 = vpop.f32.mrf.mxu0
      %v941 = vadd.f32 %v915, %v940
      %942 = vdwg.mxu0
      %v943 = vld [vmem:[%s786] sm:$0xf]
      %v944 = vld [vmem:[%s786 + $0x4] sm:$0xf]
      %v945 = vld [vmem:[%s786 + $0x8] sm:$0xf]
      %v946 = vld [vmem:[%s786 + $0xc] sm:$0xf]
      %v947 = vld [vmem:[%s789] sm:$0x1]
      %v948 = vmul.f32 %v871, 0.35355338
      %v949 = vmul.f32 %v873, 0.35355338
      %v950 = vpack.c.bf16 %v948, %v948
      %v951 = vpack.c.bf16 %v949, %v949
      %v952 = vpack.c.bf16 %v905, %v905
      %v953 = vpack.c.bf16 %v907, %v907
      %v954 = vpack.c.bf16 %v939, %v939
      %v955 = vpack.c.bf16 %v941, %v941
      %vm956 = vcmask 64512
      %v958 = vsel %vm956, %v950, 0
      %v961 = vsel %vm956, %v952, 0
      %963 = vmatpush.bf16.xpose.msra.mxu0 0
      %964 = vmatpush.bf16.xpose.msra.mxu0 0
      %965 = vmatpush.bf16.xpose.msra.mxu0 0
      %966 = vmatpush.bf16.xpose.msra.mxu0 0
      %967 = vmatpush.bf16.xpose.msra.mxu0 0
      %968 = vmatpush.bf16.xpose.msra.mxu0 0
      %969 = vmatpush.bf16.xpose.msra.mxu0 0
      %970 = vmatpush.bf16.xpose.msra.mxu0 %v961
      %971 = vmatmul.bf16.gmra.mxu0 %v958
      %v972 = vpop.f32.mrf.mxu0
      %v973 = vadd.f32 0.0, %v972
      %v974 = vpop.f32.mrf.mxu0
      %975 = vdwg.mxu0
      %v977 = vsel %vm956, %v951, 0
      %v980 = vsel %vm956, %v953, 0
      %982 = vmatpush.bf16.xpose.msra.mxu0 0
      %983 = vmatpush.bf16.xpose.msra.mxu0 0
      %984 = vmatpush.bf16.xpose.msra.mxu0 0
      %985 = vmatpush.bf16.xpose.msra.mxu0 0
      %986 = vmatpush.bf16.xpose.msra.mxu0 0
      %987 = vmatpush.bf16.xpose.msra.mxu0 0
      %988 = vmatpush.bf16.xpose.msra.mxu0 0
      %989 = vmatpush.bf16.xpose.msra.mxu0 %v980
      %990 = vmatmul.bf16.gmra.mxu0 %v977
      %v991 = vpop.f32.mrf.mxu0
      %v992 = vadd.f32 0.0, %v991
      %v993 = vpop.f32.mrf.mxu0
      %994 = vdwg.mxu0
      %v995 = vsel %vm956, %v973, -inf
      %996 = vmax.xlane.f32.xlu0 %v995
      %v997 = vpop.xlane.xlu0 %996
      %v998 = vsel %vm956, %v992, -inf
      %999 = vmax.xlane.f32.xlu0 %v998
      %v1000 = vpop.xlane.xlu0 %999
      %v1001 = vsub.f32 %v973, %v997
      %v1002 = vsub.f32 %v992, %v1000
      %v1003 = vmul.f32 %v1001, 1.442695
      %v1004 = vpow.pop %v1003
      %v1005 = vmul.f32 %v1002, 1.442695
      %v1006 = vpow.pop %v1005
      %v1007 = vsel %vm956, %v1004, 0.0
      %1008 = vadd.xlane.f32.xlu0 %v1007
      %v1009 = vpop.xlane.xlu0 %1008
      %v1010 = vsel %vm956, %v1006, 0.0
      %1011 = vadd.xlane.f32.xlu0 %v1010
      %v1012 = vpop.xlane.xlu0 %1011
      %v1013 = vrcp.pop %v1009
      %v1014 = vrcp.pop %v1012
      %v1015 = vmul.f32 %v1004, %v1013
      %v1016 = vmul.f32 %v1006, %v1014
      %v1017 = vpack.c.bf16 %v1015, %v1015
      %v1018 = vpack.c.bf16 %v1016, %v1016
      %v1020 = vsel %vm956, %v1017, 0
      %vm1022 = vcmask 1043456
      %v1024 = vsel %vm1022, %v954, 0
      %1026 = vmatpush.bf16.msra.mxu0 0
      %1027 = vmatpush.bf16.msra.mxu0 0
      %1028 = vmatpush.bf16.msra.mxu0 0
      %1029 = vmatpush.bf16.msra.mxu0 0
      %1030 = vmatpush.bf16.msra.mxu0 0
      %1031 = vmatpush.bf16.msra.mxu0 0
      %1032 = vmatpush.bf16.msra.mxu0 0
      %1033 = vmatpush.bf16.msra.mxu0 %v1024
      %1034 = vmatmul.bf16.gmra.mxu0 %v1020
      %v1035 = vpop.f32.mrf.mxu0
      %v1036 = vadd.f32 0.0, %v1035
      %v1037 = vpop.f32.mrf.mxu0
      %1038 = vdwg.mxu0
      %v1040 = vsel %vm956, %v1018, 0
      %v1043 = vsel %vm1022, %v955, 0
      %1045 = vmatpush.bf16.msra.mxu0 0
      %1046 = vmatpush.bf16.msra.mxu0 0
      %1047 = vmatpush.bf16.msra.mxu0 0
      %1048 = vmatpush.bf16.msra.mxu0 0
      %1049 = vmatpush.bf16.msra.mxu0 0
      %1050 = vmatpush.bf16.msra.mxu0 0
      %1051 = vmatpush.bf16.msra.mxu0 0
      %1052 = vmatpush.bf16.msra.mxu0 %v1043
      %1053 = vmatmul.bf16.gmra.mxu0 %v1040
      %v1054 = vpop.f32.mrf.mxu0
      %v1055 = vadd.f32 0.0, %v1054
      %v1056 = vpop.f32.mrf.mxu0
      %1057 = vdwg.mxu0
      %v1059 = vunpack.c.l.b16 %v950
      %v1060 = vpack.c.b16 %v1059, %v1059
      %1061 = vrot.lane.b32.xlu0 %v1060, 120
      %v1062 = vpop.permute.xlu0 %1061
      %v1064 = vunpack.c.l.b16 %v952
      %v1065 = vpack.c.b16 %v1064, %v1064
      %1066 = vrot.lane.b32.xlu0 %v1065, 120
      %v1067 = vpop.permute.xlu0 %1066
      %v1069 = vsel %vm956, %v1062, 0
      %v1072 = vsel %vm956, %v1067, 0
      %1074 = vmatpush.bf16.xpose.msra.mxu0 0
      %1075 = vmatpush.bf16.xpose.msra.mxu0 0
      %1076 = vmatpush.bf16.xpose.msra.mxu0 0
      %1077 = vmatpush.bf16.xpose.msra.mxu0 0
      %1078 = vmatpush.bf16.xpose.msra.mxu0 0
      %1079 = vmatpush.bf16.xpose.msra.mxu0 0
      %1080 = vmatpush.bf16.xpose.msra.mxu0 0
      %1081 = vmatpush.bf16.xpose.msra.mxu0 %v1072
      %1082 = vmatmul.bf16.gmra.mxu0 %v1069
      %v1083 = vpop.f32.mrf.mxu0
      %v1084 = vadd.f32 0.0, %v1083
      %v1085 = vpop.f32.mrf.mxu0
      %1086 = vdwg.mxu0
      %v1088 = vunpack.c.l.b16 %v951
      %v1089 = vpack.c.b16 %v1088, %v1088
      %1090 = vrot.lane.b32.xlu0 %v1089, 120
      %v1091 = vpop.permute.xlu0 %1090
      %v1093 = vunpack.c.l.b16 %v953
      %v1094 = vpack.c.b16 %v1093, %v1093
      %1095 = vrot.lane.b32.xlu0 %v1094, 120
      %v1096 = vpop.permute.xlu0 %1095
      %v1098 = vsel %vm956, %v1091, 0
      %v1101 = vsel %vm956, %v1096, 0
      %1103 = vmatpush.bf16.xpose.msra.mxu0 0
      %1104 = vmatpush.bf16.xpose.msra.mxu0 0
      %1105 = vmatpush.bf16.xpose.msra.mxu0 0
      %1106 = vmatpush.bf16.xpose.msra.mxu0 0
      %1107 = vmatpush.bf16.xpose.msra.mxu0 0
      %1108 = vmatpush.bf16.xpose.msra.mxu0 0
      %1109 = vmatpush.bf16.xpose.msra.mxu0 0
      %1110 = vmatpush.bf16.xpose.msra.mxu0 %v1101
      %1111 = vmatmul.bf16.gmra.mxu0 %v1098
      %v1112 = vpop.f32.mrf.mxu0
      %v1113 = vadd.f32 0.0, %v1112
      %v1114 = vpop.f32.mrf.mxu0
      %1115 = vdwg.mxu0
      %v1116 = vsel %vm956, %v1084, -inf
      %1117 = vmax.xlane.f32.xlu0 %v1116
      %v1118 = vpop.xlane.xlu0 %1117
      %v1119 = vsel %vm956, %v1113, -inf
      %1120 = vmax.xlane.f32.xlu0 %v1119
      %v1121 = vpop.xlane.xlu0 %1120
      %v1122 = vsub.f32 %v1084, %v1118
      %v1123 = vsub.f32 %v1113, %v1121
      %v1124 = vmul.f32 %v1122, 1.442695
      %v1125 = vpow.pop %v1124
      %v1126 = vmul.f32 %v1123, 1.442695
      %v1127 = vpow.pop %v1126
      %v1128 = vsel %vm956, %v1125, 0.0
      %1129 = vadd.xlane.f32.xlu0 %v1128
      %v1130 = vpop.xlane.xlu0 %1129
      %v1131 = vsel %vm956, %v1127, 0.0
      %1132 = vadd.xlane.f32.xlu0 %v1131
      %v1133 = vpop.xlane.xlu0 %1132
      %v1134 = vrcp.pop %v1130
      %v1135 = vrcp.pop %v1133
      %v1136 = vmul.f32 %v1125, %v1134
      %v1137 = vmul.f32 %v1127, %v1135
      %v1138 = vpack.c.bf16 %v1136, %v1136
      %v1139 = vpack.c.bf16 %v1137, %v1137
      %v1141 = vunpack.c.l.b16 %v954
      %v1142 = vpack.c.b16 %v1141, %v1141
      %1143 = vrot.lane.b32.xlu0 %v1142, 120
      %v1144 = vpop.permute.xlu0 %1143
      %v1146 = vsel %vm956, %v1138, 0
      %v1149 = vsel %vm1022, %v1144, 0
      %1151 = vmatpush.bf16.msra.mxu0 0
      %1152 = vmatpush.bf16.msra.mxu0 0
      %1153 = vmatpush.bf16.msra.mxu0 0
      %1154 = vmatpush.bf16.msra.mxu0 0
      %1155 = vmatpush.bf16.msra.mxu0 0
      %1156 = vmatpush.bf16.msra.mxu0 0
      %1157 = vmatpush.bf16.msra.mxu0 0
      %1158 = vmatpush.bf16.msra.mxu0 %v1149
      %1159 = vmatmul.bf16.gmra.mxu0 %v1146
      %v1160 = vpop.f32.mrf.mxu0
      %v1161 = vadd.f32 0.0, %v1160
      %v1162 = vpop.f32.mrf.mxu0
      %1163 = vdwg.mxu0
      %v1165 = vunpack.c.l.b16 %v955
      %v1166 = vpack.c.b16 %v1165, %v1165
      %1167 = vrot.lane.b32.xlu0 %v1166, 120
      %v1168 = vpop.permute.xlu0 %1167
      %v1170 = vsel %vm956, %v1139, 0
      %v1173 = vsel %vm1022, %v1168, 0
      %1175 = vmatpush.bf16.msra.mxu0 0
      %1176 = vmatpush.bf16.msra.mxu0 0
      %1177 = vmatpush.bf16.msra.mxu0 0
      %1178 = vmatpush.bf16.msra.mxu0 0
      %1179 = vmatpush.bf16.msra.mxu0 0
      %1180 = vmatpush.bf16.msra.mxu0 0
      %1181 = vmatpush.bf16.msra.mxu0 0
      %1182 = vmatpush.bf16.msra.mxu0 %v1173
      %1183 = vmatmul.bf16.gmra.mxu0 %v1170
      %v1184 = vpop.f32.mrf.mxu0
      %v1185 = vadd.f32 0.0, %v1184
      %v1186 = vpop.f32.mrf.mxu0
      %1187 = vdwg.mxu0
      %1188 = vrot.lane.b32.xlu0 %v1060, 112
      %v1189 = vpop.permute.xlu0 %1188
      %1190 = vrot.lane.b32.xlu0 %v1065, 112
      %v1191 = vpop.permute.xlu0 %1190
      %v1193 = vsel %vm956, %v1189, 0
      %v1196 = vsel %vm956, %v1191, 0
      %1198 = vmatpush.bf16.xpose.msra.mxu0 0
      %1199 = vmatpush.bf16.xpose.msra.mxu0 0
      %1200 = vmatpush.bf16.xpose.msra.mxu0 0
      %1201 = vmatpush.bf16.xpose.msra.mxu0 0
      %1202 = vmatpush.bf16.xpose.msra.mxu0 0
      %1203 = vmatpush.bf16.xpose.msra.mxu0 0
      %1204 = vmatpush.bf16.xpose.msra.mxu0 0
      %1205 = vmatpush.bf16.xpose.msra.mxu0 %v1196
      %1206 = vmatmul.bf16.gmra.mxu0 %v1193
      %v1207 = vpop.f32.mrf.mxu0
      %v1208 = vadd.f32 0.0, %v1207
      %v1209 = vpop.f32.mrf.mxu0
      %1210 = vdwg.mxu0
      %1211 = vrot.lane.b32.xlu0 %v1089, 112
      %v1212 = vpop.permute.xlu0 %1211
      %1213 = vrot.lane.b32.xlu0 %v1094, 112
      %v1214 = vpop.permute.xlu0 %1213
      %v1216 = vsel %vm956, %v1212, 0
      %v1219 = vsel %vm956, %v1214, 0
      %1221 = vmatpush.bf16.xpose.msra.mxu0 0
      %1222 = vmatpush.bf16.xpose.msra.mxu0 0
      %1223 = vmatpush.bf16.xpose.msra.mxu0 0
      %1224 = vmatpush.bf16.xpose.msra.mxu0 0
      %1225 = vmatpush.bf16.xpose.msra.mxu0 0
      %1226 = vmatpush.bf16.xpose.msra.mxu0 0
      %1227 = vmatpush.bf16.xpose.msra.mxu0 0
      %1228 = vmatpush.bf16.xpose.msra.mxu0 %v1219
      %1229 = vmatmul.bf16.gmra.mxu0 %v1216
      %v1230 = vpop.f32.mrf.mxu0
      %v1231 = vadd.f32 0.0, %v1230
      %v1232 = vpop.f32.mrf.mxu0
      %1233 = vdwg.mxu0
      %v1234 = vsel %vm956, %v1208, -inf
      %1235 = vmax.xlane.f32.xlu0 %v1234
      %v1236 = vpop.xlane.xlu0 %1235
      %v1237 = vsel %vm956, %v1231, -inf
      %1238 = vmax.xlane.f32.xlu0 %v1237
      %v1239 = vpop.xlane.xlu0 %1238
      %v1240 = vsub.f32 %v1208, %v1236
      %v1241 = vsub.f32 %v1231, %v1239
      %v1242 = vmul.f32 %v1240, 1.442695
      %v1243 = vpow.pop %v1242
      %v1244 = vmul.f32 %v1241, 1.442695
      %v1245 = vpow.pop %v1244
      %v1246 = vsel %vm956, %v1243, 0.0
      %1247 = vadd.xlane.f32.xlu0 %v1246
      %v1248 = vpop.xlane.xlu0 %1247
      %v1249 = vsel %vm956, %v1245, 0.0
      %1250 = vadd.xlane.f32.xlu0 %v1249
      %v1251 = vpop.xlane.xlu0 %1250
      %v1252 = vrcp.pop %v1248
      %v1253 = vrcp.pop %v1251
      %v1254 = vmul.f32 %v1243, %v1252
      %v1255 = vmul.f32 %v1245, %v1253
      %v1256 = vpack.c.bf16 %v1254, %v1254
      %v1257 = vpack.c.bf16 %v1255, %v1255
      %1258 = vrot.lane.b32.xlu0 %v1142, 112
      %v1259 = vpop.permute.xlu0 %1258
      %v1261 = vsel %vm956, %v1256, 0
      %v1264 = vsel %vm1022, %v1259, 0
      %1266 = vmatpush.bf16.msra.mxu0 0
      %1267 = vmatpush.bf16.msra.mxu0 0
      %1268 = vmatpush.bf16.msra.mxu0 0
      %1269 = vmatpush.bf16.msra.mxu0 0
      %1270 = vmatpush.bf16.msra.mxu0 0
      %1271 = vmatpush.bf16.msra.mxu0 0
      %1272 = vmatpush.bf16.msra.mxu0 0
      %1273 = vmatpush.bf16.msra.mxu0 %v1264
      %1274 = vmatmul.bf16.gmra.mxu0 %v1261
      %v1275 = vpop.f32.mrf.mxu0
      %v1276 = vadd.f32 0.0, %v1275
      %v1277 = vpop.f32.mrf.mxu0
      %1278 = vdwg.mxu0
      %1279 = vrot.lane.b32.xlu0 %v1166, 112
      %v1280 = vpop.permute.xlu0 %1279
      %v1282 = vsel %vm956, %v1257, 0
      %v1285 = vsel %vm1022, %v1280, 0
      %1287 = vmatpush.bf16.msra.mxu0 0
      %1288 = vmatpush.bf16.msra.mxu0 0
      %1289 = vmatpush.bf16.msra.mxu0 0
      %1290 = vmatpush.bf16.msra.mxu0 0
      %1291 = vmatpush.bf16.msra.mxu0 0
      %1292 = vmatpush.bf16.msra.mxu0 0
      %1293 = vmatpush.bf16.msra.mxu0 0
      %1294 = vmatpush.bf16.msra.mxu0 %v1285
      %1295 = vmatmul.bf16.gmra.mxu0 %v1282
      %v1296 = vpop.f32.mrf.mxu0
      %v1297 = vadd.f32 0.0, %v1296
      %v1298 = vpop.f32.mrf.mxu0
      %1299 = vdwg.mxu0
      %1300 = vrot.lane.b32.xlu0 %v1060, 104
      %v1301 = vpop.permute.xlu0 %1300
      %1302 = vrot.lane.b32.xlu0 %v1065, 104
      %v1303 = vpop.permute.xlu0 %1302
      %v1305 = vsel %vm956, %v1301, 0
      %v1308 = vsel %vm956, %v1303, 0
      %1310 = vmatpush.bf16.xpose.msra.mxu0 0
      %1311 = vmatpush.bf16.xpose.msra.mxu0 0
      %1312 = vmatpush.bf16.xpose.msra.mxu0 0
      %1313 = vmatpush.bf16.xpose.msra.mxu0 0
      %1314 = vmatpush.bf16.xpose.msra.mxu0 0
      %1315 = vmatpush.bf16.xpose.msra.mxu0 0
      %1316 = vmatpush.bf16.xpose.msra.mxu0 0
      %1317 = vmatpush.bf16.xpose.msra.mxu0 %v1308
      %1318 = vmatmul.bf16.gmra.mxu0 %v1305
      %v1319 = vpop.f32.mrf.mxu0
      %v1320 = vadd.f32 0.0, %v1319
      %v1321 = vpop.f32.mrf.mxu0
      %1322 = vdwg.mxu0
      %1323 = vrot.lane.b32.xlu0 %v1089, 104
      %v1324 = vpop.permute.xlu0 %1323
      %1325 = vrot.lane.b32.xlu0 %v1094, 104
      %v1326 = vpop.permute.xlu0 %1325
      %v1328 = vsel %vm956, %v1324, 0
      %v1331 = vsel %vm956, %v1326, 0
      %1333 = vmatpush.bf16.xpose.msra.mxu0 0
      %1334 = vmatpush.bf16.xpose.msra.mxu0 0
      %1335 = vmatpush.bf16.xpose.msra.mxu0 0
      %1336 = vmatpush.bf16.xpose.msra.mxu0 0
      %1337 = vmatpush.bf16.xpose.msra.mxu0 0
      %1338 = vmatpush.bf16.xpose.msra.mxu0 0
      %1339 = vmatpush.bf16.xpose.msra.mxu0 0
      %1340 = vmatpush.bf16.xpose.msra.mxu0 %v1331
      %1341 = vmatmul.bf16.gmra.mxu0 %v1328
      %v1342 = vpop.f32.mrf.mxu0
      %v1343 = vadd.f32 0.0, %v1342
      %v1344 = vpop.f32.mrf.mxu0
      %1345 = vdwg.mxu0
      %v1346 = vsel %vm956, %v1320, -inf
      %1347 = vmax.xlane.f32.xlu0 %v1346
      %v1348 = vpop.xlane.xlu0 %1347
      %v1349 = vsel %vm956, %v1343, -inf
      %1350 = vmax.xlane.f32.xlu0 %v1349
      %v1351 = vpop.xlane.xlu0 %1350
      %v1352 = vsub.f32 %v1320, %v1348
      %v1353 = vsub.f32 %v1343, %v1351
      %v1354 = vmul.f32 %v1352, 1.442695
      %v1355 = vpow.pop %v1354
      %v1356 = vmul.f32 %v1353, 1.442695
      %v1357 = vpow.pop %v1356
      %v1358 = vsel %vm956, %v1355, 0.0
      %1359 = vadd.xlane.f32.xlu0 %v1358
      %v1360 = vpop.xlane.xlu0 %1359
      %v1361 = vsel %vm956, %v1357, 0.0
      %1362 = vadd.xlane.f32.xlu0 %v1361
      %v1363 = vpop.xlane.xlu0 %1362
      %v1364 = vrcp.pop %v1360
      %v1365 = vrcp.pop %v1363
      %v1366 = vmul.f32 %v1355, %v1364
      %v1367 = vmul.f32 %v1357, %v1365
      %v1368 = vpack.c.bf16 %v1366, %v1366
      %v1369 = vpack.c.bf16 %v1367, %v1367
      %1370 = vrot.lane.b32.xlu0 %v1142, 104
      %v1371 = vpop.permute.xlu0 %1370
      %v1373 = vsel %vm956, %v1368, 0
      %v1376 = vsel %vm1022, %v1371, 0
      %1378 = vmatpush.bf16.msra.mxu0 0
      %1379 = vmatpush.bf16.msra.mxu0 0
      %1380 = vmatpush.bf16.msra.mxu0 0
      %1381 = vmatpush.bf16.msra.mxu0 0
      %1382 = vmatpush.bf16.msra.mxu0 0
      %1383 = vmatpush.bf16.msra.mxu0 0
      %1384 = vmatpush.bf16.msra.mxu0 0
      %1385 = vmatpush.bf16.msra.mxu0 %v1376
      %1386 = vmatmul.bf16.gmra.mxu0 %v1373
      %v1387 = vpop.f32.mrf.mxu0
      %v1388 = vadd.f32 0.0, %v1387
      %v1389 = vpop.f32.mrf.mxu0
      %1390 = vdwg.mxu0
      %1391 = vrot.lane.b32.xlu0 %v1166, 104
      %v1392 = vpop.permute.xlu0 %1391
      %v1394 = vsel %vm956, %v1369, 0
      %v1397 = vsel %vm1022, %v1392, 0
      %1399 = vmatpush.bf16.msra.mxu0 0
      %1400 = vmatpush.bf16.msra.mxu0 0
      %1401 = vmatpush.bf16.msra.mxu0 0
      %1402 = vmatpush.bf16.msra.mxu0 0
      %1403 = vmatpush.bf16.msra.mxu0 0
      %1404 = vmatpush.bf16.msra.mxu0 0
      %1405 = vmatpush.bf16.msra.mxu0 0
      %1406 = vmatpush.bf16.msra.mxu0 %v1397
      %1407 = vmatmul.bf16.gmra.mxu0 %v1394
      %v1408 = vpop.f32.mrf.mxu0
      %v1409 = vadd.f32 0.0, %v1408
      %v1410 = vpop.f32.mrf.mxu0
      %1411 = vdwg.mxu0
      %1414 = vrot.lane.b32.xlu0 %v1161, 8
      %v1415 = vpop.permute.xlu0 %1414
      %1416 = vrot.lane.b32.xlu0 %v1185, 8
      %v1417 = vpop.permute.xlu0 %1416
      %1422 = vrot.lane.b32.xlu0 %v1276, 16
      %v1423 = vpop.permute.xlu0 %1422
      %1424 = vrot.lane.b32.xlu0 %v1297, 16
      %v1425 = vpop.permute.xlu0 %1424
      %1430 = vrot.lane.b32.xlu0 %v1388, 24
      %v1431 = vpop.permute.xlu0 %1430
      %1432 = vrot.lane.b32.xlu0 %v1409, 24
      %v1433 = vpop.permute.xlu0 %1432
      %v1436 = vsel %vm956, %v1036, %v1415
      %v1437 = vsel %vm956, %v1055, %v1417
      %vm1438 = vcmask 130048
      %v1439 = vsel %vm1438, %v1436, %v1423
      %v1440 = vsel %vm1438, %v1437, %v1425
      %vm1441 = vcmask 195584
      %v1442 = vsel %vm1441, %v1439, %v1431
      %v1443 = vsel %vm1441, %v1440, %v1433
      %v1444 = vpack.c.bf16 %v1443, %v1442
      %v1446 = vperm.slane %v947, 0
      %v1452 = vunpack.c.l.b16 %v943
      %v1453 = vunpack.c.l.b16 %v944
      %v1454 = vunpack.c.l.b16 %v945
      %v1455 = vunpack.c.l.b16 %v946
      %v1456 = vpack.c.b16 %v1453, %v1452
      %v1457 = vpack.c.b16 %v1455, %v1454
      %v1461 = vsel %vm857, %v1444, 0
      %1463 = vmatpush.bf16.msra.mxu0 0
      %1464 = vmatpush.bf16.msra.mxu0 0
      %1465 = vmatpush.bf16.msra.mxu0 0
      %1466 = vmatpush.bf16.msra.mxu0 0
      %1467 = vmatpush.bf16.msra.mxu0 0
      %1468 = vmatpush.bf16.msra.mxu0 0
      %1469 = vmatpush.bf16.msra.mxu0 %v1457
      %1470 = vmatpush.bf16.msra.mxu0 %v1456
      %1471 = vmatmul.bf16.gmra.mxu0 %v1461
      %v1472 = vpop.f32.mrf.mxu0
      %v1473 = vadd.f32 %v1446, %v1472
      %v1474 = vpop.f32.mrf.mxu0
      %v1475 = vadd.f32 %v1446, %v1474
      %1476 = vdwg.mxu0
      %v1477 = vadd.f32 %v834, %v1473
      %v1478 = vadd.f32 %v835, %v1475
      %v1479 = vld [vmem:[%s792] sm:$0x1]
      %v1480 = vld [vmem:[%s795] sm:$0x1]
      %v1481 = vsel %vm857, %v1477, 0.0
      %1482 = vadd.xlane.f32.xlu0 %v1481
      %v1483 = vpop.xlane.xlu0 %1482
      %v1484 = vsel %vm857, %v1478, 0.0
      %1485 = vadd.xlane.f32.xlu0 %v1484
      %v1486 = vpop.xlane.xlu0 %1485
      %v1487 = vrcp.pop 32.0
      %v1488 = vmul.f32 32.0, %v1487
      %v1489 = vsub.f32 1.0, %v1488
      %v1490 = vmul.f32 %v1487, %v1489
      %v1491 = vadd.f32 %v1487, %v1490
      %vm1492 = vweird.f32 %v1487
      %v1493 = vsel %vm1492, %v1487, %v1491
      %v1494 = vmul.f32 %v1483, %v1493
      %v1495 = vmul.f32 %v1486, %v1493
      %v1496 = vsub.f32 %v1477, %v1494
      %v1497 = vsub.f32 %v1478, %v1495
      %v1498 = vmul.f32 %v1496, %v1496
      %v1499 = vmul.f32 %v1497, %v1497
      %v1500 = vsel %vm857, %v1498, 0.0
      %1501 = vadd.xlane.f32.xlu0 %v1500
      %v1502 = vpop.xlane.xlu0 %1501
      %v1503 = vsel %vm857, %v1499, 0.0
      %1504 = vadd.xlane.f32.xlu0 %v1503
      %v1505 = vpop.xlane.xlu0 %1504
      %v1506 = vmul.f32 %v1502, %v1493
      %v1507 = vmul.f32 %v1505, %v1493
      %v1508 = vadd.f32 %v1506, 1e-05
      %v1509 = vadd.f32 %v1507, 1e-05
      %v1510 = vrsqrt.pop %v1508
      %v1511 = vmul.f32 %v1510, %v1508
      %v1512 = vmul.f32 %v1511, %v1510
      %v1513 = vmul.f32 0.5, %v1512
      %v1514 = vsub.f32 1.5, %v1513
      %v1515 = vmul.f32 %v1510, %v1514
      %vm1516 = vweird.f32 %v1508
      %vm1517 = vweird.f32 %v1510
      %vm1518 = vmor %vm1516, %vm1517
      %v1519 = vsel %vm1518, %v1510, %v1515
      %v1520 = vrsqrt.pop %v1509
      %v1521 = vmul.f32 %v1520, %v1509
      %v1522 = vmul.f32 %v1521, %v1520
      %v1523 = vmul.f32 0.5, %v1522
      %v1524 = vsub.f32 1.5, %v1523
      %v1525 = vmul.f32 %v1520, %v1524
      %vm1526 = vweird.f32 %v1509
      %vm1527 = vweird.f32 %v1520
      %vm1528 = vmor %vm1526, %vm1527
      %v1529 = vsel %vm1528, %v1520, %v1525
      %v1530 = vmul.f32 %v1496, %v1519
      %v1531 = vmul.f32 %v1497, %v1529
      %v1533 = vperm.slane %v1479, 0
      %v1535 = vmul.f32 %v1530, %v1533
      %v1536 = vmul.f32 %v1531, %v1533
      %v1538 = vperm.slane %v1480, 0
      %v1540 = vadd.f32 %v1535, %v1538
      %v1541 = vadd.f32 %v1536, %v1538
      %v1542 = vpack.c.bf16 %v1541, %v1540
      %v1543 = vld [vmem:[%s800] sm:$0xf]
      %v1544 = vld [vmem:[%s800 + $0x4] sm:$0xf]
      %v1545 = vld [vmem:[%s800 + $0x8] sm:$0xf]
      %v1546 = vld [vmem:[%s800 + $0xc] sm:$0xf]
      %v1547 = vld [vmem:[%s803] sm:$0x1]
      %v1549 = vperm.slane %v1547, 0
      %v1555 = vunpack.c.l.b16 %v1543
      %v1556 = vunpack.c.l.b16 %v1544
      %v1557 = vunpack.c.l.b16 %v1545
      %v1558 = vunpack.c.l.b16 %v1546
      %v1559 = vpack.c.b16 %v1556, %v1555
      %v1560 = vpack.c.b16 %v1558, %v1557
      %v1564 = vsel %vm857, %v1542, 0
      %1566 = vmatpush.bf16.msra.mxu0 0
      %1567 = vmatpush.bf16.msra.mxu0 0
      %1568 = vmatpush.bf16.msra.mxu0 0
      %1569 = vmatpush.bf16.msra.mxu0 0
      %1570 = vmatpush.bf16.msra.mxu0 0
      %1571 = vmatpush.bf16.msra.mxu0 0
      %1572 = vmatpush.bf16.msra.mxu0 %v1560
      %1573 = vmatpush.bf16.msra.mxu0 %v1559
      %1574 = vmatmul.bf16.gmra.mxu0 %v1564
      %v1575 = vpop.f32.mrf.mxu0
      %v1576 = vadd.f32 %v1549, %v1575
      %v1577 = vpop.f32.mrf.mxu0
      %v1578 = vadd.f32 %v1549, %v1577
      %1579 = vdwg.mxu0
      %v1580 = vmax.f32 %v1576, 0.0
      %v1581 = vmax.f32 %v1578, 0.0
      %v1582 = vpack.c.bf16 %v1581, %v1580
      %v1583 = vld [vmem:[%s808] sm:$0xf]
      %v1584 = vld [vmem:[%s808 + $0x4] sm:$0xf]
      %v1585 = vld [vmem:[%s808 + $0x8] sm:$0xf]
      %v1586 = vld [vmem:[%s808 + $0xc] sm:$0xf]
      %v1587 = vld [vmem:[%s808 + $0x10] sm:$0xf]
      %v1588 = vld [vmem:[%s808 + $0x14] sm:$0xf]
      %v1589 = vld [vmem:[%s808 + $0x18] sm:$0xf]
      %v1590 = vld [vmem:[%s808 + $0x1c] sm:$0xf]
      %v1591 = vld [vmem:[%s811] sm:$0x1]
      %v1593 = vperm.slane %v1591, 0
      %v1603 = vunpack.c.l.b16 %v1583
      %v1604 = vunpack.c.l.b16 %v1584
      %v1605 = vunpack.c.l.b16 %v1585
      %v1606 = vunpack.c.l.b16 %v1586
      %v1607 = vunpack.c.l.b16 %v1587
      %v1608 = vunpack.c.l.b16 %v1588
      %v1609 = vunpack.c.l.b16 %v1589
      %v1610 = vunpack.c.l.b16 %v1590
      %v1611 = vpack.c.b16 %v1604, %v1603
      %v1612 = vpack.c.b16 %v1606, %v1605
      %v1613 = vpack.c.b16 %v1608, %v1607
      %v1614 = vpack.c.b16 %v1610, %v1609
      %vm1619 = vcmask 523264
      %v1621 = vsel %vm1619, %v1582, 0
      %1623 = vmatpush.bf16.msra.mxu0 0
      %1624 = vmatpush.bf16.msra.mxu0 0
      %1625 = vmatpush.bf16.msra.mxu0 0
      %1626 = vmatpush.bf16.msra.mxu0 0
      %1627 = vmatpush.bf16.msra.mxu0 %v1614
      %1628 = vmatpush.bf16.msra.mxu0 %v1613
      %1629 = vmatpush.bf16.msra.mxu0 %v1612
      %1630 = vmatpush.bf16.msra.mxu0 %v1611
      %1631 = vmatmul.bf16.gmra.mxu0 %v1621
      %v1632 = vpop.f32.mrf.mxu0
      %v1633 = vadd.f32 %v1593, %v1632
      %v1634 = vpop.f32.mrf.mxu0
      %v1635 = vadd.f32 %v1593, %v1634
      %1636 = vdwg.mxu0
      %v1637 = vadd.f32 %v1540, %v1633
      %v1638 = vadd.f32 %v1541, %v1635
      %v1639 = vld [vmem:[%s814] sm:$0x1]
      %v1640 = vld [vmem:[%s817] sm:$0x1]
      %v1641 = vsel %vm857, %v1637, 0.0
      %1642 = vadd.xlane.f32.xlu0 %v1641
      %v1643 = vpop.xlane.xlu0 %1642
      %v1644 = vsel %vm857, %v1638, 0.0
      %1645 = vadd.xlane.f32.xlu0 %v1644
      %v1646 = vpop.xlane.xlu0 %1645
      %v1647 = vmul.f32 %v1643, %v1493
      %v1648 = vmul.f32 %v1646, %v1493
      %v1649 = vsub.f32 %v1637, %v1647
      %v1650 = vsub.f32 %v1638, %v1648
      %v1651 = vmul.f32 %v1649, %v1649
      %v1652 = vmul.f32 %v1650, %v1650
      %v1653 = vsel %vm857, %v1651, 0.0
      %1654 = vadd.xlane.f32.xlu0 %v1653
      %v1655 = vpop.xlane.xlu0 %1654
      %v1656 = vsel %vm857, %v1652, 0.0
      %1657 = vadd.xlane.f32.xlu0 %v1656
      %v1658 = vpop.xlane.xlu0 %1657
      %v1659 = vmul.f32 %v1655, %v1493
      %v1660 = vmul.f32 %v1658, %v1493
      %v1661 = vadd.f32 %v1659, 1e-05
      %v1662 = vadd.f32 %v1660, 1e-05
      %v1663 = vrsqrt.pop %v1661
      %v1664 = vmul.f32 %v1663, %v1661
      %v1665 = vmul.f32 %v1664, %v1663
      %v1666 = vmul.f32 0.5, %v1665
      %v1667 = vsub.f32 1.5, %v1666
      %v1668 = vmul.f32 %v1663, %v1667
      %vm1669 = vweird.f32 %v1661
      %vm1670 = vweird.f32 %v1663
      %vm1671 = vmor %vm1669, %vm1670
      %v1672 = vsel %vm1671, %v1663, %v1668
      %v1673 = vrsqrt.pop %v1662
      %v1674 = vmul.f32 %v1673, %v1662
      %v1675 = vmul.f32 %v1674, %v1673
      %v1676 = vmul.f32 0.5, %v1675
      %v1677 = vsub.f32 1.5, %v1676
      %v1678 = vmul.f32 %v1673, %v1677
      %vm1679 = vweird.f32 %v1662
      %vm1680 = vweird.f32 %v1673
      %vm1681 = vmor %vm1679, %vm1680
      %v1682 = vsel %vm1681, %v1673, %v1678
      %v1683 = vmul.f32 %v1649, %v1672
      %v1684 = vmul.f32 %v1650, %v1682
      %v1686 = vperm.slane %v1639, 0
      %v1688 = vmul.f32 %v1683, %v1686
      %v1689 = vmul.f32 %v1684, %v1686
      %v1691 = vperm.slane %v1640, 0
      %v1693 = vadd.f32 %v1688, %v1691
      %v1694 = vadd.f32 %v1689, %v1691
      %1695 = vst.msk [vmem:[%s822] sm:$0xff] %vm857, %v1693
      %1696 = vst.msk [vmem:[%s822 + $0x8] sm:$0xff] %vm857, %v1694
      %s1697 = smul.u32 2, %s32
      %p1698 = scmp.lt.s32.totalorder %s1697, 1
      %s1699 = scalar_select %p1698, %s1697, 1
      %s1700 = smul.addr %s1699, 8
      %s1701 = scalar_lea.vmem %s17, %s1700
      // Predicated region
      $region93: #{transformer_forward.2} parent=87 // pred_check
        %p1702 = pneg %p500
      $region94: #{transformer_forward.2} parent=87 // pred_check_branch
        %1704 = sbr.rel (%p1702) target = $region96
      $region95: #{transformer_forward.2} parent=87 // pred_region
        %s1705 = smul.u32 2, %s32
      $region96: #{transformer_forward.2} parent=87 // pred_fallthru
        _
      // Predicated region
      $region97: #{transformer_forward.2} parent=87 // pred_check
        %p1706 = pneg %p500
      $region98: #{transformer_forward.2} parent=87 // pred_check_branch
        %1708 = sbr.rel (%p1706) target = $region100
      $region99: #{transformer_forward.2} parent=87 // pred_region
        %s1709 = smul.u32 2, %s32
        %p1710 = scmp.lt.s32.totalorder %s1709, 1
        %s1711 = scalar_select %p1710, %s1709, 1
        %s1712 = smul.addr %s1711, 8
        %s1713 = scalar_lea.vmem %s17, %s1712
      $region100: #{transformer_forward.2} parent=87 // pred_fallthru
        _
    $region88: #{transformer_forward.2} parent=5 // pred_fallthru
      _
    %p1714 = scmp.le.s32.totalorder 2, %s23
    // Predicated region
    $region101: #{transformer_forward.2} parent=5 // pred_check
      %p1715 = pneg %p1714
    $region102: #{transformer_forward.2} parent=5 // pred_check_branch
      %1717 = sbr.rel (%p1715) target = $region104
    $region103: #{transformer_forward.2} parent=5 // pred_region
      %s1718 = ssub.s32 %s23, 2
    $region104: #{transformer_forward.2} parent=5 // pred_fallthru
      _
  $region6: #{transformer_forward.2} parent=0 // loop_footer
    %s27 = sadd.s32 1, %s23
  $region7: #{transformer_forward.2} parent=0 // loop_footer_branch
    %22 = sbr.rel target = $region3
  $region8: #{transformer_forward.2} parent=0 // loop_exit
    _

// kernel: transformer_forward.3
$region0: #{transformer_forward.3}
  #allocation0 [shape = 'u32[]', space=smem, size = 0x4, offset = 0x4, fixed_abs, tag = 'smem constant byte address 0x4 - core index']
  #allocation1 [shape = 'u32[72,128]{1,0:T(1,128)}', space=vmem, size = 0x9000, scoped, tag = 'internal scratch']
  %s0 = inlined_call_operand.vmem [shape: f32[2,8,32], index: 0, kind: input, shape index: {}]
  %s1 = inlined_call_operand.vmem [shape: f32[2,8,32], index: 1, kind: input, shape index: {}]
  %s2 = inlined_call_operand.vmem [shape: bf16[2,32,32], index: 2, kind: input, shape index: {}]
  %s3 = inlined_call_operand.vmem [shape: f32[2,1,32], index: 3, kind: input, shape index: {}]
  %s4 = inlined_call_operand.vmem [shape: bf16[2,32,32], index: 4, kind: input, shape index: {}]
  %s5 = inlined_call_operand.vmem [shape: f32[2,1,32], index: 5, kind: input, shape index: {}]
  %s6 = inlined_call_operand.vmem [shape: bf16[2,32,32], index: 6, kind: input, shape index: {}]
  %s7 = inlined_call_operand.vmem [shape: f32[2,1,32], index: 7, kind: input, shape index: {}]
  %s8 = inlined_call_operand.vmem [shape: bf16[2,32,32], index: 8, kind: input, shape index: {}]
  %s9 = inlined_call_operand.vmem [shape: f32[2,1,32], index: 9, kind: input, shape index: {}]
  %s10 = inlined_call_operand.vmem [shape: f32[2,1,32], index: 10, kind: input, shape index: {}]
  %s11 = inlined_call_operand.vmem [shape: f32[2,1,32], index: 11, kind: input, shape index: {}]
  %s12 = inlined_call_operand.vmem [shape: bf16[2,32,32], index: 12, kind: input, shape index: {}]
  %s13 = inlined_call_operand.vmem [shape: f32[2,1,32], index: 13, kind: input, shape index: {}]
  %s14 = inlined_call_operand.vmem [shape: bf16[2,32,32], index: 14, kind: input, shape index: {}]
  %s15 = inlined_call_operand.vmem [shape: f32[2,1,32], index: 15, kind: input, shape index: {}]
  %s16 = inlined_call_operand.vmem [shape: bf16[2,32,32], index: 16, kind: input, shape index: {}]
  %s17 = inlined_call_operand.vmem [shape: f32[2,1,32], index: 17, kind: input, shape index: {}]
  %s18 = inlined_call_operand.vmem [shape: bf16[2,32,32], index: 18, kind: input, shape index: {}]
  %s19 = inlined_call_operand.vmem [shape: f32[2,1,32], index: 19, kind: input, shape index: {}]
  %s20 = inlined_call_operand.vmem [shape: f32[2,1,32], index: 20, kind: input, shape index: {}]
  %s21 = inlined_call_operand.vmem [shape: f32[2,1,32], index: 21, kind: input, shape index: {}]
  %s22 = inlined_call_operand.vmem [shape: bf16[2,32,64], index: 22, kind: input, shape index: {}]
  %s23 = inlined_call_operand.vmem [shape: f32[2,1,64], index: 23, kind: input, shape index: {}]
  %s24 = inlined_call_operand.vmem [shape: bf16[2,64,32], index: 24, kind: input, shape index: {}]
  %s25 = inlined_call_operand.vmem [shape: f32[2,1,32], index: 25, kind: input, shape index: {}]
  %s26 = inlined_call_operand.vmem [shape: f32[2,1,32], index: 26, kind: input, shape index: {}]
  %s27 = inlined_call_operand.vmem [shape: f32[2,1,32], index: 27, kind: input, shape index: {}]
  %s28 = inlined_call_operand.vmem [shape: f32[2,8,32], index: 28, kind: output, shape index: {}]
  %s29 = sld [smem:[#allocation0]]
  $region149: #{transformer_forward.3} parent=0
    _
  %s31 = ssub.s32 1, %s29
  %s32 = scalar_select 0, %s31, %s29
  loop: start=0, step=1, limit=4
  $region2: #{transformer_forward.3} parent=0 // loop_pre_header
    _
  $region3: #{transformer_forward.3} parent=0 // loop_header
    %s34 = sphi 0, %s38
    %p35 = scmp.ge.s32.totalorder %s34, 4
    %s41 = sphi 0, %s53
    %s42 = sphi 0, %s49
    %s43 = sphi 0, %s41
    %s44 = sphi 0, %s42
    %s45 = sphi 0, %s43
    %s46 = sphi 0, %s44
    %s56 = sphi 0, %s58
    %s59 = sphi 0, %s56
    %s60 = sphi 0, %s59
    %s76 = sphi 0, %s60
    %s82 = sphi 0, %s84
    %s85 = sphi 0, %s82
    %s86 = sphi 0, %s85
    %s102 = sphi 0, %s86
    %s108 = sphi 0, %s110
    %s111 = sphi 0, %s108
    %s112 = sphi 0, %s111
    %s128 = sphi 0, %s112
    %s134 = sphi 0, %s136
    %s137 = sphi 0, %s134
    %s138 = sphi 0, %s137
    %s154 = sphi 0, %s138
    %s160 = sphi 0, %s162
    %s163 = sphi 0, %s160
    %s164 = sphi 0, %s163
    %s180 = sphi 0, %s164
    %s186 = sphi 0, %s188
    %s189 = sphi 0, %s186
    %s190 = sphi 0, %s189
    %s206 = sphi 0, %s190
    %s212 = sphi 0, %s214
    %s215 = sphi 0, %s212
    %s216 = sphi 0, %s215
    %s232 = sphi 0, %s216
    %s238 = sphi 0, %s240
    %s241 = sphi 0, %s238
    %s242 = sphi 0, %s241
    %s258 = sphi 0, %s242
    %s264 = sphi 0, %s266
    %s267 = sphi 0, %s264
    %s268 = sphi 0, %s267
    %s284 = sphi 0, %s268
    %s290 = sphi 0, %s292
    %s293 = sphi 0, %s290
    %s294 = sphi 0, %s293
    %s310 = sphi 0, %s294
    %s316 = sphi 0, %s318
    %s319 = sphi 0, %s316
    %s320 = sphi 0, %s319
    %s336 = sphi 0, %s320
    %s342 = sphi 0, %s344
    %s345 = sphi 0, %s342
    %s346 = sphi 0, %s345
    %s362 = sphi 0, %s346
    %s368 = sphi 0, %s370
    %s371 = sphi 0, %s368
    %s372 = sphi 0, %s371
    %s388 = sphi 0, %s372
    %s394 = sphi 0, %s396
    %s397 = sphi 0, %s394
    %s398 = sphi 0, %s397
    %s414 = sphi 0, %s398
    %s420 = sphi 0, %s422
    %s423 = sphi 0, %s420
    %s424 = sphi 0, %s423
    %s440 = sphi 0, %s424
    %s446 = sphi 0, %s448
    %s449 = sphi 0, %s446
    %s450 = sphi 0, %s449
    %s466 = sphi 0, %s450
    %s472 = sphi 0, %s474
    %s475 = sphi 0, %s472
    %s476 = sphi 0, %s475
    %s492 = sphi 0, %s476
    %s498 = sphi 0, %s500
    %s501 = sphi 0, %s498
    %s502 = sphi 0, %s501
    %s518 = sphi 0, %s502
    %s524 = sphi 0, %s526
    %s527 = sphi 0, %s524
    %s528 = sphi 0, %s527
    %s544 = sphi 0, %s528
    %s550 = sphi 0, %s552
    %s553 = sphi 0, %s550
    %s554 = sphi 0, %s553
    %s570 = sphi 0, %s554
    %s576 = sphi 0, %s578
    %s579 = sphi 0, %s576
    %s580 = sphi 0, %s579
    %s596 = sphi 0, %s580
    %s602 = sphi 0, %s604
    %s605 = sphi 0, %s602
    %s606 = sphi 0, %s605
    %s622 = sphi 0, %s606
    %s628 = sphi 0, %s630
    %s631 = sphi 0, %s628
    %s632 = sphi 0, %s631
    %s648 = sphi 0, %s632
    %s654 = sphi 0, %s656
    %s657 = sphi 0, %s654
    %s658 = sphi 0, %s657
    %s674 = sphi 0, %s658
    %s680 = sphi 0, %s682
    %s683 = sphi 0, %s680
    %s684 = sphi 0, %s683
    %s700 = sphi 0, %s684
    %s706 = sphi 0, %s708
    %s709 = sphi 0, %s706
    %s710 = sphi 0, %s709
    %s726 = sphi 0, %s710
    %s732 = sphi 0, %s734
    %s735 = sphi 0, %s732
    %s736 = sphi 0, %s735
    %s752 = sphi 0, %s736
    %s758 = sphi 0, %s760
    %s761 = sphi 0, %s758
    %s762 = sphi 0, %s761
    %s778 = sphi 0, %s762
    %s784 = sphi 0, %s786
    %s787 = sphi 0, %s784
    %s788 = sphi 0, %s787
    %s804 = sphi 0, %s788
  $region4: #{transformer_forward.3} parent=0 // loop_header_branch
    %37 = sbr.rel (%p35) target = $region8
  $region5: #{transformer_forward.3} parent=0 // loop_body
    %s39 = ssub.s32 %s34, 1
    %s40 = ssub.s32 %s34, 2
    %s47 = sadd.s32 1, %s42
    %p48 = scmp.ge.s32.totalorder %s47, 2
    %s49 = scalar_select %p48, 0, %s47
    %s50 = sadd.s32 1, %s41
    %s51 = scalar_select %p48, %s50, %s41
    %p52 = scmp.ge.s32.totalorder %s51, 1
    %s53 = scalar_select %p52, 0, %s51
    %s54 = ssub.s32 %s41, %s53
    %p55 = scmp.eq.s32.totalorder %s54, 0
    %s57 = sadd.s32 %s56, 1
    %s58 = scalar_select %p55, %s56, %s57
    %p61 = pneg %p55
    %p62 = scmp.eq.s32.totalorder %s34, 1
    %p63 = por %p61, %p62
    %p64 = scmp.ne.s32.totalorder %s56, %s59
    %p65 = scmp.eq.s32.totalorder %s34, 0
    %p66 = por %p64, %p65
    %p67 = scmp.ne.s32.totalorder %s56, %s59
    %p68 = scmp.eq.s32.totalorder %s39, 1
    %p69 = por %p67, %p68
    %p70 = scmp.ne.s32.totalorder %s59, %s60
    %p71 = scmp.eq.s32.totalorder %s39, 0
    %p72 = por %p70, %p71
    %p73 = scmp.ne.s32.totalorder %s59, %s60
    %p74 = scmp.eq.s32.totalorder %s40, 1
    %p75 = por %p73, %p74
    %p77 = scmp.ne.s32.totalorder %s60, %s76
    %p78 = scmp.eq.s32.totalorder %s40, 0
    %p79 = por %p77, %p78
    %s80 = ssub.s32 %s41, %s53
    %p81 = scmp.eq.s32.totalorder %s80, 0
    %s83 = sadd.s32 %s82, 1
    %s84 = scalar_select %p81, %s82, %s83
    %p87 = pneg %p81
    %p88 = scmp.eq.s32.totalorder %s34, 1
    %p89 = por %p87, %p88
    %p90 = scmp.ne.s32.totalorder %s82, %s85
    %p91 = scmp.eq.s32.totalorder %s34, 0
    %p92 = por %p90, %p91
    %p93 = scmp.ne.s32.totalorder %s82, %s85
    %p94 = scmp.eq.s32.totalorder %s39, 1
    %p95 = por %p93, %p94
    %p96 = scmp.ne.s32.totalorder %s85, %s86
    %p97 = scmp.eq.s32.totalorder %s39, 0
    %p98 = por %p96, %p97
    %p99 = scmp.ne.s32.totalorder %s85, %s86
    %p100 = scmp.eq.s32.totalorder %s40, 1
    %p101 = por %p99, %p100
    %p103 = scmp.ne.s32.totalorder %s86, %s102
    %p104 = scmp.eq.s32.totalorder %s40, 0
    %p105 = por %p103, %p104
    %s106 = ssub.s32 %s42, %s49
    %p107 = scmp.eq.s32.totalorder %s106, 0
    %s109 = sadd.s32 %s108, 1
    %s110 = scalar_select %p107, %s108, %s109
    %p113 = pneg %p107
    %p114 = scmp.eq.s32.totalorder %s34, 1
    %p115 = por %p113, %p114
    %p116 = scmp.ne.s32.totalorder %s108, %s111
    %p117 = scmp.eq.s32.totalorder %s34, 0
    %p118 = por %p116, %p117
    %p119 = scmp.ne.s32.totalorder %s108, %s111
    %p120 = scmp.eq.s32.totalorder %s39, 1
    %p121 = por %p119, %p120
    %p122 = scmp.ne.s32.totalorder %s111, %s112
    %p123 = scmp.eq.s32.totalorder %s39, 0
    %p124 = por %p122, %p123
    %p125 = scmp.ne.s32.totalorder %s111, %s112
    %p126 = scmp.eq.s32.totalorder %s40, 1
    %p127 = por %p125, %p126
    %p129 = scmp.ne.s32.totalorder %s112, %s128
    %p130 = scmp.eq.s32.totalorder %s40, 0
    %p131 = por %p129, %p130
    %s132 = ssub.s32 %s42, %s49
    %p133 = scmp.eq.s32.totalorder %s132, 0
    %s135 = sadd.s32 %s134, 1
    %s136 = scalar_select %p133, %s134, %s135
    %p139 = pneg %p133
    %p140 = scmp.eq.s32.totalorder %s34, 1
    %p141 = por %p139, %p140
    %p142 = scmp.ne.s32.totalorder %s134, %s137
    %p143 = scmp.eq.s32.totalorder %s34, 0
    %p144 = por %p142, %p143
    %p145 = scmp.ne.s32.totalorder %s134, %s137
    %p146 = scmp.eq.s32.totalorder %s39, 1
    %p147 = por %p145, %p146
    %p148 = scmp.ne.s32.totalorder %s137, %s138
    %p149 = scmp.eq.s32.totalorder %s39, 0
    %p150 = por %p148, %p149
    %p151 = scmp.ne.s32.totalorder %s137, %s138
    %p152 = scmp.eq.s32.totalorder %s40, 1
    %p153 = por %p151, %p152
    %p155 = scmp.ne.s32.totalorder %s138, %s154
    %p156 = scmp.eq.s32.totalorder %s40, 0
    %p157 = por %p155, %p156
    %s158 = ssub.s32 %s42, %s49
    %p159 = scmp.eq.s32.totalorder %s158, 0
    %s161 = sadd.s32 %s160, 1
    %s162 = scalar_select %p159, %s160, %s161
    %p165 = pneg %p159
    %p166 = scmp.eq.s32.totalorder %s34, 1
    %p167 = por %p165, %p166
    %p168 = scmp.ne.s32.totalorder %s160, %s163
    %p169 = scmp.eq.s32.totalorder %s34, 0
    %p170 = por %p168, %p169
    %p171 = scmp.ne.s32.totalorder %s160, %s163
    %p172 = scmp.eq.s32.totalorder %s39, 1
    %p173 = por %p171, %p172
    %p174 = scmp.ne.s32.totalorder %s163, %s164
    %p175 = scmp.eq.s32.totalorder %s39, 0
    %p176 = por %p174, %p175
    %p177 = scmp.ne.s32.totalorder %s163, %s164
    %p178 = scmp.eq.s32.totalorder %s40, 1
    %p179 = por %p177, %p178
    %p181 = scmp.ne.s32.totalorder %s164, %s180
    %p182 = scmp.eq.s32.totalorder %s40, 0
    %p183 = por %p181, %p182
    %s184 = ssub.s32 %s42, %s49
    %p185 = scmp.eq.s32.totalorder %s184, 0
    %s187 = sadd.s32 %s186, 1
    %s188 = scalar_select %p185, %s186, %s187
    %p191 = pneg %p185
    %p192 = scmp.eq.s32.totalorder %s34, 1
    %p193 = por %p191, %p192
    %p194 = scmp.ne.s32.totalorder %s186, %s189
    %p195 = scmp.eq.s32.totalorder %s34, 0
    %p196 = por %p194, %p195
    %p197 = scmp.ne.s32.totalorder %s186, %s189
    %p198 = scmp.eq.s32.totalorder %s39, 1
    %p199 = por %p197, %p198
    %p200 = scmp.ne.s32.totalorder %s189, %s190
    %p201 = scmp.eq.s32.totalorder %s39, 0
    %p202 = por %p200, %p201
    %p203 = scmp.ne.s32.totalorder %s189, %s190
    %p204 = scmp.eq.s32.totalorder %s40, 1
    %p205 = por %p203, %p204
    %p207 = scmp.ne.s32.totalorder %s190, %s206
    %p208 = scmp.eq.s32.totalorder %s40, 0
    %p209 = por %p207, %p208
    %s210 = ssub.s32 %s42, %s49
    %p211 = scmp.eq.s32.totalorder %s210, 0
    %s213 = sadd.s32 %s212, 1
    %s214 = scalar_select %p211, %s212, %s213
    %p217 = pneg %p211
    %p218 = scmp.eq.s32.totalorder %s34, 1
    %p219 = por %p217, %p218
    %p220 = scmp.ne.s32.totalorder %s212, %s215
    %p221 = scmp.eq.s32.totalorder %s34, 0
    %p222 = por %p220, %p221
    %p223 = scmp.ne.s32.totalorder %s212, %s215
    %p224 = scmp.eq.s32.totalorder %s39, 1
    %p225 = por %p223, %p224
    %p226 = scmp.ne.s32.totalorder %s215, %s216
    %p227 = scmp.eq.s32.totalorder %s39, 0
    %p228 = por %p226, %p227
    %p229 = scmp.ne.s32.totalorder %s215, %s216
    %p230 = scmp.eq.s32.totalorder %s40, 1
    %p231 = por %p229, %p230
    %p233 = scmp.ne.s32.totalorder %s216, %s232
    %p234 = scmp.eq.s32.totalorder %s40, 0
    %p235 = por %p233, %p234
    %s236 = ssub.s32 %s42, %s49
    %p237 = scmp.eq.s32.totalorder %s236, 0
    %s239 = sadd.s32 %s238, 1
    %s240 = scalar_select %p237, %s238, %s239
    %p243 = pneg %p237
    %p244 = scmp.eq.s32.totalorder %s34, 1
    %p245 = por %p243, %p244
    %p246 = scmp.ne.s32.totalorder %s238, %s241
    %p247 = scmp.eq.s32.totalorder %s34, 0
    %p248 = por %p246, %p247
    %p249 = scmp.ne.s32.totalorder %s238, %s241
    %p250 = scmp.eq.s32.totalorder %s39, 1
    %p251 = por %p249, %p250
    %p252 = scmp.ne.s32.totalorder %s241, %s242
    %p253 = scmp.eq.s32.totalorder %s39, 0
    %p254 = por %p252, %p253
    %p255 = scmp.ne.s32.totalorder %s241, %s242
    %p256 = scmp.eq.s32.totalorder %s40, 1
    %p257 = por %p255, %p256
    %p259 = scmp.ne.s32.totalorder %s242, %s258
    %p260 = scmp.eq.s32.totalorder %s40, 0
    %p261 = por %p259, %p260
    %s262 = ssub.s32 %s42, %s49
    %p263 = scmp.eq.s32.totalorder %s262, 0
    %s265 = sadd.s32 %s264, 1
    %s266 = scalar_select %p263, %s264, %s265
    %p269 = pneg %p263
    %p270 = scmp.eq.s32.totalorder %s34, 1
    %p271 = por %p269, %p270
    %p272 = scmp.ne.s32.totalorder %s264, %s267
    %p273 = scmp.eq.s32.totalorder %s34, 0
    %p274 = por %p272, %p273
    %p275 = scmp.ne.s32.totalorder %s264, %s267
    %p276 = scmp.eq.s32.totalorder %s39, 1
    %p277 = por %p275, %p276
    %p278 = scmp.ne.s32.totalorder %s267, %s268
    %p279 = scmp.eq.s32.totalorder %s39, 0
    %p280 = por %p278, %p279
    %p281 = scmp.ne.s32.totalorder %s267, %s268
    %p282 = scmp.eq.s32.totalorder %s40, 1
    %p283 = por %p281, %p282
    %p285 = scmp.ne.s32.totalorder %s268, %s284
    %p286 = scmp.eq.s32.totalorder %s40, 0
    %p287 = por %p285, %p286
    %s288 = ssub.s32 %s42, %s49
    %p289 = scmp.eq.s32.totalorder %s288, 0
    %s291 = sadd.s32 %s290, 1
    %s292 = scalar_select %p289, %s290, %s291
    %p295 = pneg %p289
    %p296 = scmp.eq.s32.totalorder %s34, 1
    %p297 = por %p295, %p296
    %p298 = scmp.ne.s32.totalorder %s290, %s293
    %p299 = scmp.eq.s32.totalorder %s34, 0
    %p300 = por %p298, %p299
    %p301 = scmp.ne.s32.totalorder %s290, %s293
    %p302 = scmp.eq.s32.totalorder %s39, 1
    %p303 = por %p301, %p302
    %p304 = scmp.ne.s32.totalorder %s293, %s294
    %p305 = scmp.eq.s32.totalorder %s39, 0
    %p306 = por %p304, %p305
    %p307 = scmp.ne.s32.totalorder %s293, %s294
    %p308 = scmp.eq.s32.totalorder %s40, 1
    %p309 = por %p307, %p308
    %p311 = scmp.ne.s32.totalorder %s294, %s310
    %p312 = scmp.eq.s32.totalorder %s40, 0
    %p313 = por %p311, %p312
    %s314 = ssub.s32 %s42, %s49
    %p315 = scmp.eq.s32.totalorder %s314, 0
    %s317 = sadd.s32 %s316, 1
    %s318 = scalar_select %p315, %s316, %s317
    %p321 = pneg %p315
    %p322 = scmp.eq.s32.totalorder %s34, 1
    %p323 = por %p321, %p322
    %p324 = scmp.ne.s32.totalorder %s316, %s319
    %p325 = scmp.eq.s32.totalorder %s34, 0
    %p326 = por %p324, %p325
    %p327 = scmp.ne.s32.totalorder %s316, %s319
    %p328 = scmp.eq.s32.totalorder %s39, 1
    %p329 = por %p327, %p328
    %p330 = scmp.ne.s32.totalorder %s319, %s320
    %p331 = scmp.eq.s32.totalorder %s39, 0
    %p332 = por %p330, %p331
    %p333 = scmp.ne.s32.totalorder %s319, %s320
    %p334 = scmp.eq.s32.totalorder %s40, 1
    %p335 = por %p333, %p334
    %p337 = scmp.ne.s32.totalorder %s320, %s336
    %p338 = scmp.eq.s32.totalorder %s40, 0
    %p339 = por %p337, %p338
    %s340 = ssub.s32 %s42, %s49
    %p341 = scmp.eq.s32.totalorder %s340, 0
    %s343 = sadd.s32 %s342, 1
    %s344 = scalar_select %p341, %s342, %s343
    %p347 = pneg %p341
    %p348 = scmp.eq.s32.totalorder %s34, 1
    %p349 = por %p347, %p348
    %p350 = scmp.ne.s32.totalorder %s342, %s345
    %p351 = scmp.eq.s32.totalorder %s34, 0
    %p352 = por %p350, %p351
    %p353 = scmp.ne.s32.totalorder %s342, %s345
    %p354 = scmp.eq.s32.totalorder %s39, 1
    %p355 = por %p353, %p354
    %p356 = scmp.ne.s32.totalorder %s345, %s346
    %p357 = scmp.eq.s32.totalorder %s39, 0
    %p358 = por %p356, %p357
    %p359 = scmp.ne.s32.totalorder %s345, %s346
    %p360 = scmp.eq.s32.totalorder %s40, 1
    %p361 = por %p359, %p360
    %p363 = scmp.ne.s32.totalorder %s346, %s362
    %p364 = scmp.eq.s32.totalorder %s40, 0
    %p365 = por %p363, %p364
    %s366 = ssub.s32 %s42, %s49
    %p367 = scmp.eq.s32.totalorder %s366, 0
    %s369 = sadd.s32 %s368, 1
    %s370 = scalar_select %p367, %s368, %s369
    %p373 = pneg %p367
    %p374 = scmp.eq.s32.totalorder %s34, 1
    %p375 = por %p373, %p374
    %p376 = scmp.ne.s32.totalorder %s368, %s371
    %p377 = scmp.eq.s32.totalorder %s34, 0
    %p378 = por %p376, %p377
    %p379 = scmp.ne.s32.totalorder %s368, %s371
    %p380 = scmp.eq.s32.totalorder %s39, 1
    %p381 = por %p379, %p380
    %p382 = scmp.ne.s32.totalorder %s371, %s372
    %p383 = scmp.eq.s32.totalorder %s39, 0
    %p384 = por %p382, %p383
    %p385 = scmp.ne.s32.totalorder %s371, %s372
    %p386 = scmp.eq.s32.totalorder %s40, 1
    %p387 = por %p385, %p386
    %p389 = scmp.ne.s32.totalorder %s372, %s388
    %p390 = scmp.eq.s32.totalorder %s40, 0
    %p391 = por %p389, %p390
    %s392 = ssub.s32 %s42, %s49
    %p393 = scmp.eq.s32.totalorder %s392, 0
    %s395 = sadd.s32 %s394, 1
    %s396 = scalar_select %p393, %s394, %s395
    %p399 = pneg %p393
    %p400 = scmp.eq.s32.totalorder %s34, 1
    %p401 = por %p399, %p400
    %p402 = scmp.ne.s32.totalorder %s394, %s397
    %p403 = scmp.eq.s32.totalorder %s34, 0
    %p404 = por %p402, %p403
    %p405 = scmp.ne.s32.totalorder %s394, %s397
    %p406 = scmp.eq.s32.totalorder %s39, 1
    %p407 = por %p405, %p406
    %p408 = scmp.ne.s32.totalorder %s397, %s398
    %p409 = scmp.eq.s32.totalorder %s39, 0
    %p410 = por %p408, %p409
    %p411 = scmp.ne.s32.totalorder %s397, %s398
    %p412 = scmp.eq.s32.totalorder %s40, 1
    %p413 = por %p411, %p412
    %p415 = scmp.ne.s32.totalorder %s398, %s414
    %p416 = scmp.eq.s32.totalorder %s40, 0
    %p417 = por %p415, %p416
    %s418 = ssub.s32 %s42, %s49
    %p419 = scmp.eq.s32.totalorder %s418, 0
    %s421 = sadd.s32 %s420, 1
    %s422 = scalar_select %p419, %s420, %s421
    %p425 = pneg %p419
    %p426 = scmp.eq.s32.totalorder %s34, 1
    %p427 = por %p425, %p426
    %p428 = scmp.ne.s32.totalorder %s420, %s423
    %p429 = scmp.eq.s32.totalorder %s34, 0
    %p430 = por %p428, %p429
    %p431 = scmp.ne.s32.totalorder %s420, %s423
    %p432 = scmp.eq.s32.totalorder %s39, 1
    %p433 = por %p431, %p432
    %p434 = scmp.ne.s32.totalorder %s423, %s424
    %p435 = scmp.eq.s32.totalorder %s39, 0
    %p436 = por %p434, %p435
    %p437 = scmp.ne.s32.totalorder %s423, %s424
    %p438 = scmp.eq.s32.totalorder %s40, 1
    %p439 = por %p437, %p438
    %p441 = scmp.ne.s32.totalorder %s424, %s440
    %p442 = scmp.eq.s32.totalorder %s40, 0
    %p443 = por %p441, %p442
    %s444 = ssub.s32 %s42, %s49
    %p445 = scmp.eq.s32.totalorder %s444, 0
    %s447 = sadd.s32 %s446, 1
    %s448 = scalar_select %p445, %s446, %s447
    %p451 = pneg %p445
    %p452 = scmp.eq.s32.totalorder %s34, 1
    %p453 = por %p451, %p452
    %p454 = scmp.ne.s32.totalorder %s446, %s449
    %p455 = scmp.eq.s32.totalorder %s34, 0
    %p456 = por %p454, %p455
    %p457 = scmp.ne.s32.totalorder %s446, %s449
    %p458 = scmp.eq.s32.totalorder %s39, 1
    %p459 = por %p457, %p458
    %p460 = scmp.ne.s32.totalorder %s449, %s450
    %p461 = scmp.eq.s32.totalorder %s39, 0
    %p462 = por %p460, %p461
    %p463 = scmp.ne.s32.totalorder %s449, %s450
    %p464 = scmp.eq.s32.totalorder %s40, 1
    %p465 = por %p463, %p464
    %p467 = scmp.ne.s32.totalorder %s450, %s466
    %p468 = scmp.eq.s32.totalorder %s40, 0
    %p469 = por %p467, %p468
    %s470 = ssub.s32 %s42, %s49
    %p471 = scmp.eq.s32.totalorder %s470, 0
    %s473 = sadd.s32 %s472, 1
    %s474 = scalar_select %p471, %s472, %s473
    %p477 = pneg %p471
    %p478 = scmp.eq.s32.totalorder %s34, 1
    %p479 = por %p477, %p478
    %p480 = scmp.ne.s32.totalorder %s472, %s475
    %p481 = scmp.eq.s32.totalorder %s34, 0
    %p482 = por %p480, %p481
    %p483 = scmp.ne.s32.totalorder %s472, %s475
    %p484 = scmp.eq.s32.totalorder %s39, 1
    %p485 = por %p483, %p484
    %p486 = scmp.ne.s32.totalorder %s475, %s476
    %p487 = scmp.eq.s32.totalorder %s39, 0
    %p488 = por %p486, %p487
    %p489 = scmp.ne.s32.totalorder %s475, %s476
    %p490 = scmp.eq.s32.totalorder %s40, 1
    %p491 = por %p489, %p490
    %p493 = scmp.ne.s32.totalorder %s476, %s492
    %p494 = scmp.eq.s32.totalorder %s40, 0
    %p495 = por %p493, %p494
    %s496 = ssub.s32 %s42, %s49
    %p497 = scmp.eq.s32.totalorder %s496, 0
    %s499 = sadd.s32 %s498, 1
    %s500 = scalar_select %p497, %s498, %s499
    %p503 = pneg %p497
    %p504 = scmp.eq.s32.totalorder %s34, 1
    %p505 = por %p503, %p504
    %p506 = scmp.ne.s32.totalorder %s498, %s501
    %p507 = scmp.eq.s32.totalorder %s34, 0
    %p508 = por %p506, %p507
    %p509 = scmp.ne.s32.totalorder %s498, %s501
    %p510 = scmp.eq.s32.totalorder %s39, 1
    %p511 = por %p509, %p510
    %p512 = scmp.ne.s32.totalorder %s501, %s502
    %p513 = scmp.eq.s32.totalorder %s39, 0
    %p514 = por %p512, %p513
    %p515 = scmp.ne.s32.totalorder %s501, %s502
    %p516 = scmp.eq.s32.totalorder %s40, 1
    %p517 = por %p515, %p516
    %p519 = scmp.ne.s32.totalorder %s502, %s518
    %p520 = scmp.eq.s32.totalorder %s40, 0
    %p521 = por %p519, %p520
    %s522 = ssub.s32 %s42, %s49
    %p523 = scmp.eq.s32.totalorder %s522, 0
    %s525 = sadd.s32 %s524, 1
    %s526 = scalar_select %p523, %s524, %s525
    %p529 = pneg %p523
    %p530 = scmp.eq.s32.totalorder %s34, 1
    %p531 = por %p529, %p530
    %p532 = scmp.ne.s32.totalorder %s524, %s527
    %p533 = scmp.eq.s32.totalorder %s34, 0
    %p534 = por %p532, %p533
    %p535 = scmp.ne.s32.totalorder %s524, %s527
    %p536 = scmp.eq.s32.totalorder %s39, 1
    %p537 = por %p535, %p536
    %p538 = scmp.ne.s32.totalorder %s527, %s528
    %p539 = scmp.eq.s32.totalorder %s39, 0
    %p540 = por %p538, %p539
    %p541 = scmp.ne.s32.totalorder %s527, %s528
    %p542 = scmp.eq.s32.totalorder %s40, 1
    %p543 = por %p541, %p542
    %p545 = scmp.ne.s32.totalorder %s528, %s544
    %p546 = scmp.eq.s32.totalorder %s40, 0
    %p547 = por %p545, %p546
    %s548 = ssub.s32 %s42, %s49
    %p549 = scmp.eq.s32.totalorder %s548, 0
    %s551 = sadd.s32 %s550, 1
    %s552 = scalar_select %p549, %s550, %s551
    %p555 = pneg %p549
    %p556 = scmp.eq.s32.totalorder %s34, 1
    %p557 = por %p555, %p556
    %p558 = scmp.ne.s32.totalorder %s550, %s553
    %p559 = scmp.eq.s32.totalorder %s34, 0
    %p560 = por %p558, %p559
    %p561 = scmp.ne.s32.totalorder %s550, %s553
    %p562 = scmp.eq.s32.totalorder %s39, 1
    %p563 = por %p561, %p562
    %p564 = scmp.ne.s32.totalorder %s553, %s554
    %p565 = scmp.eq.s32.totalorder %s39, 0
    %p566 = por %p564, %p565
    %p567 = scmp.ne.s32.totalorder %s553, %s554
    %p568 = scmp.eq.s32.totalorder %s40, 1
    %p569 = por %p567, %p568
    %p571 = scmp.ne.s32.totalorder %s554, %s570
    %p572 = scmp.eq.s32.totalorder %s40, 0
    %p573 = por %p571, %p572
    %s574 = ssub.s32 %s42, %s49
    %p575 = scmp.eq.s32.totalorder %s574, 0
    %s577 = sadd.s32 %s576, 1
    %s578 = scalar_select %p575, %s576, %s577
    %p581 = pneg %p575
    %p582 = scmp.eq.s32.totalorder %s34, 1
    %p583 = por %p581, %p582
    %p584 = scmp.ne.s32.totalorder %s576, %s579
    %p585 = scmp.eq.s32.totalorder %s34, 0
    %p586 = por %p584, %p585
    %p587 = scmp.ne.s32.totalorder %s576, %s579
    %p588 = scmp.eq.s32.totalorder %s39, 1
    %p589 = por %p587, %p588
    %p590 = scmp.ne.s32.totalorder %s579, %s580
    %p591 = scmp.eq.s32.totalorder %s39, 0
    %p592 = por %p590, %p591
    %p593 = scmp.ne.s32.totalorder %s579, %s580
    %p594 = scmp.eq.s32.totalorder %s40, 1
    %p595 = por %p593, %p594
    %p597 = scmp.ne.s32.totalorder %s580, %s596
    %p598 = scmp.eq.s32.totalorder %s40, 0
    %p599 = por %p597, %p598
    %s600 = ssub.s32 %s42, %s49
    %p601 = scmp.eq.s32.totalorder %s600, 0
    %s603 = sadd.s32 %s602, 1
    %s604 = scalar_select %p601, %s602, %s603
    %p607 = pneg %p601
    %p608 = scmp.eq.s32.totalorder %s34, 1
    %p609 = por %p607, %p608
    %p610 = scmp.ne.s32.totalorder %s602, %s605
    %p611 = scmp.eq.s32.totalorder %s34, 0
    %p612 = por %p610, %p611
    %p613 = scmp.ne.s32.totalorder %s602, %s605
    %p614 = scmp.eq.s32.totalorder %s39, 1
    %p615 = por %p613, %p614
    %p616 = scmp.ne.s32.totalorder %s605, %s606
    %p617 = scmp.eq.s32.totalorder %s39, 0
    %p618 = por %p616, %p617
    %p619 = scmp.ne.s32.totalorder %s605, %s606
    %p620 = scmp.eq.s32.totalorder %s40, 1
    %p621 = por %p619, %p620
    %p623 = scmp.ne.s32.totalorder %s606, %s622
    %p624 = scmp.eq.s32.totalorder %s40, 0
    %p625 = por %p623, %p624
    %s626 = ssub.s32 %s42, %s49
    %p627 = scmp.eq.s32.totalorder %s626, 0
    %s629 = sadd.s32 %s628, 1
    %s630 = scalar_select %p627, %s628, %s629
    %p633 = pneg %p627
    %p634 = scmp.eq.s32.totalorder %s34, 1
    %p635 = por %p633, %p634
    %p636 = scmp.ne.s32.totalorder %s628, %s631
    %p637 = scmp.eq.s32.totalorder %s34, 0
    %p638 = por %p636, %p637
    %p639 = scmp.ne.s32.totalorder %s628, %s631
    %p640 = scmp.eq.s32.totalorder %s39, 1
    %p641 = por %p639, %p640
    %p642 = scmp.ne.s32.totalorder %s631, %s632
    %p643 = scmp.eq.s32.totalorder %s39, 0
    %p644 = por %p642, %p643
    %p645 = scmp.ne.s32.totalorder %s631, %s632
    %p646 = scmp.eq.s32.totalorder %s40, 1
    %p647 = por %p645, %p646
    %p649 = scmp.ne.s32.totalorder %s632, %s648
    %p650 = scmp.eq.s32.totalorder %s40, 0
    %p651 = por %p649, %p650
    %s652 = ssub.s32 %s42, %s49
    %p653 = scmp.eq.s32.totalorder %s652, 0
    %s655 = sadd.s32 %s654, 1
    %s656 = scalar_select %p653, %s654, %s655
    %p659 = pneg %p653
    %p660 = scmp.eq.s32.totalorder %s34, 1
    %p661 = por %p659, %p660
    %p662 = scmp.ne.s32.totalorder %s654, %s657
    %p663 = scmp.eq.s32.totalorder %s34, 0
    %p664 = por %p662, %p663
    %p665 = scmp.ne.s32.totalorder %s654, %s657
    %p666 = scmp.eq.s32.totalorder %s39, 1
    %p667 = por %p665, %p666
    %p668 = scmp.ne.s32.totalorder %s657, %s658
    %p669 = scmp.eq.s32.totalorder %s39, 0
    %p670 = por %p668, %p669
    %p671 = scmp.ne.s32.totalorder %s657, %s658
    %p672 = scmp.eq.s32.totalorder %s40, 1
    %p673 = por %p671, %p672
    %p675 = scmp.ne.s32.totalorder %s658, %s674
    %p676 = scmp.eq.s32.totalorder %s40, 0
    %p677 = por %p675, %p676
    %s678 = ssub.s32 %s42, %s49
    %p679 = scmp.eq.s32.totalorder %s678, 0
    %s681 = sadd.s32 %s680, 1
    %s682 = scalar_select %p679, %s680, %s681
    %p685 = pneg %p679
    %p686 = scmp.eq.s32.totalorder %s34, 1
    %p687 = por %p685, %p686
    %p688 = scmp.ne.s32.totalorder %s680, %s683
    %p689 = scmp.eq.s32.totalorder %s34, 0
    %p690 = por %p688, %p689
    %p691 = scmp.ne.s32.totalorder %s680, %s683
    %p692 = scmp.eq.s32.totalorder %s39, 1
    %p693 = por %p691, %p692
    %p694 = scmp.ne.s32.totalorder %s683, %s684
    %p695 = scmp.eq.s32.totalorder %s39, 0
    %p696 = por %p694, %p695
    %p697 = scmp.ne.s32.totalorder %s683, %s684
    %p698 = scmp.eq.s32.totalorder %s40, 1
    %p699 = por %p697, %p698
    %p701 = scmp.ne.s32.totalorder %s684, %s700
    %p702 = scmp.eq.s32.totalorder %s40, 0
    %p703 = por %p701, %p702
    %s704 = ssub.s32 %s42, %s49
    %p705 = scmp.eq.s32.totalorder %s704, 0
    %s707 = sadd.s32 %s706, 1
    %s708 = scalar_select %p705, %s706, %s707
    %p711 = pneg %p705
    %p712 = scmp.eq.s32.totalorder %s34, 1
    %p713 = por %p711, %p712
    %p714 = scmp.ne.s32.totalorder %s706, %s709
    %p715 = scmp.eq.s32.totalorder %s34, 0
    %p716 = por %p714, %p715
    %p717 = scmp.ne.s32.totalorder %s706, %s709
    %p718 = scmp.eq.s32.totalorder %s39, 1
    %p719 = por %p717, %p718
    %p720 = scmp.ne.s32.totalorder %s709, %s710
    %p721 = scmp.eq.s32.totalorder %s39, 0
    %p722 = por %p720, %p721
    %p723 = scmp.ne.s32.totalorder %s709, %s710
    %p724 = scmp.eq.s32.totalorder %s40, 1
    %p725 = por %p723, %p724
    %p727 = scmp.ne.s32.totalorder %s710, %s726
    %p728 = scmp.eq.s32.totalorder %s40, 0
    %p729 = por %p727, %p728
    %s730 = ssub.s32 %s42, %s49
    %p731 = scmp.eq.s32.totalorder %s730, 0
    %s733 = sadd.s32 %s732, 1
    %s734 = scalar_select %p731, %s732, %s733
    %p737 = pneg %p731
    %p738 = scmp.eq.s32.totalorder %s34, 1
    %p739 = por %p737, %p738
    %p740 = scmp.ne.s32.totalorder %s732, %s735
    %p741 = scmp.eq.s32.totalorder %s34, 0
    %p742 = por %p740, %p741
    %p743 = scmp.ne.s32.totalorder %s732, %s735
    %p744 = scmp.eq.s32.totalorder %s39, 1
    %p745 = por %p743, %p744
    %p746 = scmp.ne.s32.totalorder %s735, %s736
    %p747 = scmp.eq.s32.totalorder %s39, 0
    %p748 = por %p746, %p747
    %p749 = scmp.ne.s32.totalorder %s735, %s736
    %p750 = scmp.eq.s32.totalorder %s40, 1
    %p751 = por %p749, %p750
    %p753 = scmp.ne.s32.totalorder %s736, %s752
    %p754 = scmp.eq.s32.totalorder %s40, 0
    %p755 = por %p753, %p754
    %s756 = ssub.s32 %s42, %s49
    %p757 = scmp.eq.s32.totalorder %s756, 0
    %s759 = sadd.s32 %s758, 1
    %s760 = scalar_select %p757, %s758, %s759
    %p763 = pneg %p757
    %p764 = scmp.eq.s32.totalorder %s34, 1
    %p765 = por %p763, %p764
    %p766 = scmp.ne.s32.totalorder %s758, %s761
    %p767 = scmp.eq.s32.totalorder %s34, 0
    %p768 = por %p766, %p767
    %p769 = scmp.ne.s32.totalorder %s758, %s761
    %p770 = scmp.eq.s32.totalorder %s39, 1
    %p771 = por %p769, %p770
    %p772 = scmp.ne.s32.totalorder %s761, %s762
    %p773 = scmp.eq.s32.totalorder %s39, 0
    %p774 = por %p772, %p773
    %p775 = scmp.ne.s32.totalorder %s761, %s762
    %p776 = scmp.eq.s32.totalorder %s40, 1
    %p777 = por %p775, %p776
    %p779 = scmp.ne.s32.totalorder %s762, %s778
    %p780 = scmp.eq.s32.totalorder %s40, 0
    %p781 = por %p779, %p780
    %s782 = ssub.s32 %s41, %s53
    %p783 = scmp.eq.s32.totalorder %s782, 0
    %s785 = sadd.s32 %s784, 1
    %s786 = scalar_select %p783, %s784, %s785
    %p789 = pneg %p783
    %p790 = scmp.eq.s32.totalorder %s34, 1
    %p791 = por %p789, %p790
    %p792 = scmp.ne.s32.totalorder %s784, %s787
    %p793 = scmp.eq.s32.totalorder %s34, 0
    %p794 = por %p792, %p793
    %p795 = scmp.ne.s32.totalorder %s784, %s787
    %p796 = scmp.eq.s32.totalorder %s39, 1
    %p797 = por %p795, %p796
    %p798 = scmp.ne.s32.totalorder %s787, %s788
    %p799 = scmp.eq.s32.totalorder %s39, 0
    %p800 = por %p798, %p799
    %p801 = scmp.ne.s32.totalorder %s787, %s788
    %p802 = scmp.eq.s32.totalorder %s40, 1
    %p803 = por %p801, %p802
    %p805 = scmp.ne.s32.totalorder %s788, %s804
    %p806 = scmp.eq.s32.totalorder %s40, 0
    %p807 = por %p805, %p806
    %p808 = scmp.le.s32.totalorder 1, %s34
    %p809 = scmp.lt.s32.totalorder %s34, 3
    %p810 = pnand %p808, %p809
    %p811 = pneg %p810
    // Predicated region
    $region9: #{transformer_forward.3} parent=5 // pred_check
      _
    $region10: #{transformer_forward.3} parent=5 // pred_check_branch
      %813 = sbr.rel (%p810) target = $region12
    $region11: #{transformer_forward.3} parent=5 // pred_region
      %s814 = ssub.s32 %s34, 1
      // Predicated region
      $region13: #{transformer_forward.3} parent=11 // pred_check
        %p815 = pneg %p72
      $region14: #{transformer_forward.3} parent=11 // pred_check_branch
        %817 = sbr.rel (%p815) target = $region16
      $region15: #{transformer_forward.3} parent=11 // pred_region
        %s818 = smul.u32 2, %s43
        %p819 = scmp.lt.s32.totalorder %s818, 1
        %s820 = scalar_select %p819, %s818, 1
        %s821 = smul.addr %s820, 8
        %s822 = scalar_lea.vmem %s0, %s821
        %s823 = smul.u32 2, %s43
      $region16: #{transformer_forward.3} parent=11 // pred_fallthru
        _
      // Predicated region
      $region17: #{transformer_forward.3} parent=11 // pred_check
        %p824 = pneg %p98
      $region18: #{transformer_forward.3} parent=11 // pred_check_branch
        %826 = sbr.rel (%p824) target = $region20
      $region19: #{transformer_forward.3} parent=11 // pred_region
        %s827 = smul.u32 2, %s43
        %p828 = scmp.lt.s32.totalorder %s827, 1
        %s829 = scalar_select %p828, %s827, 1
        %s830 = smul.addr %s829, 8
        %s831 = scalar_lea.vmem %s1, %s830
        %s832 = smul.u32 2, %s43
      $region20: #{transformer_forward.3} parent=11 // pred_fallthru
        _
    $region12: #{transformer_forward.3} parent=5 // pred_fallthru
      _
    %p833 = scmp.lt.s32.totalorder %s34, 2
    // Predicated region
    $region21: #{transformer_forward.3} parent=5 // pred_check
      %p834 = pneg %p833
    $region22: #{transformer_forward.3} parent=5 // pred_check_branch
      %836 = sbr.rel (%p834) target = $region24
    $region23: #{transformer_forward.3} parent=5 // pred_region
      // Predicated region
      $region25: #{transformer_forward.3} parent=23 // pred_check
        %p837 = pneg %p118
      $region26: #{transformer_forward.3} parent=23 // pred_check_branch
        %839 = sbr.rel (%p837) target = $region28
      $region27: #{transformer_forward.3} parent=23 // pred_region
        %p840 = scmp.lt.s32.totalorder %s42, 1
        %s841 = scalar_select %p840, %s42, 1
        %s842 = smul.addr %s841, 4
        %s843 = smul.addr %s842, 4
        %s844 = scalar_lea.vmem %s2, %s843
      $region28: #{transformer_forward.3} parent=23 // pred_fallthru
        _
      // Predicated region
      $region29: #{transformer_forward.3} parent=23 // pred_check
        %p845 = pneg %p144
      $region30: #{transformer_forward.3} parent=23 // pred_check_branch
        %847 = sbr.rel (%p845) target = $region32
      $region31: #{transformer_forward.3} parent=23 // pred_region
        %p848 = scmp.lt.s32.totalorder %s42, 1
        %s849 = scalar_select %p848, %s42, 1
        %s850 = scalar_lea.vmem %s3, %s849
      $region32: #{transformer_forward.3} parent=23 // pred_fallthru
        _
      // Predicated region
      $region33: #{transformer_forward.3} parent=23 // pred_check
        %p851 = pneg %p170
      $region34: #{transformer_forward.3} parent=23 // pred_check_branch
        %853 = sbr.rel (%p851) target = $region36
      $region35: #{transformer_forward.3} parent=23 // pred_region
        %p854 = scmp.lt.s32.totalorder %s42, 1
        %s855 = scalar_select %p854, %s42, 1
        %s856 = smul.addr %s855, 4
        %s857 = smul.addr %s856, 4
        %s858 = scalar_lea.vmem %s4, %s857
      $region36: #{transformer_forward.3} parent=23 // pred_fallthru
        _
      // Predicated region
      $region37: #{transformer_forward.3} parent=23 // pred_check
        %p859 = pneg %p196
      $region38: #{transformer_forward.3} parent=23 // pred_check_branch
        %861 = sbr.rel (%p859) target = $region40
      $region39: #{transformer_forward.3} parent=23 // pred_region
        %p862 = scmp.lt.s32.totalorder %s42, 1
        %s863 = scalar_select %p862, %s42, 1
        %s864 = scalar_lea.vmem %s5, %s863
      $region40: #{transformer_forward.3} parent=23 // pred_fallthru
        _
      // Predicated region
      $region41: #{transformer_forward.3} parent=23 // pred_check
        %p865 = pneg %p222
      $region42: #{transformer_forward.3} parent=23 // pred_check_branch
        %867 = sbr.rel (%p865) target = $region44
      $region43: #{transformer_forward.3} parent=23 // pred_region
        %p868 = scmp.lt.s32.totalorder %s42, 1
        %s869 = scalar_select %p868, %s42, 1
        %s870 = smul.addr %s869, 4
        %s871 = smul.addr %s870, 4
        %s872 = scalar_lea.vmem %s6, %s871
      $region44: #{transformer_forward.3} parent=23 // pred_fallthru
        _
      // Predicated region
      $region45: #{transformer_forward.3} parent=23 // pred_check
        %p873 = pneg %p248
      $region46: #{transformer_forward.3} parent=23 // pred_check_branch
        %875 = sbr.rel (%p873) target = $region48
      $region47: #{transformer_forward.3} parent=23 // pred_region
        %p876 = scmp.lt.s32.totalorder %s42, 1
        %s877 = scalar_select %p876, %s42, 1
        %s878 = scalar_lea.vmem %s7, %s877
      $region48: #{transformer_forward.3} parent=23 // pred_fallthru
        _
      // Predicated region
      $region49: #{transformer_forward.3} parent=23 // pred_check
        %p879 = pneg %p274
      $region50: #{transformer_forward.3} parent=23 // pred_check_branch
        %881 = sbr.rel (%p879) target = $region52
      $region51: #{transformer_forward.3} parent=23 // pred_region
        %p882 = scmp.lt.s32.totalorder %s42, 1
        %s883 = scalar_select %p882, %s42, 1
        %s884 = smul.addr %s883, 4
        %s885 = smul.addr %s884, 4
        %s886 = scalar_lea.vmem %s8, %s885
      $region52: #{transformer_forward.3} parent=23 // pred_fallthru
        _
      // Predicated region
      $region53: #{transformer_forward.3} parent=23 // pred_check
        %p887 = pneg %p300
      $region54: #{transformer_forward.3} parent=23 // pred_check_branch
        %889 = sbr.rel (%p887) target = $region56
      $region55: #{transformer_forward.3} parent=23 // pred_region
        %p890 = scmp.lt.s32.totalorder %s42, 1
        %s891 = scalar_select %p890, %s42, 1
        %s892 = scalar_lea.vmem %s9, %s891
      $region56: #{transformer_forward.3} parent=23 // pred_fallthru
        _
      // Predicated region
      $region57: #{transformer_forward.3} parent=23 // pred_check
        %p893 = pneg %p326
      $region58: #{transformer_forward.3} parent=23 // pred_check_branch
        %895 = sbr.rel (%p893) target = $region60
      $region59: #{transformer_forward.3} parent=23 // pred_region
        %p896 = scmp.lt.s32.totalorder %s42, 1
        %s897 = scalar_select %p896, %s42, 1
        %s898 = scalar_lea.vmem %s10, %s897
      $region60: #{transformer_forward.3} parent=23 // pred_fallthru
        _
      // Predicated region
      $region61: #{transformer_forward.3} parent=23 // pred_check
        %p899 = pneg %p352
      $region62: #{transformer_forward.3} parent=23 // pred_check_branch
        %901 = sbr.rel (%p899) target = $region64
      $region63: #{transformer_forward.3} parent=23 // pred_region
        %p902 = scmp.lt.s32.totalorder %s42, 1
        %s903 = scalar_select %p902, %s42, 1
        %s904 = scalar_lea.vmem %s11, %s903
      $region64: #{transformer_forward.3} parent=23 // pred_fallthru
        _
      // Predicated region
      $region65: #{transformer_forward.3} parent=23 // pred_check
        %p905 = pneg %p378
      $region66: #{transformer_forward.3} parent=23 // pred_check_branch
        %907 = sbr.rel (%p905) target = $region68
      $region67: #{transformer_forward.3} parent=23 // pred_region
        %p908 = scmp.lt.s32.totalorder %s42, 1
        %s909 = scalar_select %p908, %s42, 1
        %s910 = smul.addr %s909, 4
        %s911 = smul.addr %s910, 4
        %s912 = scalar_lea.vmem %s12, %s911
      $region68: #{transformer_forward.3} parent=23 // pred_fallthru
        _
      // Predicated region
      $region69: #{transformer_forward.3} parent=23 // pred_check
        %p913 = pneg %p404
      $region70: #{transformer_forward.3} parent=23 // pred_check_branch
        %915 = sbr.rel (%p913) target = $region72
      $region71: #{transformer_forward.3} parent=23 // pred_region
        %p916 = scmp.lt.s32.totalorder %s42, 1
        %s917 = scalar_select %p916, %s42, 1
        %s918 = scalar_lea.vmem %s13, %s917
      $region72: #{transformer_forward.3} parent=23 // pred_fallthru
        _
      // Predicated region
      $region73: #{transformer_forward.3} parent=23 // pred_check
        %p919 = pneg %p430
      $region74: #{transformer_forward.3} parent=23 // pred_check_branch
        %921 = sbr.rel (%p919) target = $region76
      $region75: #{transformer_forward.3} parent=23 // pred_region
        %p922 = scmp.lt.s32.totalorder %s42, 1
        %s923 = scalar_select %p922, %s42, 1
        %s924 = smul.addr %s923, 4
        %s925 = smul.addr %s924, 4
        %s926 = scalar_lea.vmem %s14, %s925
      $region76: #{transformer_forward.3} parent=23 // pred_fallthru
        _
      // Predicated region
      $region77: #{transformer_forward.3} parent=23 // pred_check
        %p927 = pneg %p456
      $region78: #{transformer_forward.3} parent=23 // pred_check_branch
        %929 = sbr.rel (%p927) target = $region80
      $region79: #{transformer_forward.3} parent=23 // pred_region
        %p930 = scmp.lt.s32.totalorder %s42, 1
        %s931 = scalar_select %p930, %s42, 1
        %s932 = scalar_lea.vmem %s15, %s931
      $region80: #{transformer_forward.3} parent=23 // pred_fallthru
        _
      // Predicated region
      $region81: #{transformer_forward.3} parent=23 // pred_check
        %p933 = pneg %p482
      $region82: #{transformer_forward.3} parent=23 // pred_check_branch
        %935 = sbr.rel (%p933) target = $region84
      $region83: #{transformer_forward.3} parent=23 // pred_region
        %p936 = scmp.lt.s32.totalorder %s42, 1
        %s937 = scalar_select %p936, %s42, 1
        %s938 = smul.addr %s937, 4
        %s939 = smul.addr %s938, 4
        %s940 = scalar_lea.vmem %s16, %s939
      $region84: #{transformer_forward.3} parent=23 // pred_fallthru
        _
      // Predicated region
      $region85: #{transformer_forward.3} parent=23 // pred_check
        %p941 = pneg %p508
      $region86: #{transformer_forward.3} parent=23 // pred_check_branch
        %943 = sbr.rel (%p941) target = $region88
      $region87: #{transformer_forward.3} parent=23 // pred_region
        %p944 = scmp.lt.s32.totalorder %s42, 1
        %s945 = scalar_select %p944, %s42, 1
        %s946 = scalar_lea.vmem %s17, %s945
      $region88: #{transformer_forward.3} parent=23 // pred_fallthru
        _
      // Predicated region
      $region89: #{transformer_forward.3} parent=23 // pred_check
        %p947 = pneg %p534
      $region90: #{transformer_forward.3} parent=23 // pred_check_branch
        %949 = sbr.rel (%p947) target = $region92
      $region91: #{transformer_forward.3} parent=23 // pred_region
        %p950 = scmp.lt.s32.totalorder %s42, 1
        %s951 = scalar_select %p950, %s42, 1
        %s952 = smul.addr %s951, 4
        %s953 = smul.addr %s952, 4
        %s954 = scalar_lea.vmem %s18, %s953
      $region92: #{transformer_forward.3} parent=23 // pred_fallthru
        _
      // Predicated region
      $region93: #{transformer_forward.3} parent=23 // pred_check
        %p955 = pneg %p560
      $region94: #{transformer_forward.3} parent=23 // pred_check_branch
        %957 = sbr.rel (%p955) target = $region96
      $region95: #{transformer_forward.3} parent=23 // pred_region
        %p958 = scmp.lt.s32.totalorder %s42, 1
        %s959 = scalar_select %p958, %s42, 1
        %s960 = scalar_lea.vmem %s19, %s959
      $region96: #{transformer_forward.3} parent=23 // pred_fallthru
        _
      // Predicated region
      $region97: #{transformer_forward.3} parent=23 // pred_check
        %p961 = pneg %p586
      $region98: #{transformer_forward.3} parent=23 // pred_check_branch
        %963 = sbr.rel (%p961) target = $region100
      $region99: #{transformer_forward.3} parent=23 // pred_region
        %p964 = scmp.lt.s32.totalorder %s42, 1
        %s965 = scalar_select %p964, %s42, 1
        %s966 = scalar_lea.vmem %s20, %s965
      $region100: #{transformer_forward.3} parent=23 // pred_fallthru
        _
      // Predicated region
      $region101: #{transformer_forward.3} parent=23 // pred_check
        %p967 = pneg %p612
      $region102: #{transformer_forward.3} parent=23 // pred_check_branch
        %969 = sbr.rel (%p967) target = $region104
      $region103: #{transformer_forward.3} parent=23 // pred_region
        %p970 = scmp.lt.s32.totalorder %s42, 1
        %s971 = scalar_select %p970, %s42, 1
        %s972 = scalar_lea.vmem %s21, %s971
      $region104: #{transformer_forward.3} parent=23 // pred_fallthru
        _
      // Predicated region
      $region105: #{transformer_forward.3} parent=23 // pred_check
        %p973 = pneg %p638
      $region106: #{transformer_forward.3} parent=23 // pred_check_branch
        %975 = sbr.rel (%p973) target = $region108
      $region107: #{transformer_forward.3} parent=23 // pred_region
        %p976 = scmp.lt.s32.totalorder %s42, 1
        %s977 = scalar_select %p976, %s42, 1
        %s978 = smul.addr %s977, 4
        %s979 = smul.addr %s978, 4
        %s980 = scalar_lea.vmem %s22, %s979
      $region108: #{transformer_forward.3} parent=23 // pred_fallthru
        _
      // Predicated region
      $region109: #{transformer_forward.3} parent=23 // pred_check
        %p981 = pneg %p664
      $region110: #{transformer_forward.3} parent=23 // pred_check_branch
        %983 = sbr.rel (%p981) target = $region112
      $region111: #{transformer_forward.3} parent=23 // pred_region
        %p984 = scmp.lt.s32.totalorder %s42, 1
        %s985 = scalar_select %p984, %s42, 1
        %s986 = scalar_lea.vmem %s23, %s985
      $region112: #{transformer_forward.3} parent=23 // pred_fallthru
        _
      // Predicated region
      $region113: #{transformer_forward.3} parent=23 // pred_check
        %p987 = pneg %p690
      $region114: #{transformer_forward.3} parent=23 // pred_check_branch
        %989 = sbr.rel (%p987) target = $region116
      $region115: #{transformer_forward.3} parent=23 // pred_region
        %p990 = scmp.lt.s32.totalorder %s42, 1
        %s991 = scalar_select %p990, %s42, 1
        %s992 = smul.addr %s991, 8
        %s993 = smul.addr %s992, 4
        %s994 = scalar_lea.vmem %s24, %s993
      $region116: #{transformer_forward.3} parent=23 // pred_fallthru
        _
      // Predicated region
      $region117: #{transformer_forward.3} parent=23 // pred_check
        %p995 = pneg %p716
      $region118: #{transformer_forward.3} parent=23 // pred_check_branch
        %997 = sbr.rel (%p995) target = $region120
      $region119: #{transformer_forward.3} parent=23 // pred_region
        %p998 = scmp.lt.s32.totalorder %s42, 1
        %s999 = scalar_select %p998, %s42, 1
        %s1000 = scalar_lea.vmem %s25, %s999
      $region120: #{transformer_forward.3} parent=23 // pred_fallthru
        _
      // Predicated region
      $region121: #{transformer_forward.3} parent=23 // pred_check
        %p1001 = pneg %p742
      $region122: #{transformer_forward.3} parent=23 // pred_check_branch
        %1003 = sbr.rel (%p1001) target = $region124
      $region123: #{transformer_forward.3} parent=23 // pred_region
        %p1004 = scmp.lt.s32.totalorder %s42, 1
        %s1005 = scalar_select %p1004, %s42, 1
        %s1006 = scalar_lea.vmem %s26, %s1005
      $region124: #{transformer_forward.3} parent=23 // pred_fallthru
        _
      // Predicated region
      $region125: #{transformer_forward.3} parent=23 // pred_check
        %p1007 = pneg %p768
      $region126: #{transformer_forward.3} parent=23 // pred_check_branch
        %1009 = sbr.rel (%p1007) target = $region128
      $region127: #{transformer_forward.3} parent=23 // pred_region
        %p1010 = scmp.lt.s32.totalorder %s42, 1
        %s1011 = scalar_select %p1010, %s42, 1
        %s1012 = scalar_lea.vmem %s27, %s1011
      $region128: #{transformer_forward.3} parent=23 // pred_fallthru
        _
    $region24: #{transformer_forward.3} parent=5 // pred_fallthru
      _
    %p1013 = scmp.le.s32.totalorder 1, %s34
    %p1014 = scmp.lt.s32.totalorder %s34, 3
    %p1015 = pnand %p1013, %p1014
    %p1016 = pneg %p1015
    // Predicated region
    $region129: #{transformer_forward.3} parent=5 // pred_check
      _
    $region130: #{transformer_forward.3} parent=5 // pred_check_branch
      %1018 = sbr.rel (%p1015) target = $region132
    $region131: #{transformer_forward.3} parent=5 // pred_region
      %s1019 = ssub.s32 %s34, 1
      %s1020 = smul.u32 2, %s43
      %p1021 = scmp.lt.s32.totalorder %s1020, 1
      %s1022 = scalar_select %p1021, %s1020, 1
      %s1023 = smul.addr %s1022, 8
      %s1024 = scalar_lea.vmem %s0, %s1023
      %p1025 = pneg %p72
      %p1026 = pneg %p69
      %s1027 = smul.u32 2, %s43
      %p1028 = scmp.lt.s32.totalorder %s1027, 1
      %s1029 = scalar_select %p1028, %s1027, 1
      %s1030 = smul.addr %s1029, 8
      %s1031 = scalar_lea.vmem %s1, %s1030
      %p1032 = pneg %p98
      %p1033 = pneg %p95
      %p1034 = scmp.lt.s32.totalorder %s44, 1
      %s1035 = scalar_select %p1034, %s44, 1
      %s1036 = smul.addr %s1035, 4
      %s1037 = smul.addr %s1036, 4
      %s1038 = scalar_lea.vmem %s2, %s1037
      %p1039 = pneg %p124
      %p1040 = pneg %p121
      %p1041 = scmp.lt.s32.totalorder %s44, 1
      %s1042 = scalar_select %p1041, %s44, 1
      %s1043 = scalar_lea.vmem %s3, %s1042
      %p1044 = pneg %p150
      %p1045 = pneg %p147
      %p1046 = scmp.lt.s32.totalorder %s44, 1
      %s1047 = scalar_select %p1046, %s44, 1
      %s1048 = smul.addr %s1047, 4
      %s1049 = smul.addr %s1048, 4
      %s1050 = scalar_lea.vmem %s4, %s1049
      %p1051 = pneg %p176
      %p1052 = pneg %p173
      %p1053 = scmp.lt.s32.totalorder %s44, 1
      %s1054 = scalar_select %p1053, %s44, 1
      %s1055 = scalar_lea.vmem %s5, %s1054
      %p1056 = pneg %p202
      %p1057 = pneg %p199
      %p1058 = scmp.lt.s32.totalorder %s44, 1
      %s1059 = scalar_select %p1058, %s44, 1
      %s1060 = smul.addr %s1059, 4
      %s1061 = smul.addr %s1060, 4
      %s1062 = scalar_lea.vmem %s6, %s1061
      %p1063 = pneg %p228
      %p1064 = pneg %p225
      %p1065 = scmp.lt.s32.totalorder %s44, 1
      %s1066 = scalar_select %p1065, %s44, 1
      %s1067 = scalar_lea.vmem %s7, %s1066
      %p1068 = pneg %p254
      %p1069 = pneg %p251
      %p1070 = scmp.lt.s32.totalorder %s44, 1
      %s1071 = scalar_select %p1070, %s44, 1
      %s1072 = smul.addr %s1071, 4
      %s1073 = smul.addr %s1072, 4
      %s1074 = scalar_lea.vmem %s8, %s1073
      %p1075 = pneg %p280
      %p1076 = pneg %p277
      %p1077 = scmp.lt.s32.totalorder %s44, 1
      %s1078 = scalar_select %p1077, %s44, 1
      %s1079 = scalar_lea.vmem %s9, %s1078
      %p1080 = pneg %p306
      %p1081 = pneg %p303
      %p1082 = scmp.lt.s32.totalorder %s44, 1
      %s1083 = scalar_select %p1082, %s44, 1
      %s1084 = scalar_lea.vmem %s10, %s1083
      %p1085 = pneg %p332
      %p1086 = pneg %p329
      %p1087 = scmp.lt.s32.totalorder %s44, 1
      %s1088 = scalar_select %p1087, %s44, 1
      %s1089 = scalar_lea.vmem %s11, %s1088
      %p1090 = pneg %p358
      %p1091 = pneg %p355
      %p1092 = scmp.lt.s32.totalorder %s44, 1
      %s1093 = scalar_select %p1092, %s44, 1
      %s1094 = smul.addr %s1093, 4
      %s1095 = smul.addr %s1094, 4
      %s1096 = scalar_lea.vmem %s12, %s1095
      %p1097 = pneg %p384
      %p1098 = pneg %p381
      %p1099 = scmp.lt.s32.totalorder %s44, 1
      %s1100 = scalar_select %p1099, %s44, 1
      %s1101 = scalar_lea.vmem %s13, %s1100
      %p1102 = pneg %p410
      %p1103 = pneg %p407
      %p1104 = scmp.lt.s32.totalorder %s44, 1
      %s1105 = scalar_select %p1104, %s44, 1
      %s1106 = smul.addr %s1105, 4
      %s1107 = smul.addr %s1106, 4
      %s1108 = scalar_lea.vmem %s14, %s1107
      %p1109 = pneg %p436
      %p1110 = pneg %p433
      %p1111 = scmp.lt.s32.totalorder %s44, 1
      %s1112 = scalar_select %p1111, %s44, 1
      %s1113 = scalar_lea.vmem %s15, %s1112
      %p1114 = pneg %p462
      %p1115 = pneg %p459
      %p1116 = scmp.lt.s32.totalorder %s44, 1
      %s1117 = scalar_select %p1116, %s44, 1
      %s1118 = smul.addr %s1117, 4
      %s1119 = smul.addr %s1118, 4
      %s1120 = scalar_lea.vmem %s16, %s1119
      %p1121 = pneg %p488
      %p1122 = pneg %p485
      %p1123 = scmp.lt.s32.totalorder %s44, 1
      %s1124 = scalar_select %p1123, %s44, 1
      %s1125 = scalar_lea.vmem %s17, %s1124
      %p1126 = pneg %p514
      %p1127 = pneg %p511
      %p1128 = scmp.lt.s32.totalorder %s44, 1
      %s1129 = scalar_select %p1128, %s44, 1
      %s1130 = smul.addr %s1129, 4
      %s1131 = smul.addr %s1130, 4
      %s1132 = scalar_lea.vmem %s18, %s1131
      %p1133 = pneg %p540
      %p1134 = pneg %p537
      %p1135 = scmp.lt.s32.totalorder %s44, 1
      %s1136 = scalar_select %p1135, %s44, 1
      %s1137 = scalar_lea.vmem %s19, %s1136
      %p1138 = pneg %p566
      %p1139 = pneg %p563
      %p1140 = scmp.lt.s32.totalorder %s44, 1
      %s1141 = scalar_select %p1140, %s44, 1
      %s1142 = scalar_lea.vmem %s20, %s1141
      %p1143 = pneg %p592
      %p1144 = pneg %p589
      %p1145 = scmp.lt.s32.totalorder %s44, 1
      %s1146 = scalar_select %p1145, %s44, 1
      %s1147 = scalar_lea.vmem %s21, %s1146
      %p1148 = pneg %p618
      %p1149 = pneg %p615
      %p1150 = scmp.lt.s32.totalorder %s44, 1
      %s1151 = scalar_select %p1150, %s44, 1
      %s1152 = smul.addr %s1151, 4
      %s1153 = smul.addr %s1152, 4
      %s1154 = scalar_lea.vmem %s22, %s1153
      %p1155 = pneg %p644
      %p1156 = pneg %p641
      %p1157 = scmp.lt.s32.totalorder %s44, 1
      %s1158 = scalar_select %p1157, %s44, 1
      %s1159 = scalar_lea.vmem %s23, %s1158
      %p1160 = pneg %p670
      %p1161 = pneg %p667
      %p1162 = scmp.lt.s32.totalorder %s44, 1
      %s1163 = scalar_select %p1162, %s44, 1
      %s1164 = smul.addr %s1163, 8
      %s1165 = smul.addr %s1164, 4
      %s1166 = scalar_lea.vmem %s24, %s1165
      %p1167 = pneg %p696
      %p1168 = pneg %p693
      %p1169 = scmp.lt.s32.totalorder %s44, 1
      %s1170 = scalar_select %p1169, %s44, 1
      %s1171 = scalar_lea.vmem %s25, %s1170
      %p1172 = pneg %p722
      %p1173 = pneg %p719
      %p1174 = scmp.lt.s32.totalorder %s44, 1
      %s1175 = scalar_select %p1174, %s44, 1
      %s1176 = scalar_lea.vmem %s26, %s1175
      %p1177 = pneg %p748
      %p1178 = pneg %p745
      %p1179 = scmp.lt.s32.totalorder %s44, 1
      %s1180 = scalar_select %p1179, %s44, 1
      %s1181 = scalar_lea.vmem %s27, %s1180
      %p1182 = pneg %p774
      %p1183 = pneg %p771
      %p1184 = pneg %p800
      %p1185 = pneg %p797
      %s1186 = smul.u32 2, %s43
      %p1187 = scmp.lt.s32.totalorder %s1186, 1
      %s1188 = scalar_select %p1187, %s1186, 1
      %s1189 = smul.addr %s1188, 8
      %s1190 = scalar_lea.vmem %s28, %s1189
      %s1191 = smul.u32 2, %s43
      %p1192 = scmp.lt.s32.totalorder %s1191, 1
      %s1193 = scalar_select %p1192, %s1191, 1
      %s1194 = smul.addr %s1193, 8
      %s1195 = scalar_lea.vmem %s0, %s1194
      %s1196 = smul.u32 2, %s43
      %s1197 = smul.u32 2, %s43
      %p1198 = scmp.lt.s32.totalorder %s1197, 1
      %s1199 = scalar_select %p1198, %s1197, 1
      %s1200 = smul.addr %s1199, 8
      %s1201 = scalar_lea.vmem %s1, %s1200
      %s1202 = smul.u32 2, %s43
      %p1203 = scmp.lt.s32.totalorder %s44, 1
      %s1204 = scalar_select %p1203, %s44, 1
      %s1205 = smul.addr %s1204, 4
      %s1206 = smul.addr %s1205, 4
      %s1207 = scalar_lea.vmem %s2, %s1206
      %p1208 = scmp.lt.s32.totalorder %s44, 1
      %s1209 = scalar_select %p1208, %s44, 1
      %s1210 = scalar_lea.vmem %s3, %s1209
      %p1211 = scmp.lt.s32.totalorder %s44, 1
      %s1212 = scalar_select %p1211, %s44, 1
      %s1213 = smul.addr %s1212, 4
      %s1214 = smul.addr %s1213, 4
      %s1215 = scalar_lea.vmem %s4, %s1214
      %p1216 = scmp.lt.s32.totalorder %s44, 1
      %s1217 = scalar_select %p1216, %s44, 1
      %s1218 = scalar_lea.vmem %s5, %s1217
      %p1219 = scmp.lt.s32.totalorder %s44, 1
      %s1220 = scalar_select %p1219, %s44, 1
      %s1221 = smul.addr %s1220, 4
      %s1222 = smul.addr %s1221, 4
      %s1223 = scalar_lea.vmem %s6, %s1222
      %p1224 = scmp.lt.s32.totalorder %s44, 1
      %s1225 = scalar_select %p1224, %s44, 1
      %s1226 = scalar_lea.vmem %s7, %s1225
      %p1227 = scmp.lt.s32.totalorder %s44, 1
      %s1228 = scalar_select %p1227, %s44, 1
      %s1229 = smul.addr %s1228, 4
      %s1230 = smul.addr %s1229, 4
      %s1231 = scalar_lea.vmem %s8, %s1230
      %p1232 = scmp.lt.s32.totalorder %s44, 1
      %s1233 = scalar_select %p1232, %s44, 1
      %s1234 = scalar_lea.vmem %s9, %s1233
      %p1235 = scmp.lt.s32.totalorder %s44, 1
      %s1236 = scalar_select %p1235, %s44, 1
      %s1237 = scalar_lea.vmem %s10, %s1236
      %p1238 = scmp.lt.s32.totalorder %s44, 1
      %s1239 = scalar_select %p1238, %s44, 1
      %s1240 = scalar_lea.vmem %s11, %s1239
      %p1241 = scmp.lt.s32.totalorder %s44, 1
      %s1242 = scalar_select %p1241, %s44, 1
      %s1243 = smul.addr %s1242, 4
      %s1244 = smul.addr %s1243, 4
      %s1245 = scalar_lea.vmem %s12, %s1244
      %p1246 = scmp.lt.s32.totalorder %s44, 1
      %s1247 = scalar_select %p1246, %s44, 1
      %s1248 = scalar_lea.vmem %s13, %s1247
      %p1249 = scmp.lt.s32.totalorder %s44, 1
      %s1250 = scalar_select %p1249, %s44, 1
      %s1251 = smul.addr %s1250, 4
      %s1252 = smul.addr %s1251, 4
      %s1253 = scalar_lea.vmem %s14, %s1252
      %p1254 = scmp.lt.s32.totalorder %s44, 1
      %s1255 = scalar_select %p1254, %s44, 1
      %s1256 = scalar_lea.vmem %s15, %s1255
      %p1257 = scmp.lt.s32.totalorder %s44, 1
      %s1258 = scalar_select %p1257, %s44, 1
      %s1259 = smul.addr %s1258, 4
      %s1260 = smul.addr %s1259, 4
      %s1261 = scalar_lea.vmem %s16, %s1260
      %p1262 = scmp.lt.s32.totalorder %s44, 1
      %s1263 = scalar_select %p1262, %s44, 1
      %s1264 = scalar_lea.vmem %s17, %s1263
      %p1265 = scmp.lt.s32.totalorder %s44, 1
      %s1266 = scalar_select %p1265, %s44, 1
      %s1267 = smul.addr %s1266, 4
      %s1268 = smul.addr %s1267, 4
      %s1269 = scalar_lea.vmem %s18, %s1268
      %p1270 = scmp.lt.s32.totalorder %s44, 1
      %s1271 = scalar_select %p1270, %s44, 1
      %s1272 = scalar_lea.vmem %s19, %s1271
      %p1273 = scmp.lt.s32.totalorder %s44, 1
      %s1274 = scalar_select %p1273, %s44, 1
      %s1275 = scalar_lea.vmem %s20, %s1274
      %p1276 = scmp.lt.s32.totalorder %s44, 1
      %s1277 = scalar_select %p1276, %s44, 1
      %s1278 = scalar_lea.vmem %s21, %s1277
      %p1279 = scmp.lt.s32.totalorder %s44, 1
      %s1280 = scalar_select %p1279, %s44, 1
      %s1281 = smul.addr %s1280, 4
      %s1282 = smul.addr %s1281, 4
      %s1283 = scalar_lea.vmem %s22, %s1282
      %p1284 = scmp.lt.s32.totalorder %s44, 1
      %s1285 = scalar_select %p1284, %s44, 1
      %s1286 = scalar_lea.vmem %s23, %s1285
      %p1287 = scmp.lt.s32.totalorder %s44, 1
      %s1288 = scalar_select %p1287, %s44, 1
      %s1289 = smul.addr %s1288, 8
      %s1290 = smul.addr %s1289, 4
      %s1291 = scalar_lea.vmem %s24, %s1290
      %p1292 = scmp.lt.s32.totalorder %s44, 1
      %s1293 = scalar_select %p1292, %s44, 1
      %s1294 = scalar_lea.vmem %s25, %s1293
      %p1295 = scmp.lt.s32.totalorder %s44, 1
      %s1296 = scalar_select %p1295, %s44, 1
      %s1297 = scalar_lea.vmem %s26, %s1296
      %p1298 = scmp.lt.s32.totalorder %s44, 1
      %s1299 = scalar_select %p1298, %s44, 1
      %s1300 = scalar_lea.vmem %s27, %s1299
      %s1301 = smul.u32 2, %s43
      %p1302 = scmp.lt.s32.totalorder %s1301, 1
      %s1303 = scalar_select %p1302, %s1301, 1
      %s1304 = smul.addr %s1303, 8
      %s1305 = scalar_lea.vmem %s28, %s1304
      %s1306 = smul.u32 2, %s43
      %p1308 = scmp.eq.s32.totalorder %s44, 0
      // Predicated region
      $region133: #{transformer_forward.3} parent=131 // pred_check
        %p1309 = pneg %p1308
      $region134: #{transformer_forward.3} parent=131 // pred_check_branch
        %1311 = sbr.rel (%p1309) target = $region136
      $region135: #{transformer_forward.3} parent=131 // pred_region
        %v1312 = vld [vmem:[%s1195] sm:$0xff]
        %v1313 = vld [vmem:[%s1195 + $0x8] sm:$0xff]
        %vm1314 = vcmask 261120
        %1315 = vst.msk [vmem:[%s1305] sm:$0xff] %vm1314, %v1312
        %1316 = vst.msk [vmem:[%s1305 + $0x8] sm:$0xff] %vm1314, %v1313
      $region136: #{transformer_forward.3} parent=131 // pred_fallthru
        _
      %v1317 = vld [vmem:[%s1305] sm:$0xff]
      %v1318 = vld [vmem:[%s1305 + $0x8] sm:$0xff]
      %v1319 = vpack.c.bf16 %v1318, %v1317
      %v1320 = vld [vmem:[%s1207] sm:$0xf]
      %v1321 = vld [vmem:[%s1207 + $0x4] sm:$0xf]
      %v1322 = vld [vmem:[%s1207 + $0x8] sm:$0xf]
      %v1323 = vld [vmem:[%s1207 + $0xc] sm:$0xf]
      %v1324 = vld [vmem:[%s1210] sm:$0x1]
      %v1326 = vperm.slane %v1324, 0
      %v1332 = vunpack.c.l.b16 %v1320
      %v1333 = vunpack.c.l.b16 %v1321
      %v1334 = vunpack.c.l.b16 %v1322
      %v1335 = vunpack.c.l.b16 %v1323
      %v1336 = vpack.c.b16 %v1333, %v1332
      %v1337 = vpack.c.b16 %v1335, %v1334
      %vm1340 = vcmask 261120
      %v1342 = vsel %vm1340, %v1319, 0
      %1344 = vmatpush.bf16.msra.mxu0 0
      %1345 = vmatpush.bf16.msra.mxu0 0
      %1346 = vmatpush.bf16.msra.mxu0 0
      %1347 = vmatpush.bf16.msra.mxu0 0
      %1348 = vmatpush.bf16.msra.mxu0 0
      %1349 = vmatpush.bf16.msra.mxu0 0
      %1350 = vmatpush.bf16.msra.mxu0 %v1337
      %1351 = vmatpush.bf16.msra.mxu0 %v1336
      %1352 = vmatmul.bf16.gmra.mxu0 %v1342
      %v1353 = vpop.f32.mrf.mxu0
      %v1354 = vadd.f32 %v1326, %v1353
      %v1355 = vpop.f32.mrf.mxu0
      %v1356 = vadd.f32 %v1326, %v1355
      %1357 = vdwg.mxu0
      %v1358 = vld [vmem:[%s1215] sm:$0xf]
      %v1359 = vld [vmem:[%s1215 + $0x4] sm:$0xf]
      %v1360 = vld [vmem:[%s1215 + $0x8] sm:$0xf]
      %v1361 = vld [vmem:[%s1215 + $0xc] sm:$0xf]
      %v1362 = vld [vmem:[%s1218] sm:$0x1]
      %v1364 = vperm.slane %v1362, 0
      %v1370 = vunpack.c.l.b16 %v1358
      %v1371 = vunpack.c.l.b16 %v1359
      %v1372 = vunpack.c.l.b16 %v1360
      %v1373 = vunpack.c.l.b16 %v1361
      %v1374 = vpack.c.b16 %v1371, %v1370
      %v1375 = vpack.c.b16 %v1373, %v1372
      %1378 = vmatpush.bf16.msra.mxu0 0
      %1379 = vmatpush.bf16.msra.mxu0 0
      %1380 = vmatpush.bf16.msra.mxu0 0
      %1381 = vmatpush.bf16.msra.mxu0 0
      %1382 = vmatpush.bf16.msra.mxu0 0
      %1383 = vmatpush.bf16.msra.mxu0 0
      %1384 = vmatpush.bf16.msra.mxu0 %v1375
      %1385 = vmatpush.bf16.msra.mxu0 %v1374
      %1386 = vmatmul.bf16.gmra.mxu0 %v1342
      %v1387 = vpop.f32.mrf.mxu0
      %v1388 = vadd.f32 %v1364, %v1387
      %v1389 = vpop.f32.mrf.mxu0
      %v1390 = vadd.f32 %v1364, %v1389
      %1391 = vdwg.mxu0
      %v1392 = vld [vmem:[%s1223] sm:$0xf]
      %v1393 = vld [vmem:[%s1223 + $0x4] sm:$0xf]
      %v1394 = vld [vmem:[%s1223 + $0x8] sm:$0xf]
      %v1395 = vld [vmem:[%s1223 + $0xc] sm:$0xf]
      %v1396 = vld [vmem:[%s1226] sm:$0x1]
      %v1398 = vperm.slane %v1396, 0
      %v1404 = vunpack.c.l.b16 %v1392
      %v1405 = vunpack.c.l.b16 %v1393
      %v1406 = vunpack.c.l.b16 %v1394
      %v1407 = vunpack.c.l.b16 %v1395
      %v1408 = vpack.c.b16 %v1405, %v1404
      %v1409 = vpack.c.b16 %v1407, %v1406
      %1412 = vmatpush.bf16.msra.mxu0 0
      %1413 = vmatpush.bf16.msra.mxu0 0
      %1414 = vmatpush.bf16.msra.mxu0 0
      %1415 = vmatpush.bf16.msra.mxu0 0
      %1416 = vmatpush.bf16.msra.mxu0 0
      %1417 = vmatpush.bf16.msra.mxu0 0
      %1418 = vmatpush.bf16.msra.mxu0 %v1409
      %1419 = vmatpush.bf16.msra.mxu0 %v1408
      %1420 = vmatmul.bf16.gmra.mxu0 %v1342
      %v1421 = vpop.f32.mrf.mxu0
      %v1422 = vadd.f32 %v1398, %v1421
      %v1423 = vpop.f32.mrf.mxu0
      %v1424 = vadd.f32 %v1398, %v1423
      %1425 = vdwg.mxu0
      %v1426 = vld [vmem:[%s1231] sm:$0xf]
      %v1427 = vld [vmem:[%s1231 + $0x4] sm:$0xf]
      %v1428 = vld [vmem:[%s1231 + $0x8] sm:$0xf]
      %v1429 = vld [vmem:[%s1231 + $0xc] sm:$0xf]
      %v1430 = vld [vmem:[%s1234] sm:$0x1]
      %v1431 = vmul.f32 %v1354, 0.35355338
      %v1432 = vmul.f32 %v1356, 0.35355338
      %v1433 = vpack.c.bf16 %v1431, %v1431
      %v1434 = vpack.c.bf16 %v1432, %v1432
      %v1435 = vpack.c.bf16 %v1388, %v1388
      %v1436 = vpack.c.bf16 %v1390, %v1390
      %v1437 = vpack.c.bf16 %v1422, %v1422
      %v1438 = vpack.c.bf16 %v1424, %v1424
      %v1439 = vlaneseq
      %v1440 = vshrl.u32 %v1439, 7
      %v1441 = vlaneseq
      %v1442 = vand.u32 %v1441, 127
      %vm1443 = vcmp.gt.s32.totalorder %v1442, %v1440
      %v1444 = vsel %vm1443, -1e+09, 0.0
      %vm1445 = vcmask 64512
      %v1447 = vsel %vm1445, %v1433, 0
      %v1450 = vsel %vm1445, %v1435, 0
      %1452 = vmatpush.bf16.xpose.msra.mxu0 0
      %1453 = vmatpush.bf16.xpose.msra.mxu0 0
      %1454 = vmatpush.bf16.xpose.msra.mxu0 0
      %1455 = vmatpush.bf16.xpose.msra.mxu0 0
      %1456 = vmatpush.bf16.xpose.msra.mxu0 0
      %1457 = vmatpush.bf16.xpose.msra.mxu0 0
      %1458 = vmatpush.bf16.xpose.msra.mxu0 0
      %1459 = vmatpush.bf16.xpose.msra.mxu0 %v1450
      %1460 = vmatmul.bf16.gmra.mxu0 %v1447
      %v1461 = vpop.f32.mrf.mxu0
      %v1462 = vadd.f32 %v1444, %v1461
      %v1463 = vpop.f32.mrf.mxu0
      %1464 = vdwg.mxu0
      %v1466 = vsel %vm1445, %v1434, 0
      %v1469 = vsel %vm1445, %v1436, 0
      %1471 = vmatpush.bf16.xpose.msra.mxu0 0
      %1472 = vmatpush.bf16.xpose.msra.mxu0 0
      %1473 = vmatpush.bf16.xpose.msra.mxu0 0
      %1474 = vmatpush.bf16.xpose.msra.mxu0 0
      %1475 = vmatpush.bf16.xpose.msra.mxu0 0
      %1476 = vmatpush.bf16.xpose.msra.mxu0 0
      %1477 = vmatpush.bf16.xpose.msra.mxu0 0
      %1478 = vmatpush.bf16.xpose.msra.mxu0 %v1469
      %1479 = vmatmul.bf16.gmra.mxu0 %v1466
      %v1480 = vpop.f32.mrf.mxu0
      %v1481 = vadd.f32 %v1444, %v1480
      %v1482 = vpop.f32.mrf.mxu0
      %1483 = vdwg.mxu0
      %v1484 = vsel %vm1445, %v1462, -inf
      %1485 = vmax.xlane.f32.xlu0 %v1484
      %v1486 = vpop.xlane.xlu0 %1485
      %v1487 = vsel %vm1445, %v1481, -inf
      %1488 = vmax.xlane.f32.xlu0 %v1487
      %v1489 = vpop.xlane.xlu0 %1488
      %v1490 = vsub.f32 %v1462, %v1486
      %v1491 = vsub.f32 %v1481, %v1489
      %v1492 = vmul.f32 %v1490, 1.442695
      %v1493 = vpow.pop %v1492
      %v1494 = vmul.f32 %v1491, 1.442695
      %v1495 = vpow.pop %v1494
      %v1496 = vsel %vm1445, %v1493, 0.0
      %1497 = vadd.xlane.f32.xlu0 %v1496
      %v1498 = vpop.xlane.xlu0 %1497
      %v1499 = vsel %vm1445, %v1495, 0.0
      %1500 = vadd.xlane.f32.xlu0 %v1499
      %v1501 = vpop.xlane.xlu0 %1500
      %v1502 = vrcp.pop %v1498
      %v1503 = vrcp.pop %v1501
      %v1504 = vmul.f32 %v1493, %v1502
      %v1505 = vmul.f32 %v1495, %v1503
      %v1506 = vpack.c.bf16 %v1504, %v1504
      %v1507 = vpack.c.bf16 %v1505, %v1505
      %v1509 = vsel %vm1445, %v1506, 0
      %vm1511 = vcmask 1043456
      %v1513 = vsel %vm1511, %v1437, 0
      %1515 = vmatpush.bf16.msra.mxu0 0
      %1516 = vmatpush.bf16.msra.mxu0 0
      %1517 = vmatpush.bf16.msra.mxu0 0
      %1518 = vmatpush.bf16.msra.mxu0 0
      %1519 = vmatpush.bf16.msra.mxu0 0
      %1520 = vmatpush.bf16.msra.mxu0 0
      %1521 = vmatpush.bf16.msra.mxu0 0
      %1522 = vmatpush.bf16.msra.mxu0 %v1513
      %1523 = vmatmul.bf16.gmra.mxu0 %v1509
      %v1524 = vpop.f32.mrf.mxu0
      %v1525 = vadd.f32 0.0, %v1524
      %v1526 = vpop.f32.mrf.mxu0
      %1527 = vdwg.mxu0
      %v1529 = vsel %vm1445, %v1507, 0
      %v1532 = vsel %vm1511, %v1438, 0
      %1534 = vmatpush.bf16.msra.mxu0 0
      %1535 = vmatpush.bf16.msra.mxu0 0
      %1536 = vmatpush.bf16.msra.mxu0 0
      %1537 = vmatpush.bf16.msra.mxu0 0
      %1538 = vmatpush.bf16.msra.mxu0 0
      %1539 = vmatpush.bf16.msra.mxu0 0
      %1540 = vmatpush.bf16.msra.mxu0 0
      %1541 = vmatpush.bf16.msra.mxu0 %v1532
      %1542 = vmatmul.bf16.gmra.mxu0 %v1529
      %v1543 = vpop.f32.mrf.mxu0
      %v1544 = vadd.f32 0.0, %v1543
      %v1545 = vpop.f32.mrf.mxu0
      %1546 = vdwg.mxu0
      %v1548 = vunpack.c.l.b16 %v1433
      %v1549 = vpack.c.b16 %v1548, %v1548
      %1550 = vrot.lane.b32.xlu0 %v1549, 120
      %v1551 = vpop.permute.xlu0 %1550
      %v1553 = vunpack.c.l.b16 %v1435
      %v1554 = vpack.c.b16 %v1553, %v1553
      %1555 = vrot.lane.b32.xlu0 %v1554, 120
      %v1556 = vpop.permute.xlu0 %1555
      %v1558 = vsel %vm1445, %v1551, 0
      %v1561 = vsel %vm1445, %v1556, 0
      %1563 = vmatpush.bf16.xpose.msra.mxu0 0
      %1564 = vmatpush.bf16.xpose.msra.mxu0 0
      %1565 = vmatpush.bf16.xpose.msra.mxu0 0
      %1566 = vmatpush.bf16.xpose.msra.mxu0 0
      %1567 = vmatpush.bf16.xpose.msra.mxu0 0
      %1568 = vmatpush.bf16.xpose.msra.mxu0 0
      %1569 = vmatpush.bf16.xpose.msra.mxu0 0
      %1570 = vmatpush.bf16.xpose.msra.mxu0 %v1561
      %1571 = vmatmul.bf16.gmra.mxu0 %v1558
      %v1572 = vpop.f32.mrf.mxu0
      %v1573 = vadd.f32 %v1444, %v1572
      %v1574 = vpop.f32.mrf.mxu0
      %1575 = vdwg.mxu0
      %v1577 = vunpack.c.l.b16 %v1434
      %v1578 = vpack.c.b16 %v1577, %v1577
      %1579 = vrot.lane.b32.xlu0 %v1578, 120
      %v1580 = vpop.permute.xlu0 %1579
      %v1582 = vunpack.c.l.b16 %v1436
      %v1583 = vpack.c.b16 %v1582, %v1582
      %1584 = vrot.lane.b32.xlu0 %v1583, 120
      %v1585 = vpop.permute.xlu0 %1584
      %v1587 = vsel %vm1445, %v1580, 0
      %v1590 = vsel %vm1445, %v1585, 0
      %1592 = vmatpush.bf16.xpose.msra.mxu0 0
      %1593 = vmatpush.bf16.xpose.msra.mxu0 0
      %1594 = vmatpush.bf16.xpose.msra.mxu0 0
      %1595 = vmatpush.bf16.xpose.msra.mxu0 0
      %1596 = vmatpush.bf16.xpose.msra.mxu0 0
      %1597 = vmatpush.bf16.xpose.msra.mxu0 0
      %1598 = vmatpush.bf16.xpose.msra.mxu0 0
      %1599 = vmatpush.bf16.xpose.msra.mxu0 %v1590
      %1600 = vmatmul.bf16.gmra.mxu0 %v1587
      %v1601 = vpop.f32.mrf.mxu0
      %v1602 = vadd.f32 %v1444, %v1601
      %v1603 = vpop.f32.mrf.mxu0
      %1604 = vdwg.mxu0
      %v1605 = vsel %vm1445, %v1573, -inf
      %1606 = vmax.xlane.f32.xlu0 %v1605
      %v1607 = vpop.xlane.xlu0 %1606
      %v1608 = vsel %vm1445, %v1602, -inf
      %1609 = vmax.xlane.f32.xlu0 %v1608
      %v1610 = vpop.xlane.xlu0 %1609
      %v1611 = vsub.f32 %v1573, %v1607
      %v1612 = vsub.f32 %v1602, %v1610
      %v1613 = vmul.f32 %v1611, 1.442695
      %v1614 = vpow.pop %v1613
      %v1615 = vmul.f32 %v1612, 1.442695
      %v1616 = vpow.pop %v1615
      %v1617 = vsel %vm1445, %v1614, 0.0
      %1618 = vadd.xlane.f32.xlu0 %v1617
      %v1619 = vpop.xlane.xlu0 %1618
      %v1620 = vsel %vm1445, %v1616, 0.0
      %1621 = vadd.xlane.f32.xlu0 %v1620
      %v1622 = vpop.xlane.xlu0 %1621
      %v1623 = vrcp.pop %v1619
      %v1624 = vrcp.pop %v1622
      %v1625 = vmul.f32 %v1614, %v1623
      %v1626 = vmul.f32 %v1616, %v1624
      %v1627 = vpack.c.bf16 %v1625, %v1625
      %v1628 = vpack.c.bf16 %v1626, %v1626
      %v1630 = vunpack.c.l.b16 %v1437
      %v1631 = vpack.c.b16 %v1630, %v1630
      %1632 = vrot.lane.b32.xlu0 %v1631, 120
      %v1633 = vpop.permute.xlu0 %1632
      %v1635 = vsel %vm1445, %v1627, 0
      %v1638 = vsel %vm1511, %v1633, 0
      %1640 = vmatpush.bf16.msra.mxu0 0
      %1641 = vmatpush.bf16.msra.mxu0 0
      %1642 = vmatpush.bf16.msra.mxu0 0
      %1643 = vmatpush.bf16.msra.mxu0 0
      %1644 = vmatpush.bf16.msra.mxu0 0
      %1645 = vmatpush.bf16.msra.mxu0 0
      %1646 = vmatpush.bf16.msra.mxu0 0
      %1647 = vmatpush.bf16.msra.mxu0 %v1638
      %1648 = vmatmul.bf16.gmra.mxu0 %v1635
      %v1649 = vpop.f32.mrf.mxu0
      %v1650 = vadd.f32 0.0, %v1649
      %v1651 = vpop.f32.mrf.mxu0
      %1652 = vdwg.mxu0
      %v1654 = vunpack.c.l.b16 %v1438
      %v1655 = vpack.c.b16 %v1654, %v1654
      %1656 = vrot.lane.b32.xlu0 %v1655, 120
      %v1657 = vpop.permute.xlu0 %1656
      %v1659 = vsel %vm1445, %v1628, 0
      %v1662 = vsel %vm1511, %v1657, 0
      %1664 = vmatpush.bf16.msra.mxu0 0
      %1665 = vmatpush.bf16.msra.mxu0 0
      %1666 = vmatpush.bf16.msra.mxu0 0
      %1667 = vmatpush.bf16.msra.mxu0 0
      %1668 = vmatpush.bf16.msra.mxu0 0
      %1669 = vmatpush.bf16.msra.mxu0 0
      %1670 = vmatpush.bf16.msra.mxu0 0
      %1671 = vmatpush.bf16.msra.mxu0 %v1662
      %1672 = vmatmul.bf16.gmra.mxu0 %v1659
      %v1673 = vpop.f32.mrf.mxu0
      %v1674 = vadd.f32 0.0, %v1673
      %v1675 = vpop.f32.mrf.mxu0
      %1676 = vdwg.mxu0
      %1677 = vrot.lane.b32.xlu0 %v1549, 112
      %v1678 = vpop.permute.xlu0 %1677
      %1679 = vrot.lane.b32.xlu0 %v1554, 112
      %v1680 = vpop.permute.xlu0 %1679
      %v1682 = vsel %vm1445, %v1678, 0
      %v1685 = vsel %vm1445, %v1680, 0
      %1687 = vmatpush.bf16.xpose.msra.mxu0 0
      %1688 = vmatpush.bf16.xpose.msra.mxu0 0
      %1689 = vmatpush.bf16.xpose.msra.mxu0 0
      %1690 = vmatpush.bf16.xpose.msra.mxu0 0
      %1691 = vmatpush.bf16.xpose.msra.mxu0 0
      %1692 = vmatpush.bf16.xpose.msra.mxu0 0
      %1693 = vmatpush.bf16.xpose.msra.mxu0 0
      %1694 = vmatpush.bf16.xpose.msra.mxu0 %v1685
      %1695 = vmatmul.bf16.gmra.mxu0 %v1682
      %v1696 = vpop.f32.mrf.mxu0
      %v1697 = vadd.f32 %v1444, %v1696
      %v1698 = vpop.f32.mrf.mxu0
      %1699 = vdwg.mxu0
      %1700 = vrot.lane.b32.xlu0 %v1578, 112
      %v1701 = vpop.permute.xlu0 %1700
      %1702 = vrot.lane.b32.xlu0 %v1583, 112
      %v1703 = vpop.permute.xlu0 %1702
      %v1705 = vsel %vm1445, %v1701, 0
      %v1708 = vsel %vm1445, %v1703, 0
      %1710 = vmatpush.bf16.xpose.msra.mxu0 0
      %1711 = vmatpush.bf16.xpose.msra.mxu0 0
      %1712 = vmatpush.bf16.xpose.msra.mxu0 0
      %1713 = vmatpush.bf16.xpose.msra.mxu0 0
      %1714 = vmatpush.bf16.xpose.msra.mxu0 0
      %1715 = vmatpush.bf16.xpose.msra.mxu0 0
      %1716 = vmatpush.bf16.xpose.msra.mxu0 0
      %1717 = vmatpush.bf16.xpose.msra.mxu0 %v1708
      %1718 = vmatmul.bf16.gmra.mxu0 %v1705
      %v1719 = vpop.f32.mrf.mxu0
      %v1720 = vadd.f32 %v1444, %v1719
      %v1721 = vpop.f32.mrf.mxu0
      %1722 = vdwg.mxu0
      %v1723 = vsel %vm1445, %v1697, -inf
      %1724 = vmax.xlane.f32.xlu0 %v1723
      %v1725 = vpop.xlane.xlu0 %1724
      %v1726 = vsel %vm1445, %v1720, -inf
      %1727 = vmax.xlane.f32.xlu0 %v1726
      %v1728 = vpop.xlane.xlu0 %1727
      %v1729 = vsub.f32 %v1697, %v1725
      %v1730 = vsub.f32 %v1720, %v1728
      %v1731 = vmul.f32 %v1729, 1.442695
      %v1732 = vpow.pop %v1731
      %v1733 = vmul.f32 %v1730, 1.442695
      %v1734 = vpow.pop %v1733
      %v1735 = vsel %vm1445, %v1732, 0.0
      %1736 = vadd.xlane.f32.xlu0 %v1735
      %v1737 = vpop.xlane.xlu0 %1736
      %v1738 = vsel %vm1445, %v1734, 0.0
      %1739 = vadd.xlane.f32.xlu0 %v1738
      %v1740 = vpop.xlane.xlu0 %1739
      %v1741 = vrcp.pop %v1737
      %v1742 = vrcp.pop %v1740
      %v1743 = vmul.f32 %v1732, %v1741
      %v1744 = vmul.f32 %v1734, %v1742
      %v1745 = vpack.c.bf16 %v1743, %v1743
      %v1746 = vpack.c.bf16 %v1744, %v1744
      %1747 = vrot.lane.b32.xlu0 %v1631, 112
      %v1748 = vpop.permute.xlu0 %1747
      %v1750 = vsel %vm1445, %v1745, 0
      %v1753 = vsel %vm1511, %v1748, 0
      %1755 = vmatpush.bf16.msra.mxu0 0
      %1756 = vmatpush.bf16.msra.mxu0 0
      %1757 = vmatpush.bf16.msra.mxu0 0
      %1758 = vmatpush.bf16.msra.mxu0 0
      %1759 = vmatpush.bf16.msra.mxu0 0
      %1760 = vmatpush.bf16.msra.mxu0 0
      %1761 = vmatpush.bf16.msra.mxu0 0
      %1762 = vmatpush.bf16.msra.mxu0 %v1753
      %1763 = vmatmul.bf16.gmra.mxu0 %v1750
      %v1764 = vpop.f32.mrf.mxu0
      %v1765 = vadd.f32 0.0, %v1764
      %v1766 = vpop.f32.mrf.mxu0
      %1767 = vdwg.mxu0
      %1768 = vrot.lane.b32.xlu0 %v1655, 112
      %v1769 = vpop.permute.xlu0 %1768
      %v1771 = vsel %vm1445, %v1746, 0
      %v1774 = vsel %vm1511, %v1769, 0
      %1776 = vmatpush.bf16.msra.mxu0 0
      %1777 = vmatpush.bf16.msra.mxu0 0
      %1778 = vmatpush.bf16.msra.mxu0 0
      %1779 = vmatpush.bf16.msra.mxu0 0
      %1780 = vmatpush.bf16.msra.mxu0 0
      %1781 = vmatpush.bf16.msra.mxu0 0
      %1782 = vmatpush.bf16.msra.mxu0 0
      %1783 = vmatpush.bf16.msra.mxu0 %v1774
      %1784 = vmatmul.bf16.gmra.mxu0 %v1771
      %v1785 = vpop.f32.mrf.mxu0
      %v1786 = vadd.f32 0.0, %v1785
      %v1787 = vpop.f32.mrf.mxu0
      %1788 = vdwg.mxu0
      %1789 = vrot.lane.b32.xlu0 %v1549, 104
      %v1790 = vpop.permute.xlu0 %1789
      %1791 = vrot.lane.b32.xlu0 %v1554, 104
      %v1792 = vpop.permute.xlu0 %1791
      %v1794 = vsel %vm1445, %v1790, 0
      %v1797 = vsel %vm1445, %v1792, 0
      %1799 = vmatpush.bf16.xpose.msra.mxu0 0
      %1800 = vmatpush.bf16.xpose.msra.mxu0 0
      %1801 = vmatpush.bf16.xpose.msra.mxu0 0
      %1802 = vmatpush.bf16.xpose.msra.mxu0 0
      %1803 = vmatpush.bf16.xpose.msra.mxu0 0
      %1804 = vmatpush.bf16.xpose.msra.mxu0 0
      %1805 = vmatpush.bf16.xpose.msra.mxu0 0
      %1806 = vmatpush.bf16.xpose.msra.mxu0 %v1797
      %1807 = vmatmul.bf16.gmra.mxu0 %v1794
      %v1808 = vpop.f32.mrf.mxu0
      %v1809 = vadd.f32 %v1444, %v1808
      %v1810 = vpop.f32.mrf.mxu0
      %1811 = vdwg.mxu0
      %1812 = vrot.lane.b32.xlu0 %v1578, 104
      %v1813 = vpop.permute.xlu0 %1812
      %1814 = vrot.lane.b32.xlu0 %v1583, 104
      %v1815 = vpop.permute.xlu0 %1814
      %v1817 = vsel %vm1445, %v1813, 0
      %v1820 = vsel %vm1445, %v1815, 0
      %1822 = vmatpush.bf16.xpose.msra.mxu0 0
      %1823 = vmatpush.bf16.xpose.msra.mxu0 0
      %1824 = vmatpush.bf16.xpose.msra.mxu0 0
      %1825 = vmatpush.bf16.xpose.msra.mxu0 0
      %1826 = vmatpush.bf16.xpose.msra.mxu0 0
      %1827 = vmatpush.bf16.xpose.msra.mxu0 0
      %1828 = vmatpush.bf16.xpose.msra.mxu0 0
      %1829 = vmatpush.bf16.xpose.msra.mxu0 %v1820
      %1830 = vmatmul.bf16.gmra.mxu0 %v1817
      %v1831 = vpop.f32.mrf.mxu0
      %v1832 = vadd.f32 %v1444, %v1831
      %v1833 = vpop.f32.mrf.mxu0
      %1834 = vdwg.mxu0
      %v1835 = vsel %vm1445, %v1809, -inf
      %1836 = vmax.xlane.f32.xlu0 %v1835
      %v1837 = vpop.xlane.xlu0 %1836
      %v1838 = vsel %vm1445, %v1832, -inf
      %1839 = vmax.xlane.f32.xlu0 %v1838
      %v1840 = vpop.xlane.xlu0 %1839
      %v1841 = vsub.f32 %v1809, %v1837
      %v1842 = vsub.f32 %v1832, %v1840
      %v1843 = vmul.f32 %v1841, 1.442695
      %v1844 = vpow.pop %v1843
      %v1845 = vmul.f32 %v1842, 1.442695
      %v1846 = vpow.pop %v1845
      %v1847 = vsel %vm1445, %v1844, 0.0
      %1848 = vadd.xlane.f32.xlu0 %v1847
      %v1849 = vpop.xlane.xlu0 %1848
      %v1850 = vsel %vm1445, %v1846, 0.0
      %1851 = vadd.xlane.f32.xlu0 %v1850
      %v1852 = vpop.xlane.xlu0 %1851
      %v1853 = vrcp.pop %v1849
      %v1854 = vrcp.pop %v1852
      %v1855 = vmul.f32 %v1844, %v1853
      %v1856 = vmul.f32 %v1846, %v1854
      %v1857 = vpack.c.bf16 %v1855, %v1855
      %v1858 = vpack.c.bf16 %v1856, %v1856
      %1859 = vrot.lane.b32.xlu0 %v1631, 104
      %v1860 = vpop.permute.xlu0 %1859
      %v1862 = vsel %vm1445, %v1857, 0
      %v1865 = vsel %vm1511, %v1860, 0
      %1867 = vmatpush.bf16.msra.mxu0 0
      %1868 = vmatpush.bf16.msra.mxu0 0
      %1869 = vmatpush.bf16.msra.mxu0 0
      %1870 = vmatpush.bf16.msra.mxu0 0
      %1871 = vmatpush.bf16.msra.mxu0 0
      %1872 = vmatpush.bf16.msra.mxu0 0
      %1873 = vmatpush.bf16.msra.mxu0 0
      %1874 = vmatpush.bf16.msra.mxu0 %v1865
      %1875 = vmatmul.bf16.gmra.mxu0 %v1862
      %v1876 = vpop.f32.mrf.mxu0
      %v1877 = vadd.f32 0.0, %v1876
      %v1878 = vpop.f32.mrf.mxu0
      %1879 = vdwg.mxu0
      %1880 = vrot.lane.b32.xlu0 %v1655, 104
      %v1881 = vpop.permute.xlu0 %1880
      %v1883 = vsel %vm1445, %v1858, 0
      %v1886 = vsel %vm1511, %v1881, 0
      %1888 = vmatpush.bf16.msra.mxu0 0
      %1889 = vmatpush.bf16.msra.mxu0 0
      %1890 = vmatpush.bf16.msra.mxu0 0
      %1891 = vmatpush.bf16.msra.mxu0 0
      %1892 = vmatpush.bf16.msra.mxu0 0
      %1893 = vmatpush.bf16.msra.mxu0 0
      %1894 = vmatpush.bf16.msra.mxu0 0
      %1895 = vmatpush.bf16.msra.mxu0 %v1886
      %1896 = vmatmul.bf16.gmra.mxu0 %v1883
      %v1897 = vpop.f32.mrf.mxu0
      %v1898 = vadd.f32 0.0, %v1897
      %v1899 = vpop.f32.mrf.mxu0
      %1900 = vdwg.mxu0
      %1903 = vrot.lane.b32.xlu0 %v1650, 8
      %v1904 = vpop.permute.xlu0 %1903
      %1905 = vrot.lane.b32.xlu0 %v1674, 8
      %v1906 = vpop.permute.xlu0 %1905
      %1911 = vrot.lane.b32.xlu0 %v1765, 16
      %v1912 = vpop.permute.xlu0 %1911
      %1913 = vrot.lane.b32.xlu0 %v1786, 16
      %v1914 = vpop.permute.xlu0 %1913
      %1919 = vrot.lane.b32.xlu0 %v1877, 24
      %v1920 = vpop.permute.xlu0 %1919
      %1921 = vrot.lane.b32.xlu0 %v1898, 24
      %v1922 = vpop.permute.xlu0 %1921
      %v1925 = vsel %vm1445, %v1525, %v1904
      %v1926 = vsel %vm1445, %v1544, %v1906
      %vm1927 = vcmask 130048
      %v1928 = vsel %vm1927, %v1925, %v1912
      %v1929 = vsel %vm1927, %v1926, %v1914
      %vm1930 = vcmask 195584
      %v1931 = vsel %vm1930, %v1928, %v1920
      %v1932 = vsel %vm1930, %v1929, %v1922
      %v1933 = vpack.c.bf16 %v1932, %v1931
      %v1935 = vperm.slane %v1430, 0
      %v1941 = vunpack.c.l.b16 %v1426
      %v1942 = vunpack.c.l.b16 %v1427
      %v1943 = vunpack.c.l.b16 %v1428
      %v1944 = vunpack.c.l.b16 %v1429
      %v1945 = vpack.c.b16 %v1942, %v1941
      %v1946 = vpack.c.b16 %v1944, %v1943
      %v1950 = vsel %vm1340, %v1933, 0
      %1952 = vmatpush.bf16.msra.mxu0 0
      %1953 = vmatpush.bf16.msra.mxu0 0
      %1954 = vmatpush.bf16.msra.mxu0 0
      %1955 = vmatpush.bf16.msra.mxu0 0
      %1956 = vmatpush.bf16.msra.mxu0 0
      %1957 = vmatpush.bf16.msra.mxu0 0
      %1958 = vmatpush.bf16.msra.mxu0 %v1946
      %1959 = vmatpush.bf16.msra.mxu0 %v1945
      %1960 = vmatmul.bf16.gmra.mxu0 %v1950
      %v1961 = vpop.f32.mrf.mxu0
      %v1962 = vadd.f32 %v1935, %v1961
      %v1963 = vpop.f32.mrf.mxu0
      %v1964 = vadd.f32 %v1935, %v1963
      %1965 = vdwg.mxu0
      %v1966 = vadd.f32 %v1317, %v1962
      %v1967 = vadd.f32 %v1318, %v1964
      %v1968 = vld [vmem:[%s1237] sm:$0x1]
      %v1969 = vld [vmem:[%s1240] sm:$0x1]
      %v1970 = vsel %vm1340, %v1966, 0.0
      %1971 = vadd.xlane.f32.xlu0 %v1970
      %v1972 = vpop.xlane.xlu0 %1971
      %v1973 = vsel %vm1340, %v1967, 0.0
      %1974 = vadd.xlane.f32.xlu0 %v1973
      %v1975 = vpop.xlane.xlu0 %1974
      %v1976 = vrcp.pop 32.0
      %v1977 = vmul.f32 32.0, %v1976
      %v1978 = vsub.f32 1.0, %v1977
      %v1979 = vmul.f32 %v1976, %v1978
      %v1980 = vadd.f32 %v1976, %v1979
      %vm1981 = vweird.f32 %v1976
      %v1982 = vsel %vm1981, %v1976, %v1980
      %v1983 = vmul.f32 %v1972, %v1982
      %v1984 = vmul.f32 %v1975, %v1982
      %v1985 = vsub.f32 %v1966, %v1983
      %v1986 = vsub.f32 %v1967, %v1984
      %v1987 = vmul.f32 %v1985, %v1985
      %v1988 = vmul.f32 %v1986, %v1986
      %v1989 = vsel %vm1340, %v1987, 0.0
      %1990 = vadd.xlane.f32.xlu0 %v1989
      %v1991 = vpop.xlane.xlu0 %1990
      %v1992 = vsel %vm1340, %v1988, 0.0
      %1993 = vadd.xlane.f32.xlu0 %v1992
      %v1994 = vpop.xlane.xlu0 %1993
      %v1995 = vmul.f32 %v1991, %v1982
      %v1996 = vmul.f32 %v1994, %v1982
      %v1997 = vadd.f32 %v1995, 1e-05
      %v1998 = vadd.f32 %v1996, 1e-05
      %v1999 = vrsqrt.pop %v1997
      %v2000 = vmul.f32 %v1999, %v1997
      %v2001 = vmul.f32 %v2000, %v1999
      %v2002 = vmul.f32 0.5, %v2001
      %v2003 = vsub.f32 1.5, %v2002
      %v2004 = vmul.f32 %v1999, %v2003
      %vm2005 = vweird.f32 %v1997
      %vm2006 = vweird.f32 %v1999
      %vm2007 = vmor %vm2005, %vm2006
      %v2008 = vsel %vm2007, %v1999, %v2004
      %v2009 = vrsqrt.pop %v1998
      %v2010 = vmul.f32 %v2009, %v1998
      %v2011 = vmul.f32 %v2010, %v2009
      %v2012 = vmul.f32 0.5, %v2011
      %v2013 = vsub.f32 1.5, %v2012
      %v2014 = vmul.f32 %v2009, %v2013
      %vm2015 = vweird.f32 %v1998
      %vm2016 = vweird.f32 %v2009
      %vm2017 = vmor %vm2015, %vm2016
      %v2018 = vsel %vm2017, %v2009, %v2014
      %v2019 = vmul.f32 %v1985, %v2008
      %v2020 = vmul.f32 %v1986, %v2018
      %v2022 = vperm.slane %v1968, 0
      %v2024 = vmul.f32 %v2019, %v2022
      %v2025 = vmul.f32 %v2020, %v2022
      %v2027 = vperm.slane %v1969, 0
      %v2029 = vadd.f32 %v2024, %v2027
      %v2030 = vadd.f32 %v2025, %v2027
      %v2031 = vpack.c.bf16 %v2030, %v2029
      %v2032 = vld [vmem:[%s1201] sm:$0xff]
      %v2033 = vld [vmem:[%s1201 + $0x8] sm:$0xff]
      %v2034 = vpack.c.bf16 %v2033, %v2032
      %v2035 = vld [vmem:[%s1245] sm:$0xf]
      %v2036 = vld [vmem:[%s1245 + $0x4] sm:$0xf]
      %v2037 = vld [vmem:[%s1245 + $0x8] sm:$0xf]
      %v2038 = vld [vmem:[%s1245 + $0xc] sm:$0xf]
      %v2039 = vld [vmem:[%s1248] sm:$0x1]
      %v2041 = vperm.slane %v2039, 0
      %v2047 = vunpack.c.l.b16 %v2035
      %v2048 = vunpack.c.l.b16 %v2036
      %v2049 = vunpack.c.l.b16 %v2037
      %v2050 = vunpack.c.l.b16 %v2038
      %v2051 = vpack.c.b16 %v2048, %v2047
      %v2052 = vpack.c.b16 %v2050, %v2049
      %v2056 = vsel %vm1340, %v2031, 0
      %2058 = vmatpush.bf16.msra.mxu0 0
      %2059 = vmatpush.bf16.msra.mxu0 0
      %2060 = vmatpush.bf16.msra.mxu0 0
      %2061 = vmatpush.bf16.msra.mxu0 0
      %2062 = vmatpush.bf16.msra.mxu0 0
      %2063 = vmatpush.bf16.msra.mxu0 0
      %2064 = vmatpush.bf16.msra.mxu0 %v2052
      %2065 = vmatpush.bf16.msra.mxu0 %v2051
      %2066 = vmatmul.bf16.gmra.mxu0 %v2056
      %v2067 = vpop.f32.mrf.mxu0
      %v2068 = vadd.f32 %v2041, %v2067
      %v2069 = vpop.f32.mrf.mxu0
      %v2070 = vadd.f32 %v2041, %v2069
      %2071 = vdwg.mxu0
      %v2072 = vld [vmem:[%s1253] sm:$0xf]
      %v2073 = vld [vmem:[%s1253 + $0x4] sm:$0xf]
      %v2074 = vld [vmem:[%s1253 + $0x8] sm:$0xf]
      %v2075 = vld [vmem:[%s1253 + $0xc] sm:$0xf]
      %v2076 = vld [vmem:[%s1256] sm:$0x1]
      %v2078 = vperm.slane %v2076, 0
      %v2084 = vunpack.c.l.b16 %v2072
      %v2085 = vunpack.c.l.b16 %v2073
      %v2086 = vunpack.c.l.b16 %v2074
      %v2087 = vunpack.c.l.b16 %v2075
      %v2088 = vpack.c.b16 %v2085, %v2084
      %v2089 = vpack.c.b16 %v2087, %v2086
      %v2093 = vsel %vm1340, %v2034, 0
      %2095 = vmatpush.bf16.msra.mxu0 0
      %2096 = vmatpush.bf16.msra.mxu0 0
      %2097 = vmatpush.bf16.msra.mxu0 0
      %2098 = vmatpush.bf16.msra.mxu0 0
      %2099 = vmatpush.bf16.msra.mxu0 0
      %2100 = vmatpush.bf16.msra.mxu0 0
      %2101 = vmatpush.bf16.msra.mxu0 %v2089
      %2102 = vmatpush.bf16.msra.mxu0 %v2088
      %2103 = vmatmul.bf16.gmra.mxu0 %v2093
      %v2104 = vpop.f32.mrf.mxu0
      %v2105 = vadd.f32 %v2078, %v2104
      %v2106 = vpop.f32.mrf.mxu0
      %v2107 = vadd.f32 %v2078, %v2106
      %2108 = vdwg.mxu0
      %v2109 = vld [vmem:[%s1261] sm:$0xf]
      %v2110 = vld [vmem:[%s1261 + $0x4] sm:$0xf]
      %v2111 = vld [vmem:[%s1261 + $0x8] sm:$0xf]
      %v2112 = vld [vmem:[%s1261 + $0xc] sm:$0xf]
      %v2113 = vld [vmem:[%s1264] sm:$0x1]
      %v2115 = vperm.slane %v2113, 0
      %v2121 = vunpack.c.l.b16 %v2109
      %v2122 = vunpack.c.l.b16 %v2110
      %v2123 = vunpack.c.l.b16 %v2111
      %v2124 = vunpack.c.l.b16 %v2112
      %v2125 = vpack.c.b16 %v2122, %v2121
      %v2126 = vpack.c.b16 %v2124, %v2123
      %2129 = vmatpush.bf16.msra.mxu0 0
      %2130 = vmatpush.bf16.msra.mxu0 0
      %2131 = vmatpush.bf16.msra.mxu0 0
      %2132 = vmatpush.bf16.msra.mxu0 0
      %2133 = vmatpush.bf16.msra.mxu0 0
      %2134 = vmatpush.bf16.msra.mxu0 0
      %2135 = vmatpush.bf16.msra.mxu0 %v2126
      %2136 = vmatpush.bf16.msra.mxu0 %v2125
      %2137 = vmatmul.bf16.gmra.mxu0 %v2093
      %v2138 = vpop.f32.mrf.mxu0
      %v2139 = vadd.f32 %v2115, %v2138
      %v2140 = vpop.f32.mrf.mxu0
      %v2141 = vadd.f32 %v2115, %v2140
      %2142 = vdwg.mxu0
      %v2143 = vld [vmem:[%s1269] sm:$0xf]
      %v2144 = vld [vmem:[%s1269 + $0x4] sm:$0xf]
      %v2145 = vld [vmem:[%s1269 + $0x8] sm:$0xf]
      %v2146 = vld [vmem:[%s1269 + $0xc] sm:$0xf]
      %v2147 = vld [vmem:[%s1272] sm:$0x1]
      %v2148 = vmul.f32 %v2068, 0.35355338
      %v2149 = vmul.f32 %v2070, 0.35355338
      %v2150 = vpack.c.bf16 %v2148, %v2148
      %v2151 = vpack.c.bf16 %v2149, %v2149
      %v2152 = vpack.c.bf16 %v2105, %v2105
      %v2153 = vpack.c.bf16 %v2107, %v2107
      %v2154 = vpack.c.bf16 %v2139, %v2139
      %v2155 = vpack.c.bf16 %v2141, %v2141
      %v2157 = vsel %vm1445, %v2150, 0
      %v2160 = vsel %vm1445, %v2152, 0
      %2162 = vmatpush.bf16.xpose.msra.mxu0 0
      %2163 = vmatpush.bf16.xpose.msra.mxu0 0
      %2164 = vmatpush.bf16.xpose.msra.mxu0 0
      %2165 = vmatpush.bf16.xpose.msra.mxu0 0
      %2166 = vmatpush.bf16.xpose.msra.mxu0 0
      %2167 = vmatpush.bf16.xpose.msra.mxu0 0
      %2168 = vmatpush.bf16.xpose.msra.mxu0 0
      %2169 = vmatpush.bf16.xpose.msra.mxu0 %v2160
      %2170 = vmatmul.bf16.gmra.mxu0 %v2157
      %v2171 = vpop.f32.mrf.mxu0
      %v2172 = vadd.f32 0.0, %v2171
      %v2173 = vpop.f32.mrf.mxu0
      %2174 = vdwg.mxu0
      %v2176 = vsel %vm1445, %v2151, 0
      %v2179 = vsel %vm1445, %v2153, 0
      %2181 = vmatpush.bf16.xpose.msra.mxu0 0
      %2182 = vmatpush.bf16.xpose.msra.mxu0 0
      %2183 = vmatpush.bf16.xpose.msra.mxu0 0
      %2184 = vmatpush.bf16.xpose.msra.mxu0 0
      %2185 = vmatpush.bf16.xpose.msra.mxu0 0
      %2186 = vmatpush.bf16.xpose.msra.mxu0 0
      %2187 = vmatpush.bf16.xpose.msra.mxu0 0
      %2188 = vmatpush.bf16.xpose.msra.mxu0 %v2179
      %2189 = vmatmul.bf16.gmra.mxu0 %v2176
      %v2190 = vpop.f32.mrf.mxu0
      %v2191 = vadd.f32 0.0, %v2190
      %v2192 = vpop.f32.mrf.mxu0
      %2193 = vdwg.mxu0
      %v2194 = vsel %vm1445, %v2172, -inf
      %2195 = vmax.xlane.f32.xlu0 %v2194
      %v2196 = vpop.xlane.xlu0 %2195
      %v2197 = vsel %vm1445, %v2191, -inf
      %2198 = vmax.xlane.f32.xlu0 %v2197
      %v2199 = vpop.xlane.xlu0 %2198
      %v2200 = vsub.f32 %v2172, %v2196
      %v2201 = vsub.f32 %v2191, %v2199
      %v2202 = vmul.f32 %v2200, 1.442695
      %v2203 = vpow.pop %v2202
      %v2204 = vmul.f32 %v2201, 1.442695
      %v2205 = vpow.pop %v2204
      %v2206 = vsel %vm1445, %v2203, 0.0
      %2207 = vadd.xlane.f32.xlu0 %v2206
      %v2208 = vpop.xlane.xlu0 %2207
      %v2209 = vsel %vm1445, %v2205, 0.0
      %2210 = vadd.xlane.f32.xlu0 %v2209
      %v2211 = vpop.xlane.xlu0 %2210
      %v2212 = vrcp.pop %v2208
      %v2213 = vrcp.pop %v2211
      %v2214 = vmul.f32 %v2203, %v2212
      %v2215 = vmul.f32 %v2205, %v2213
      %v2216 = vpack.c.bf16 %v2214, %v2214
      %v2217 = vpack.c.bf16 %v2215, %v2215
      %v2219 = vsel %vm1445, %v2216, 0
      %v2222 = vsel %vm1511, %v2154, 0
      %2224 = vmatpush.bf16.msra.mxu0 0
      %2225 = vmatpush.bf16.msra.mxu0 0
      %2226 = vmatpush.bf16.msra.mxu0 0
      %2227 = vmatpush.bf16.msra.mxu0 0
      %2228 = vmatpush.bf16.msra.mxu0 0
      %2229 = vmatpush.bf16.msra.mxu0 0
      %2230 = vmatpush.bf16.msra.mxu0 0
      %2231 = vmatpush.bf16.msra.mxu0 %v2222
      %2232 = vmatmul.bf16.gmra.mxu0 %v2219
      %v2233 = vpop.f32.mrf.mxu0
      %v2234 = vadd.f32 0.0, %v2233
      %v2235 = vpop.f32.mrf.mxu0
      %2236 = vdwg.mxu0
      %v2238 = vsel %vm1445, %v2217, 0
      %v2241 = vsel %vm1511, %v2155, 0
      %2243 = vmatpush.bf16.msra.mxu0 0
      %2244 = vmatpush.bf16.msra.mxu0 0
      %2245 = vmatpush.bf16.msra.mxu0 0
      %2246 = vmatpush.bf16.msra.mxu0 0
      %2247 = vmatpush.bf16.msra.mxu0 0
      %2248 = vmatpush.bf16.msra.mxu0 0
      %2249 = vmatpush.bf16.msra.mxu0 0
      %2250 = vmatpush.bf16.msra.mxu0 %v2241
      %2251 = vmatmul.bf16.gmra.mxu0 %v2238
      %v2252 = vpop.f32.mrf.mxu0
      %v2253 = vadd.f32 0.0, %v2252
      %v2254 = vpop.f32.mrf.mxu0
      %2255 = vdwg.mxu0
      %v2257 = vunpack.c.l.b16 %v2150
      %v2258 = vpack.c.b16 %v2257, %v2257
      %2259 = vrot.lane.b32.xlu0 %v2258, 120
      %v2260 = vpop.permute.xlu0 %2259
      %v2262 = vunpack.c.l.b16 %v2152
      %v2263 = vpack.c.b16 %v2262, %v2262
      %2264 = vrot.lane.b32.xlu0 %v2263, 120
      %v2265 = vpop.permute.xlu0 %2264
      %v2267 = vsel %vm1445, %v2260, 0
      %v2270 = vsel %vm1445, %v2265, 0
      %2272 = vmatpush.bf16.xpose.msra.mxu0 0
      %2273 = vmatpush.bf16.xpose.msra.mxu0 0
      %2274 = vmatpush.bf16.xpose.msra.mxu0 0
      %2275 = vmatpush.bf16.xpose.msra.mxu0 0
      %2276 = vmatpush.bf16.xpose.msra.mxu0 0
      %2277 = vmatpush.bf16.xpose.msra.mxu0 0
      %2278 = vmatpush.bf16.xpose.msra.mxu0 0
      %2279 = vmatpush.bf16.xpose.msra.mxu0 %v2270
      %2280 = vmatmul.bf16.gmra.mxu0 %v2267
      %v2281 = vpop.f32.mrf.mxu0
      %v2282 = vadd.f32 0.0, %v2281
      %v2283 = vpop.f32.mrf.mxu0
      %2284 = vdwg.mxu0
      %v2286 = vunpack.c.l.b16 %v2151
      %v2287 = vpack.c.b16 %v2286, %v2286
      %2288 = vrot.lane.b32.xlu0 %v2287, 120
      %v2289 = vpop.permute.xlu0 %2288
      %v2291 = vunpack.c.l.b16 %v2153
      %v2292 = vpack.c.b16 %v2291, %v2291
      %2293 = vrot.lane.b32.xlu0 %v2292, 120
      %v2294 = vpop.permute.xlu0 %2293
      %v2296 = vsel %vm1445, %v2289, 0
      %v2299 = vsel %vm1445, %v2294, 0
      %2301 = vmatpush.bf16.xpose.msra.mxu0 0
      %2302 = vmatpush.bf16.xpose.msra.mxu0 0
      %2303 = vmatpush.bf16.xpose.msra.mxu0 0
      %2304 = vmatpush.bf16.xpose.msra.mxu0 0
      %2305 = vmatpush.bf16.xpose.msra.mxu0 0
      %2306 = vmatpush.bf16.xpose.msra.mxu0 0
      %2307 = vmatpush.bf16.xpose.msra.mxu0 0
      %2308 = vmatpush.bf16.xpose.msra.mxu0 %v2299
      %2309 = vmatmul.bf16.gmra.mxu0 %v2296
      %v2310 = vpop.f32.mrf.mxu0
      %v2311 = vadd.f32 0.0, %v2310
      %v2312 = vpop.f32.mrf.mxu0
      %2313 = vdwg.mxu0
      %v2314 = vsel %vm1445, %v2282, -inf
      %2315 = vmax.xlane.f32.xlu0 %v2314
      %v2316 = vpop.xlane.xlu0 %2315
      %v2317 = vsel %vm1445, %v2311, -inf
      %2318 = vmax.xlane.f32.xlu0 %v2317
      %v2319 = vpop.xlane.xlu0 %2318
      %v2320 = vsub.f32 %v2282, %v2316
      %v2321 = vsub.f32 %v2311, %v2319
      %v2322 = vmul.f32 %v2320, 1.442695
      %v2323 = vpow.pop %v2322
      %v2324 = vmul.f32 %v2321, 1.442695
      %v2325 = vpow.pop %v2324
      %v2326 = vsel %vm1445, %v2323, 0.0
      %2327 = vadd.xlane.f32.xlu0 %v2326
      %v2328 = vpop.xlane.xlu0 %2327
      %v2329 = vsel %vm1445, %v2325, 0.0
      %2330 = vadd.xlane.f32.xlu0 %v2329
      %v2331 = vpop.xlane.xlu0 %2330
      %v2332 = vrcp.pop %v2328
      %v2333 = vrcp.pop %v2331
      %v2334 = vmul.f32 %v2323, %v2332
      %v2335 = vmul.f32 %v2325, %v2333
      %v2336 = vpack.c.bf16 %v2334, %v2334
      %v2337 = vpack.c.bf16 %v2335, %v2335
      %v2339 = vunpack.c.l.b16 %v2154
      %v2340 = vpack.c.b16 %v2339, %v2339
      %2341 = vrot.lane.b32.xlu0 %v2340, 120
      %v2342 = vpop.permute.xlu0 %2341
      %v2344 = vsel %vm1445, %v2336, 0
      %v2347 = vsel %vm1511, %v2342, 0
      %2349 = vmatpush.bf16.msra.mxu0 0
      %2350 = vmatpush.bf16.msra.mxu0 0
      %2351 = vmatpush.bf16.msra.mxu0 0
      %2352 = vmatpush.bf16.msra.mxu0 0
      %2353 = vmatpush.bf16.msra.mxu0 0
      %2354 = vmatpush.bf16.msra.mxu0 0
      %2355 = vmatpush.bf16.msra.mxu0 0
      %2356 = vmatpush.bf16.msra.mxu0 %v2347
      %2357 = vmatmul.bf16.gmra.mxu0 %v2344
      %v2358 = vpop.f32.mrf.mxu0
      %v2359 = vadd.f32 0.0, %v2358
      %v2360 = vpop.f32.mrf.mxu0
      %2361 = vdwg.mxu0
      %v2363 = vunpack.c.l.b16 %v2155
      %v2364 = vpack.c.b16 %v2363, %v2363
      %2365 = vrot.lane.b32.xlu0 %v2364, 120
      %v2366 = vpop.permute.xlu0 %2365
      %v2368 = vsel %vm1445, %v2337, 0
      %v2371 = vsel %vm1511, %v2366, 0
      %2373 = vmatpush.bf16.msra.mxu0 0
      %2374 = vmatpush.bf16.msra.mxu0 0
      %2375 = vmatpush.bf16.msra.mxu0 0
      %2376 = vmatpush.bf16.msra.mxu0 0
      %2377 = vmatpush.bf16.msra.mxu0 0
      %2378 = vmatpush.bf16.msra.mxu0 0
      %2379 = vmatpush.bf16.msra.mxu0 0
      %2380 = vmatpush.bf16.msra.mxu0 %v2371
      %2381 = vmatmul.bf16.gmra.mxu0 %v2368
      %v2382 = vpop.f32.mrf.mxu0
      %v2383 = vadd.f32 0.0, %v2382
      %v2384 = vpop.f32.mrf.mxu0
      %2385 = vdwg.mxu0
      %2386 = vrot.lane.b32.xlu0 %v2258, 112
      %v2387 = vpop.permute.xlu0 %2386
      %2388 = vrot.lane.b32.xlu0 %v2263, 112
      %v2389 = vpop.permute.xlu0 %2388
      %v2391 = vsel %vm1445, %v2387, 0
      %v2394 = vsel %vm1445, %v2389, 0
      %2396 = vmatpush.bf16.xpose.msra.mxu0 0
      %2397 = vmatpush.bf16.xpose.msra.mxu0 0
      %2398 = vmatpush.bf16.xpose.msra.mxu0 0
      %2399 = vmatpush.bf16.xpose.msra.mxu0 0
      %2400 = vmatpush.bf16.xpose.msra.mxu0 0
      %2401 = vmatpush.bf16.xpose.msra.mxu0 0
      %2402 = vmatpush.bf16.xpose.msra.mxu0 0
      %2403 = vmatpush.bf16.xpose.msra.mxu0 %v2394
      %2404 = vmatmul.bf16.gmra.mxu0 %v2391
      %v2405 = vpop.f32.mrf.mxu0
      %v2406 = vadd.f32 0.0, %v2405
      %v2407 = vpop.f32.mrf.mxu0
      %2408 = vdwg.mxu0
      %2409 = vrot.lane.b32.xlu0 %v2287, 112
      %v2410 = vpop.permute.xlu0 %2409
      %2411 = vrot.lane.b32.xlu0 %v2292, 112
      %v2412 = vpop.permute.xlu0 %2411
      %v2414 = vsel %vm1445, %v2410, 0
      %v2417 = vsel %vm1445, %v2412, 0
      %2419 = vmatpush.bf16.xpose.msra.mxu0 0
      %2420 = vmatpush.bf16.xpose.msra.mxu0 0
      %2421 = vmatpush.bf16.xpose.msra.mxu0 0
      %2422 = vmatpush.bf16.xpose.msra.mxu0 0
      %2423 = vmatpush.bf16.xpose.msra.mxu0 0
      %2424 = vmatpush.bf16.xpose.msra.mxu0 0
      %2425 = vmatpush.bf16.xpose.msra.mxu0 0
      %2426 = vmatpush.bf16.xpose.msra.mxu0 %v2417
      %2427 = vmatmul.bf16.gmra.mxu0 %v2414
      %v2428 = vpop.f32.mrf.mxu0
      %v2429 = vadd.f32 0.0, %v2428
      %v2430 = vpop.f32.mrf.mxu0
      %2431 = vdwg.mxu0
      %v2432 = vsel %vm1445, %v2406, -inf
      %2433 = vmax.xlane.f32.xlu0 %v2432
      %v2434 = vpop.xlane.xlu0 %2433
      %v2435 = vsel %vm1445, %v2429, -inf
      %2436 = vmax.xlane.f32.xlu0 %v2435
      %v2437 = vpop.xlane.xlu0 %2436
      %v2438 = vsub.f32 %v2406, %v2434
      %v2439 = vsub.f32 %v2429, %v2437
      %v2440 = vmul.f32 %v2438, 1.442695
      %v2441 = vpow.pop %v2440
      %v2442 = vmul.f32 %v2439, 1.442695
      %v2443 = vpow.pop %v2442
      %v2444 = vsel %vm1445, %v2441, 0.0
      %2445 = vadd.xlane.f32.xlu0 %v2444
      %v2446 = vpop.xlane.xlu0 %2445
      %v2447 = vsel %vm1445, %v2443, 0.0
      %2448 = vadd.xlane.f32.xlu0 %v2447
      %v2449 = vpop.xlane.xlu0 %2448
      %v2450 = vrcp.pop %v2446
      %v2451 = vrcp.pop %v2449
      %v2452 = vmul.f32 %v2441, %v2450
      %v2453 = vmul.f32 %v2443, %v2451
      %v2454 = vpack.c.bf16 %v2452, %v2452
      %v2455 = vpack.c.bf16 %v2453, %v2453
      %2456 = vrot.lane.b32.xlu0 %v2340, 112
      %v2457 = vpop.permute.xlu0 %2456
      %v2459 = vsel %vm1445, %v2454, 0
      %v2462 = vsel %vm1511, %v2457, 0
      %2464 = vmatpush.bf16.msra.mxu0 0
      %2465 = vmatpush.bf16.msra.mxu0 0
      %2466 = vmatpush.bf16.msra.mxu0 0
      %2467 = vmatpush.bf16.msra.mxu0 0
      %2468 = vmatpush.bf16.msra.mxu0 0
      %2469 = vmatpush.bf16.msra.mxu0 0
      %2470 = vmatpush.bf16.msra.mxu0 0
      %2471 = vmatpush.bf16.msra.mxu0 %v2462
      %2472 = vmatmul.bf16.gmra.mxu0 %v2459
      %v2473 = vpop.f32.mrf.mxu0
      %v2474 = vadd.f32 0.0, %v2473
      %v2475 = vpop.f32.mrf.mxu0
      %2476 = vdwg.mxu0
      %2477 = vrot.lane.b32.xlu0 %v2364, 112
      %v2478 = vpop.permute.xlu0 %2477
      %v2480 = vsel %vm1445, %v2455, 0
      %v2483 = vsel %vm1511, %v2478, 0
      %2485 = vmatpush.bf16.msra.mxu0 0
      %2486 = vmatpush.bf16.msra.mxu0 0
      %2487 = vmatpush.bf16.msra.mxu0 0
      %2488 = vmatpush.bf16.msra.mxu0 0
      %2489 = vmatpush.bf16.msra.mxu0 0
      %2490 = vmatpush.bf16.msra.mxu0 0
      %2491 = vmatpush.bf16.msra.mxu0 0
      %2492 = vmatpush.bf16.msra.mxu0 %v2483
      %2493 = vmatmul.bf16.gmra.mxu0 %v2480
      %v2494 = vpop.f32.mrf.mxu0
      %v2495 = vadd.f32 0.0, %v2494
      %v2496 = vpop.f32.mrf.mxu0
      %2497 = vdwg.mxu0
      %2498 = vrot.lane.b32.xlu0 %v2258, 104
      %v2499 = vpop.permute.xlu0 %2498
      %2500 = vrot.lane.b32.xlu0 %v2263, 104
      %v2501 = vpop.permute.xlu0 %2500
      %v2503 = vsel %vm1445, %v2499, 0
      %v2506 = vsel %vm1445, %v2501, 0
      %2508 = vmatpush.bf16.xpose.msra.mxu0 0
      %2509 = vmatpush.bf16.xpose.msra.mxu0 0
      %2510 = vmatpush.bf16.xpose.msra.mxu0 0
      %2511 = vmatpush.bf16.xpose.msra.mxu0 0
      %2512 = vmatpush.bf16.xpose.msra.mxu0 0
      %2513 = vmatpush.bf16.xpose.msra.mxu0 0
      %2514 = vmatpush.bf16.xpose.msra.mxu0 0
      %2515 = vmatpush.bf16.xpose.msra.mxu0 %v2506
      %2516 = vmatmul.bf16.gmra.mxu0 %v2503
      %v2517 = vpop.f32.mrf.mxu0
      %v2518 = vadd.f32 0.0, %v2517
      %v2519 = vpop.f32.mrf.mxu0
      %2520 = vdwg.mxu0
      %2521 = vrot.lane.b32.xlu0 %v2287, 104
      %v2522 = vpop.permute.xlu0 %2521
      %2523 = vrot.lane.b32.xlu0 %v2292, 104
      %v2524 = vpop.permute.xlu0 %2523
      %v2526 = vsel %vm1445, %v2522, 0
      %v2529 = vsel %vm1445, %v2524, 0
      %2531 = vmatpush.bf16.xpose.msra.mxu0 0
      %2532 = vmatpush.bf16.xpose.msra.mxu0 0
      %2533 = vmatpush.bf16.xpose.msra.mxu0 0
      %2534 = vmatpush.bf16.xpose.msra.mxu0 0
      %2535 = vmatpush.bf16.xpose.msra.mxu0 0
      %2536 = vmatpush.bf16.xpose.msra.mxu0 0
      %2537 = vmatpush.bf16.xpose.msra.mxu0 0
      %2538 = vmatpush.bf16.xpose.msra.mxu0 %v2529
      %2539 = vmatmul.bf16.gmra.mxu0 %v2526
      %v2540 = vpop.f32.mrf.mxu0
      %v2541 = vadd.f32 0.0, %v2540
      %v2542 = vpop.f32.mrf.mxu0
      %2543 = vdwg.mxu0
      %v2544 = vsel %vm1445, %v2518, -inf
      %2545 = vmax.xlane.f32.xlu0 %v2544
      %v2546 = vpop.xlane.xlu0 %2545
      %v2547 = vsel %vm1445, %v2541, -inf
      %2548 = vmax.xlane.f32.xlu0 %v2547
      %v2549 = vpop.xlane.xlu0 %2548
      %v2550 = vsub.f32 %v2518, %v2546
      %v2551 = vsub.f32 %v2541, %v2549
      %v2552 = vmul.f32 %v2550, 1.442695
      %v2553 = vpow.pop %v2552
      %v2554 = vmul.f32 %v2551, 1.442695
      %v2555 = vpow.pop %v2554
      %v2556 = vsel %vm1445, %v2553, 0.0
      %2557 = vadd.xlane.f32.xlu0 %v2556
      %v2558 = vpop.xlane.xlu0 %2557
      %v2559 = vsel %vm1445, %v2555, 0.0
      %2560 = vadd.xlane.f32.xlu0 %v2559
      %v2561 = vpop.xlane.xlu0 %2560
      %v2562 = vrcp.pop %v2558
      %v2563 = vrcp.pop %v2561
      %v2564 = vmul.f32 %v2553, %v2562
      %v2565 = vmul.f32 %v2555, %v2563
      %v2566 = vpack.c.bf16 %v2564, %v2564
      %v2567 = vpack.c.bf16 %v2565, %v2565
      %2568 = vrot.lane.b32.xlu0 %v2340, 104
      %v2569 = vpop.permute.xlu0 %2568
      %v2571 = vsel %vm1445, %v2566, 0
      %v2574 = vsel %vm1511, %v2569, 0
      %2576 = vmatpush.bf16.msra.mxu0 0
      %2577 = vmatpush.bf16.msra.mxu0 0
      %2578 = vmatpush.bf16.msra.mxu0 0
      %2579 = vmatpush.bf16.msra.mxu0 0
      %2580 = vmatpush.bf16.msra.mxu0 0
      %2581 = vmatpush.bf16.msra.mxu0 0
      %2582 = vmatpush.bf16.msra.mxu0 0
      %2583 = vmatpush.bf16.msra.mxu0 %v2574
      %2584 = vmatmul.bf16.gmra.mxu0 %v2571
      %v2585 = vpop.f32.mrf.mxu0
      %v2586 = vadd.f32 0.0, %v2585
      %v2587 = vpop.f32.mrf.mxu0
      %2588 = vdwg.mxu0
      %2589 = vrot.lane.b32.xlu0 %v2364, 104
      %v2590 = vpop.permute.xlu0 %2589
      %v2592 = vsel %vm1445, %v2567, 0
      %v2595 = vsel %vm1511, %v2590, 0
      %2597 = vmatpush.bf16.msra.mxu0 0
      %2598 = vmatpush.bf16.msra.mxu0 0
      %2599 = vmatpush.bf16.msra.mxu0 0
      %2600 = vmatpush.bf16.msra.mxu0 0
      %2601 = vmatpush.bf16.msra.mxu0 0
      %2602 = vmatpush.bf16.msra.mxu0 0
      %2603 = vmatpush.bf16.msra.mxu0 0
      %2604 = vmatpush.bf16.msra.mxu0 %v2595
      %2605 = vmatmul.bf16.gmra.mxu0 %v2592
      %v2606 = vpop.f32.mrf.mxu0
      %v2607 = vadd.f32 0.0, %v2606
      %v2608 = vpop.f32.mrf.mxu0
      %2609 = vdwg.mxu0
      %2612 = vrot.lane.b32.xlu0 %v2359, 8
      %v2613 = vpop.permute.xlu0 %2612
      %2614 = vrot.lane.b32.xlu0 %v2383, 8
      %v2615 = vpop.permute.xlu0 %2614
      %2620 = vrot.lane.b32.xlu0 %v2474, 16
      %v2621 = vpop.permute.xlu0 %2620
      %2622 = vrot.lane.b32.xlu0 %v2495, 16
      %v2623 = vpop.permute.xlu0 %2622
      %2628 = vrot.lane.b32.xlu0 %v2586, 24
      %v2629 = vpop.permute.xlu0 %2628
      %2630 = vrot.lane.b32.xlu0 %v2607, 24
      %v2631 = vpop.permute.xlu0 %2630
      %v2634 = vsel %vm1445, %v2234, %v2613
      %v2635 = vsel %vm1445, %v2253, %v2615
      %v2636 = vsel %vm1927, %v2634, %v2621
      %v2637 = vsel %vm1927, %v2635, %v2623
      %v2638 = vsel %vm1930, %v2636, %v2629
      %v2639 = vsel %vm1930, %v2637, %v2631
      %v2640 = vpack.c.bf16 %v2639, %v2638
      %v2642 = vperm.slane %v2147, 0
      %v2648 = vunpack.c.l.b16 %v2143
      %v2649 = vunpack.c.l.b16 %v2144
      %v2650 = vunpack.c.l.b16 %v2145
      %v2651 = vunpack.c.l.b16 %v2146
      %v2652 = vpack.c.b16 %v2649, %v2648
      %v2653 = vpack.c.b16 %v2651, %v2650
      %v2657 = vsel %vm1340, %v2640, 0
      %2659 = vmatpush.bf16.msra.mxu0 0
      %2660 = vmatpush.bf16.msra.mxu0 0
      %2661 = vmatpush.bf16.msra.mxu0 0
      %2662 = vmatpush.bf16.msra.mxu0 0
      %2663 = vmatpush.bf16.msra.mxu0 0
      %2664 = vmatpush.bf16.msra.mxu0 0
      %2665 = vmatpush.bf16.msra.mxu0 %v2653
      %2666 = vmatpush.bf16.msra.mxu0 %v2652
      %2667 = vmatmul.bf16.gmra.mxu0 %v2657
      %v2668 = vpop.f32.mrf.mxu0
      %v2669 = vadd.f32 %v2642, %v2668
      %v2670 = vpop.f32.mrf.mxu0
      %v2671 = vadd.f32 %v2642, %v2670
      %2672 = vdwg.mxu0
      %v2673 = vadd.f32 %v2029, %v2669
      %v2674 = vadd.f32 %v2030, %v2671
      %v2675 = vld [vmem:[%s1275] sm:$0x1]
      %v2676 = vld [vmem:[%s1278] sm:$0x1]
      %v2677 = vsel %vm1340, %v2673, 0.0
      %2678 = vadd.xlane.f32.xlu0 %v2677
      %v2679 = vpop.xlane.xlu0 %2678
      %v2680 = vsel %vm1340, %v2674, 0.0
      %2681 = vadd.xlane.f32.xlu0 %v2680
      %v2682 = vpop.xlane.xlu0 %2681
      %v2683 = vmul.f32 %v2679, %v1982
      %v2684 = vmul.f32 %v2682, %v1982
      %v2685 = vsub.f32 %v2673, %v2683
      %v2686 = vsub.f32 %v2674, %v2684
      %v2687 = vmul.f32 %v2685, %v2685
      %v2688 = vmul.f32 %v2686, %v2686
      %v2689 = vsel %vm1340, %v2687, 0.0
      %2690 = vadd.xlane.f32.xlu0 %v2689
      %v2691 = vpop.xlane.xlu0 %2690
      %v2692 = vsel %vm1340, %v2688, 0.0
      %2693 = vadd.xlane.f32.xlu0 %v2692
      %v2694 = vpop.xlane.xlu0 %2693
      %v2695 = vmul.f32 %v2691, %v1982
      %v2696 = vmul.f32 %v2694, %v1982
      %v2697 = vadd.f32 %v2695, 1e-05
      %v2698 = vadd.f32 %v2696, 1e-05
      %v2699 = vrsqrt.pop %v2697
      %v2700 = vmul.f32 %v2699, %v2697
      %v2701 = vmul.f32 %v2700, %v2699
      %v2702 = vmul.f32 0.5, %v2701
      %v2703 = vsub.f32 1.5, %v2702
      %v2704 = vmul.f32 %v2699, %v2703
      %vm2705 = vweird.f32 %v2697
      %vm2706 = vweird.f32 %v2699
      %vm2707 = vmor %vm2705, %vm2706
      %v2708 = vsel %vm2707, %v2699, %v2704
      %v2709 = vrsqrt.pop %v2698
      %v2710 = vmul.f32 %v2709, %v2698
      %v2711 = vmul.f32 %v2710, %v2709
      %v2712 = vmul.f32 0.5, %v2711
      %v2713 = vsub.f32 1.5, %v2712
      %v2714 = vmul.f32 %v2709, %v2713
      %vm2715 = vweird.f32 %v2698
      %vm2716 = vweird.f32 %v2709
      %vm2717 = vmor %vm2715, %vm2716
      %v2718 = vsel %vm2717, %v2709, %v2714
      %v2719 = vmul.f32 %v2685, %v2708
      %v2720 = vmul.f32 %v2686, %v2718
      %v2722 = vperm.slane %v2675, 0
      %v2724 = vmul.f32 %v2719, %v2722
      %v2725 = vmul.f32 %v2720, %v2722
      %v2727 = vperm.slane %v2676, 0
      %v2729 = vadd.f32 %v2724, %v2727
      %v2730 = vadd.f32 %v2725, %v2727
      %v2731 = vpack.c.bf16 %v2730, %v2729
      %v2732 = vld [vmem:[%s1283] sm:$0xf]
      %v2733 = vld [vmem:[%s1283 + $0x4] sm:$0xf]
      %v2734 = vld [vmem:[%s1283 + $0x8] sm:$0xf]
      %v2735 = vld [vmem:[%s1283 + $0xc] sm:$0xf]
      %v2736 = vld [vmem:[%s1286] sm:$0x1]
      %v2738 = vperm.slane %v2736, 0
      %v2744 = vunpack.c.l.b16 %v2732
      %v2745 = vunpack.c.l.b16 %v2733
      %v2746 = vunpack.c.l.b16 %v2734
      %v2747 = vunpack.c.l.b16 %v2735
      %v2748 = vpack.c.b16 %v2745, %v2744
      %v2749 = vpack.c.b16 %v2747, %v2746
      %v2753 = vsel %vm1340, %v2731, 0
      %2755 = vmatpush.bf16.msra.mxu0 0
      %2756 = vmatpush.bf16.msra.mxu0 0
      %2757 = vmatpush.bf16.msra.mxu0 0
      %2758 = vmatpush.bf16.msra.mxu0 0
      %2759 = vmatpush.bf16.msra.mxu0 0
      %2760 = vmatpush.bf16.msra.mxu0 0
      %2761 = vmatpush.bf16.msra.mxu0 %v2749
      %2762 = vmatpush.bf16.msra.mxu0 %v2748
      %2763 = vmatmul.bf16.gmra.mxu0 %v2753
      %v2764 = vpop.f32.mrf.mxu0
      %v2765 = vadd.f32 %v2738, %v2764
      %v2766 = vpop.f32.mrf.mxu0
      %v2767 = vadd.f32 %v2738, %v2766
      %2768 = vdwg.mxu0
      %v2769 = vmax.f32 %v2765, 0.0
      %v2770 = vmax.f32 %v2767, 0.0
      %v2771 = vpack.c.bf16 %v2770, %v2769
      %v2772 = vld [vmem:[%s1291] sm:$0xf]
      %v2773 = vld [vmem:[%s1291 + $0x4] sm:$0xf]
      %v2774 = vld [vmem:[%s1291 + $0x8] sm:$0xf]
      %v2775 = vld [vmem:[%s1291 + $0xc] sm:$0xf]
      %v2776 = vld [vmem:[%s1291 + $0x10] sm:$0xf]
      %v2777 = vld [vmem:[%s1291 + $0x14] sm:$0xf]
      %v2778 = vld [vmem:[%s1291 + $0x18] sm:$0xf]
      %v2779 = vld [vmem:[%s1291 + $0x1c] sm:$0xf]
      %v2780 = vld [vmem:[%s1294] sm:$0x1]
      %v2782 = vperm.slane %v2780, 0
      %v2792 = vunpack.c.l.b16 %v2772
      %v2793 = vunpack.c.l.b16 %v2773
      %v2794 = vunpack.c.l.b16 %v2774
      %v2795 = vunpack.c.l.b16 %v2775
      %v2796 = vunpack.c.l.b16 %v2776
      %v2797 = vunpack.c.l.b16 %v2777
      %v2798 = vunpack.c.l.b16 %v2778
      %v2799 = vunpack.c.l.b16 %v2779
      %v2800 = vpack.c.b16 %v2793, %v2792
      %v2801 = vpack.c.b16 %v2795, %v2794
      %v2802 = vpack.c.b16 %v2797, %v2796
      %v2803 = vpack.c.b16 %v2799, %v2798
      %vm2808 = vcmask 523264
      %v2810 = vsel %vm2808, %v2771, 0
      %2812 = vmatpush.bf16.msra.mxu0 0
      %2813 = vmatpush.bf16.msra.mxu0 0
      %2814 = vmatpush.bf16.msra.mxu0 0
      %2815 = vmatpush.bf16.msra.mxu0 0
      %2816 = vmatpush.bf16.msra.mxu0 %v2803
      %2817 = vmatpush.bf16.msra.mxu0 %v2802
      %2818 = vmatpush.bf16.msra.mxu0 %v2801
      %2819 = vmatpush.bf16.msra.mxu0 %v2800
      %2820 = vmatmul.bf16.gmra.mxu0 %v2810
      %v2821 = vpop.f32.mrf.mxu0
      %v2822 = vadd.f32 %v2782, %v2821
      %v2823 = vpop.f32.mrf.mxu0
      %v2824 = vadd.f32 %v2782, %v2823
      %2825 = vdwg.mxu0
      %v2826 = vadd.f32 %v2729, %v2822
      %v2827 = vadd.f32 %v2730, %v2824
      %v2828 = vld [vmem:[%s1297] sm:$0x1]
      %v2829 = vld [vmem:[%s1300] sm:$0x1]
      %v2830 = vsel %vm1340, %v2826, 0.0
      %2831 = vadd.xlane.f32.xlu0 %v2830
      %v2832 = vpop.xlane.xlu0 %2831
      %v2833 = vsel %vm1340, %v2827, 0.0
      %2834 = vadd.xlane.f32.xlu0 %v2833
      %v2835 = vpop.xlane.xlu0 %2834
      %v2836 = vmul.f32 %v2832, %v1982
      %v2837 = vmul.f32 %v2835, %v1982
      %v2838 = vsub.f32 %v2826, %v2836
      %v2839 = vsub.f32 %v2827, %v2837
      %v2840 = vmul.f32 %v2838, %v2838
      %v2841 = vmul.f32 %v2839, %v2839
      %v2842 = vsel %vm1340, %v2840, 0.0
      %2843 = vadd.xlane.f32.xlu0 %v2842
      %v2844 = vpop.xlane.xlu0 %2843
      %v2845 = vsel %vm1340, %v2841, 0.0
      %2846 = vadd.xlane.f32.xlu0 %v2845
      %v2847 = vpop.xlane.xlu0 %2846
      %v2848 = vmul.f32 %v2844, %v1982
      %v2849 = vmul.f32 %v2847, %v1982
      %v2850 = vadd.f32 %v2848, 1e-05
      %v2851 = vadd.f32 %v2849, 1e-05
      %v2852 = vrsqrt.pop %v2850
      %v2853 = vmul.f32 %v2852, %v2850
      %v2854 = vmul.f32 %v2853, %v2852
      %v2855 = vmul.f32 0.5, %v2854
      %v2856 = vsub.f32 1.5, %v2855
      %v2857 = vmul.f32 %v2852, %v2856
      %vm2858 = vweird.f32 %v2850
      %vm2859 = vweird.f32 %v2852
      %vm2860 = vmor %vm2858, %vm2859
      %v2861 = vsel %vm2860, %v2852, %v2857
      %v2862 = vrsqrt.pop %v2851
      %v2863 = vmul.f32 %v2862, %v2851
      %v2864 = vmul.f32 %v2863, %v2862
      %v2865 = vmul.f32 0.5, %v2864
      %v2866 = vsub.f32 1.5, %v2865
      %v2867 = vmul.f32 %v2862, %v2866
      %vm2868 = vweird.f32 %v2851
      %vm2869 = vweird.f32 %v2862
      %vm2870 = vmor %vm2868, %vm2869
      %v2871 = vsel %vm2870, %v2862, %v2867
      %v2872 = vmul.f32 %v2838, %v2861
      %v2873 = vmul.f32 %v2839, %v2871
      %v2875 = vperm.slane %v2828, 0
      %v2877 = vmul.f32 %v2872, %v2875
      %v2878 = vmul.f32 %v2873, %v2875
      %v2880 = vperm.slane %v2829, 0
      %v2882 = vadd.f32 %v2877, %v2880
      %v2883 = vadd.f32 %v2878, %v2880
      %2884 = vst.msk [vmem:[%s1305] sm:$0xff] %vm1340, %v2882
      %2885 = vst.msk [vmem:[%s1305 + $0x8] sm:$0xff] %vm1340, %v2883
      %s2886 = smul.u32 2, %s43
      %p2887 = scmp.lt.s32.totalorder %s2886, 1
      %s2888 = scalar_select %p2887, %s2886, 1
      %s2889 = smul.addr %s2888, 8
      %s2890 = scalar_lea.vmem %s28, %s2889
      // Predicated region
      $region137: #{transformer_forward.3} parent=131 // pred_check
        %p2891 = pneg %p797
      $region138: #{transformer_forward.3} parent=131 // pred_check_branch
        %2893 = sbr.rel (%p2891) target = $region140
      $region139: #{transformer_forward.3} parent=131 // pred_region
        %s2894 = smul.u32 2, %s43
      $region140: #{transformer_forward.3} parent=131 // pred_fallthru
        _
      // Predicated region
      $region141: #{transformer_forward.3} parent=131 // pred_check
        %p2895 = pneg %p797
      $region142: #{transformer_forward.3} parent=131 // pred_check_branch
        %2897 = sbr.rel (%p2895) target = $region144
      $region143: #{transformer_forward.3} parent=131 // pred_region
        %s2898 = smul.u32 2, %s43
        %p2899 = scmp.lt.s32.totalorder %s2898, 1
        %s2900 = scalar_select %p2899, %s2898, 1
        %s2901 = smul.addr %s2900, 8
        %s2902 = scalar_lea.vmem %s28, %s2901
      $region144: #{transformer_forward.3} parent=131 // pred_fallthru
        _
    $region132: #{transformer_forward.3} parent=5 // pred_fallthru
      _
    %p2903 = scmp.le.s32.totalorder 2, %s34
    // Predicated region
    $region145: #{transformer_forward.3} parent=5 // pred_check
      %p2904 = pneg %p2903
    $region146: #{transformer_forward.3} parent=5 // pred_check_branch
      %2906 = sbr.rel (%p2904) target = $region148
    $region147: #{transformer_forward.3} parent=5 // pred_region
      %s2907 = ssub.s32 %s34, 2
    $region148: #{transformer_forward.3} parent=5 // pred_fallthru
      _
  $region6: #{transformer_forward.3} parent=0 // loop_footer
    %s38 = sadd.s32 1, %s34
  $region7: #{transformer_forward.3} parent=0 // loop_footer_branch
    %33 = sbr.rel target = $region3
  $region8: #{transformer_forward.3} parent=0 // loop_exit
    _

</llo_original>
